<compile_context>
chip_gen: v5e
topology: v5e:2x2
jax: 0.10.0
libtpu: 0.0.40
codegen_flags: <defaults>
</compile_context>

<pallas_src>
import math

import numpy as np
import jax
import jax.numpy as jnp
from jax.experimental import pallas as pl
from jax.experimental.pallas import tpu as pltpu

# MXU input dtype for the conv matmuls.  f32 keeps bit-accuracy everywhere;
# on v6e/v7x this can be set to jnp.bfloat16 (~2x MXU rate, f32 accumulation).
MXU_DTYPE = jnp.float32


# ---------------------------------------------------------------------------
# Host-side constants (built once at trace time from static H, W)
# ---------------------------------------------------------------------------
def _column_masks(K, pad, W, HW):
    """(K, HW) f32: mask[kj, q] = 1 iff (q % W) + kj - pad lies in [0, W).

    Zeroes the horizontally-wrapped reads of the flat-shift im2col trick."""
    col = np.arange(HW, dtype=np.int64) % W
    m = np.zeros((K, HW), dtype=np.float32)
    for kj in range(K):
        m[kj] = ((col + kj - pad >= 0) & (col + kj - pad < W)).astype(np.float32)
    return jnp.asarray(m)


def _adaptive_pool_matrix(H, W, s):
    """(s*s, HW) matrix P with  x_flat @ P.T == AdaptiveAvgPool2d((s, s))."""
    P = np.zeros((s * s, H * W), dtype=np.float32)
    for i in range(s):
        h0, h1 = (i * H) // s, -((-(i + 1) * H) // s)
        for j in range(s):
            w0, w1 = (j * W) // s, -((-(j + 1) * W) // s)
            inv = 1.0 / ((h1 - h0) * (w1 - w0))
            for hh in range(h0, h1):
                P[i * s + j, hh * W + w0:hh * W + w1] = inv
    return jnp.asarray(P)


def batchnorm1d_eval(x, bn, eps=1e-5):
    """x: (B, C, L); eval-mode BatchNorm1d with running statistics."""
    g = bn["gamma"][None, :, None]
    b = bn["beta"][None, :, None]
    m = bn["mean"][None, :, None]
    v = bn["var"][None, :, None]
    return (x - m) / jnp.sqrt(v + eps) * g + b


def _pad_flat(x_flat, pad, W):
    """Zero-pad the flat (B, C, HW) activation so every KxK tap becomes a
    contiguous shifted slice of length HW (vertical halo + 1-elem guards)."""
    p = pad * (W + 1)
    return jnp.pad(x_flat, ((0, 0), (0, 0), (p, p)))


# ---------------------------------------------------------------------------
# Pallas kernels: conv-as-shifted-matmul with fused epilogues
# ---------------------------------------------------------------------------
def _accum_conv_terms(get_filter, xp_ref, mask_ref, K, pad, H, W, OC):
    """acc = sum_{ki,kj} filter(ki,kj) @ shifted_slice(ki,kj)   (implicit im2col).

    xp_ref  : (C, HW + 2*pad*(W+1)) zero-padded flat input (VMEM)
    mask_ref: (K, HW) per-tap column masks
    """
    HW = H * W
    acc = jnp.zeros((OC, HW), jnp.float32)
    for ki in range(K):
        for kj in range(K):
            kij = ki * K + kj
            xs = xp_ref[:, ki * W + kj: ki * W + kj + HW]        # (C, HW)
            if kj != pad:                                        # kill wrap cols
                xs = xs * mask_ref[kj:kj + 1, :]
            acc = acc + jnp.dot(get_filter(kij).astype(MXU_DTYPE),
                                xs.astype(MXU_DTYPE),
                                preferred_element_type=jnp.float32)
    return acc


def _make_static_conv_kernel(K, pad, H, W, relu):
    def kernel(w_ref, b_ref, mask_ref, xp_ref, o_ref):
        OC = o_ref.shape[0]
        acc = _accum_conv_terms(lambda kij: w_ref[kij], xp_ref, mask_ref,
                                K, pad, H, W, OC)
        acc = acc + b_ref[...]                                   # (OC,1) bcast
        if relu:
            acc = jnp.maximum(acc, 0.0)
        o_ref[...] = acc.astype(o_ref.dtype)
    return kernel


def _make_dyn_conv_kernel(K, pad, H, W, relu, n_res, s_inner, s_outer):
    def kernel(attc_ref, atto_ref, w_ref, mask_ref, xp_ref, *rest):
        res_refs, o_ref = rest[:n_res], rest[n_res]
        OC = o_ref.shape[0]

        def dyn_filter(kij):
            # sigmoid(att_c[c, kij] + att_o[o, kij]) * W[o, c, ki, kj] -> (OC, C)
            gate = jax.nn.sigmoid(atto_ref[:, kij:kij + 1] +
                                  attc_ref[kij:kij + 1, :])
            return gate * w_ref[kij]

        acc = _accum_conv_terms(dyn_filter, xp_ref, mask_ref, K, pad, H, W, OC)
        if relu:                                   # CRAB's inter-CG ReLU
            acc = jnp.maximum(acc, 0.0)
        if n_res == 2:                             # fused CRAB + RB residuals
            acc = (acc * s_inner + res_refs[0][...]) * s_outer + res_refs[1][...]
        o_ref[...] = acc.astype(o_ref.dtype)
    return kernel


# ---------------------------------------------------------------------------
# Wrappers
# ---------------------------------------------------------------------------
def static_conv_pallas(x_flat, w, b, H, W, relu):
    """Standard conv (stride 1, padding K//2) on flat (B, C, HW) activations."""
    B, C, HW = x_flat.shape
    OC, _, K, _ = w.shape
    pad = K // 2
    xpf = _pad_flat(x_flat, pad, W)
    Lp = xpf.shape[-1]
    w9 = jnp.transpose(w, (2, 3, 0, 1)).reshape(K * K, OC, C)
    b2 = b.reshape(OC, 1)
    mask = _column_masks(K, pad, W, HW)
    return pl.pallas_call(
        _make_static_conv_kernel(K, pad, H, W, relu),
        out_shape=jax.ShapeDtypeStruct((B, OC, HW), jnp.float32),
        grid=(B,),
        in_specs=[
            pl.BlockSpec((K * K, OC, C), lambda i: (0, 0, 0)),
            pl.BlockSpec((OC, 1), lambda i: (0, 0)),
            pl.BlockSpec((K, HW), lambda i: (0, 0)),
            pl.BlockSpec((pl.Squeezed(), C, Lp), lambda i: (i, 0, 0)),
        ],
        out_specs=pl.BlockSpec((pl.Squeezed(), OC, HW), lambda i: (i, 0, 0)),
        compiler_params=pltpu.CompilerParams(dimension_semantics=("parallel",)),
    )(w9, b2, mask, xpf)


def conv2d_cg_pallas(x_flat, p, H, W, pool_mat, relu_out,
                     residuals=None, scales=(1.0, 1.0)):
    """Conv2d_CG forward (kernel_size=3) on flat (B, C, HW) activations."""
    B, C, HW = x_flat.shape
    ks, pad = 3, 1
    oc = p["weight_conv"].shape[0]

    # ---- channel/context attention path (tiny tensors; XLA glue) ----
    gl = jnp.einsum("bcl,kl->bck", x_flat, pool_mat)      # adaptive pool (B,C,9)
    out = gl @ p["ce"].T                                  # (B, C, 5)
    w1 = jnp.einsum("ij,bjk->bik", p["wa1"], out)
    w2 = jnp.einsum("ij,bjk->bik", p["wa2"], out)
    aff = jnp.einsum("bci,bcj->bij", w1, w2)              # (B, 5, 5)
    out1 = jnp.einsum("bij,bcj->bic", aff, out)           # (B, 5, C)
    out3 = (out1 @ p["wg"]) @ p["wr"]                     # (B, 5, C)
    out4 = jnp.transpose(out3, (0, 2, 1))                 # (B, C, 5)
    out = out + out4 * out
    ce2 = out

    o = jnp.maximum(batchnorm1d_eval(out, p["ce_bn"]), 0.0)
    att_c = o @ p["gd"].T                                 # (B, C, 9)

    g = 16 if (C // 16) else C
    t = batchnorm1d_eval(ce2, p["ci_bn2"])                # (B, C, 5)
    if g > 3:
        t = t.reshape(B, C // g, g, -1)
        t = jnp.swapaxes(t, 2, 3)
        t = jnp.maximum(t, 0.0) @ p["ci"].T
        t = jnp.swapaxes(t, 2, 3)
    else:
        t = jnp.swapaxes(t, 2, 1)
        t = jnp.maximum(t, 0.0) @ p["ci"].T
        t = jnp.swapaxes(t, 2, 1)
    ocf = t.reshape(B, oc, -1)
    ocf = jnp.maximum(batchnorm1d_eval(ocf, p["ci_bn"]), 0.0)
    att_o = ocf @ p["gd2"].T                              # (B, oc, 9)
    att_c_t = jnp.transpose(att_c, (0, 2, 1))             # (B, 9, C)

    # ---- hot path: dynamic conv as one fused Pallas kernel ----
    xpf = _pad_flat(x_flat, pad, W)
    Lp = xpf.shape[-1]
    w9 = jnp.transpose(p["weight_conv"], (2, 3, 0, 1)).reshape(ks * ks, oc, C)
    mask = _column_masks(ks, pad, W, HW)
    n_res = 0 if residuals is None else len(residuals)

    in_specs = [
        pl.BlockSpec((pl.Squeezed(), ks * ks, C), lambda i: (i, 0, 0)),   # att_c
        pl.BlockSpec((pl.Squeezed(), oc, ks * ks), lambda i: (i, 0, 0)),  # att_o
        pl.BlockSpec((ks * ks, oc, C), lambda i: (0, 0, 0)),              # weight
        pl.BlockSpec((ks, HW), lambda i: (0, 0)),                         # masks
        pl.BlockSpec((pl.Squeezed(), C, Lp), lambda i: (i, 0, 0)),        # input
    ]
    args = [att_c_t, att_o, w9, mask, xpf]
    for r in (residuals or ()):                                           # fused residuals
        in_specs.append(pl.BlockSpec((pl.Squeezed(), C, HW), lambda i: (i, 0, 0)))
        args.append(r)

    return pl.pallas_call(
        _make_dyn_conv_kernel(ks, pad, H, W, relu_out, n_res,
                              float(scales[0]), float(scales[1])),
        out_shape=jax.ShapeDtypeStruct((B, oc, HW), jnp.float32),
        grid=(B,),
        in_specs=in_specs,
        out_specs=pl.BlockSpec((pl.Squeezed(), oc, HW), lambda i: (i, 0, 0)),
        compiler_params=pltpu.CompilerParams(dimension_semantics=("parallel",)),
    )(*args)


def rb_forward(x, p, res_scale=1.0, crab_res_scale=1.0):
    B, C, H, W = x.shape
    x_flat = x.reshape(B, C, H * W)

    # body: conv -> ReLU -> conv      (bias / ReLU fused into the kernels)
    h = static_conv_pallas(x_flat, p["conv1_w"], p["conv1_b"], H, W, relu=True)
    h2 = static_conv_pallas(h, p["conv2_w"], p["conv2_b"], H, W, relu=False)

    # CRAB layer: CG -> ReLU -> CG; the ReLU, the CRAB residual (+h2) and the
    # RB residual (+x) are fused into the CG kernels' epilogues.
    pool_mat = _adaptive_pool_matrix(H, W, 3)
    c1 = conv2d_cg_pallas(h2, p["crab"]["cg1"], H, W, pool_mat, relu_out=True)
    out_flat = conv2d_cg_pallas(c1, p["crab"]["cg2"], H, W, pool_mat,
                                relu_out=False, residuals=(h2, x_flat),
                                scales=(crab_res_scale, res_scale))
    return out_flat.reshape(B, C, H, W)


# ---------------------------------------------------------------------------
# Deterministic parameter initialization
# ---------------------------------------------------------------------------
def _kaiming_normal(key, shape, fan_in):
    std = math.sqrt(2.0 / fan_in)
    return std * jax.random.normal(key, shape, dtype=jnp.float32)


def _linear_init(key, shape):
    bound = 1.0 / math.sqrt(shape[1])
    return jax.random.uniform(key, shape, jnp.float32, -bound, bound)


def _bn_init(c):
    return dict(gamma=jnp.ones((c,), jnp.float32), beta=jnp.zeros((c,), jnp.float32),
                mean=jnp.zeros((c,), jnp.float32), var=jnp.ones((c,), jnp.float32))


def init_cg_params(key, C):
    ks = 3
    oc = C
    g = 16 if (C // 16) else C
    ci_out = oc // (C // g)
    k = jax.random.split(key, 9)
    return dict(
        wa1=_kaiming_normal(k[0], (C, C), C),
        wa2=_kaiming_normal(k[1], (C, C), C),
        wg=_kaiming_normal(k[2], (C, C), C),
        wr=_kaiming_normal(k[3], (C, C), C),
        weight_conv=_kaiming_normal(k[4], (oc, C, ks, ks), C * ks * ks),
        ce=_linear_init(k[5], (5, ks * ks)),        # Linear(9, 5, bias=False)
        gd=_linear_init(k[6], (ks * ks, 5)),        # Linear(5, 9, bias=False)
        gd2=_linear_init(k[7], (ks * ks, 5)),       # Linear(5, 9, bias=False)
        ci=_linear_init(k[8], (ci_out, g)),         # Linear(g, oc//(C//g), bias=False)
        ce_bn=_bn_init(C), ci_bn2=_bn_init(C), ci_bn=_bn_init(oc),
    )


def init_rb_params(key, n_feat, kernel_size):
    k = jax.random.split(key, 6)
    fan_in = n_feat * kernel_size * kernel_size
    bound = 1.0 / math.sqrt(fan_in)
    return dict(
        conv1_w=_kaiming_normal(k[0], (n_feat, n_feat, kernel_size, kernel_size), fan_in),
        conv1_b=jax.random.uniform(k[1], (n_feat,), jnp.float32, -bound, bound),
        conv2_w=_kaiming_normal(k[2], (n_feat, n_feat, kernel_size, kernel_size), fan_in),
        conv2_b=jax.random.uniform(k[3], (n_feat,), jnp.float32, -bound, bound),
        crab=dict(cg1=init_cg_params(k[4], n_feat), cg2=init_cg_params(k[5], n_feat)),
    )


# ---------------------------------------------------------------------------
if __name__ == "__main__":
    key = jax.random.PRNGKey(0)
    k_x, k_p = jax.random.split(key)

    B, n_feat, H, W = 2, 16, 16, 16
    kernel_size = 3

    x = jax.random.normal(k_x, (B, n_feat, H, W), dtype=jnp.float32)
    params = init_rb_params(k_p, n_feat, kernel_size)

    rb = jax.jit(lambda xx, pp: rb_forward(xx, pp, res_scale=1.0))
    y = jax.block_until_ready(rb(x, params))

    assert y.shape == (B, n_feat, H, W)
    assert bool(jnp.all(jnp.isfinite(y)))
    print("KERNEL_OK")
</pallas_src>

<mosaic_0001>
module attributes {stable_mosaic.version = 11 : i64} {
  func.func @kernel(%arg0: i32, %arg1: memref<9x16x16xf32, #tpu.memory_space<vmem>>, %arg2: memref<16x1xf32, #tpu.memory_space<vmem>>, %arg3: memref<3x256xf32, #tpu.memory_space<vmem>>, %arg4: memref<1x16x290xf32, #tpu.memory_space<vmem>>, %arg5: memref<1x16x256xf32, #tpu.memory_space<vmem>>) attributes {dimension_semantics = [#tpu.dimension_semantics<parallel>], iteration_bounds = array<i64: 2>, scalar_prefetch = 0 : i64, scratch_operands = 0 : i64, tpu.core_type = #tpu.core_type<tc>, window_params = [{pipeline_mode = #tpu.pipeline_mode<synchronous>, transform_indices = @transform_0, window_bounds = array<i64: 9, 16, 16>}, {pipeline_mode = #tpu.pipeline_mode<synchronous>, transform_indices = @transform_1, window_bounds = array<i64: 16, 1>}, {pipeline_mode = #tpu.pipeline_mode<synchronous>, transform_indices = @transform_2, window_bounds = array<i64: 3, 256>}, {transform_indices = @transform_3, window_bounds = array<i64: 1, 16, 290>}, {transform_indices = @transform_4, window_bounds = array<i64: 1, 16, 256>}]} {
    %cst = arith.constant 0.000000e+00 : f32
    %0 = vector.broadcast %cst : f32 to vector<16x256xf32>
    %c0 = arith.constant 0 : index
    %c0_0 = arith.constant 0 : index
    %c0_1 = arith.constant 0 : index
    %1 = vector.load %arg4[%c0, %c0_0, %c0_1] : memref<1x16x290xf32, #tpu.memory_space<vmem>>, vector<1x16x256xf32>
    %2 = vector.shape_cast %1 : vector<1x16x256xf32> to vector<16x256xf32>
    %c0_2 = arith.constant 0 : index
    %c0_3 = arith.constant 0 : index
    %3 = vector.load %arg3[%c0_2, %c0_3] : memref<3x256xf32, #tpu.memory_space<vmem>>, vector<1x256xf32>
    %4 = vector.broadcast %3 : vector<1x256xf32> to vector<16x256xf32>
    %5 = arith.mulf %2, %4 : vector<16x256xf32>
    %c0_4 = arith.constant 0 : index
    %c0_5 = arith.constant 0 : index
    %c0_6 = arith.constant 0 : index
    %6 = vector.load %arg1[%c0_4, %c0_5, %c0_6] : memref<9x16x16xf32, #tpu.memory_space<vmem>>, vector<1x16x16xf32>
    %7 = vector.shape_cast %6 : vector<1x16x16xf32> to vector<16x16xf32>
    %cst_7 = arith.constant dense<0.000000e+00> : vector<16x256xf32>
    %8 = tpu.matmul %7, %5, %cst_7 {dimension_numbers = #tpu.dot_dimension_numbers<[1], [0], [0], [1], [0, 0, 1, 1], [], []>} : vector<16x16xf32>, vector<16x256xf32>, vector<16x256xf32> -> vector<16x256xf32>
    %9 = arith.addf %0, %8 : vector<16x256xf32>
    %c0_8 = arith.constant 0 : index
    %c0_9 = arith.constant 0 : index
    %c1 = arith.constant 1 : index
    %10 = vector.load %arg4[%c0_8, %c0_9, %c1] : memref<1x16x290xf32, #tpu.memory_space<vmem>>, vector<1x16x256xf32>
    %11 = vector.shape_cast %10 : vector<1x16x256xf32> to vector<16x256xf32>
    %c1_10 = arith.constant 1 : index
    %c0_11 = arith.constant 0 : index
    %c0_12 = arith.constant 0 : index
    %12 = vector.load %arg1[%c1_10, %c0_11, %c0_12] : memref<9x16x16xf32, #tpu.memory_space<vmem>>, vector<1x16x16xf32>
    %13 = vector.shape_cast %12 : vector<1x16x16xf32> to vector<16x16xf32>
    %cst_13 = arith.constant dense<0.000000e+00> : vector<16x256xf32>
    %14 = tpu.matmul %13, %11, %cst_13 {dimension_numbers = #tpu.dot_dimension_numbers<[1], [0], [0], [1], [0, 0, 1, 1], [], []>} : vector<16x16xf32>, vector<16x256xf32>, vector<16x256xf32> -> vector<16x256xf32>
    %15 = arith.addf %9, %14 : vector<16x256xf32>
    %c0_14 = arith.constant 0 : index
    %c0_15 = arith.constant 0 : index
    %c2 = arith.constant 2 : index
    %16 = vector.load %arg4[%c0_14, %c0_15, %c2] : memref<1x16x290xf32, #tpu.memory_space<vmem>>, vector<1x16x256xf32>
    %17 = vector.shape_cast %16 : vector<1x16x256xf32> to vector<16x256xf32>
    %c2_16 = arith.constant 2 : index
    %c0_17 = arith.constant 0 : index
    %18 = vector.load %arg3[%c2_16, %c0_17] : memref<3x256xf32, #tpu.memory_space<vmem>>, vector<1x256xf32>
    %19 = vector.broadcast %18 : vector<1x256xf32> to vector<16x256xf32>
    %20 = arith.mulf %17, %19 : vector<16x256xf32>
    %c2_18 = arith.constant 2 : index
    %c0_19 = arith.constant 0 : index
    %c0_20 = arith.constant 0 : index
    %21 = vector.load %arg1[%c2_18, %c0_19, %c0_20] : memref<9x16x16xf32, #tpu.memory_space<vmem>>, vector<1x16x16xf32>
    %22 = vector.shape_cast %21 : vector<1x16x16xf32> to vector<16x16xf32>
    %cst_21 = arith.constant dense<0.000000e+00> : vector<16x256xf32>
    %23 = tpu.matmul %22, %20, %cst_21 {dimension_numbers = #tpu.dot_dimension_numbers<[1], [0], [0], [1], [0, 0, 1, 1], [], []>} : vector<16x16xf32>, vector<16x256xf32>, vector<16x256xf32> -> vector<16x256xf32>
    %24 = arith.addf %15, %23 : vector<16x256xf32>
    %c0_22 = arith.constant 0 : index
    %c0_23 = arith.constant 0 : index
    %c16 = arith.constant 16 : index
    %25 = vector.load %arg4[%c0_22, %c0_23, %c16] : memref<1x16x290xf32, #tpu.memory_space<vmem>>, vector<1x16x256xf32>
    %26 = vector.shape_cast %25 : vector<1x16x256xf32> to vector<16x256xf32>
    %c0_24 = arith.constant 0 : index
    %c0_25 = arith.constant 0 : index
    %27 = vector.load %arg3[%c0_24, %c0_25] : memref<3x256xf32, #tpu.memory_space<vmem>>, vector<1x256xf32>
    %28 = vector.broadcast %27 : vector<1x256xf32> to vector<16x256xf32>
    %29 = arith.mulf %26, %28 : vector<16x256xf32>
    %c3 = arith.constant 3 : index
    %c0_26 = arith.constant 0 : index
    %c0_27 = arith.constant 0 : index
    %30 = vector.load %arg1[%c3, %c0_26, %c0_27] : memref<9x16x16xf32, #tpu.memory_space<vmem>>, vector<1x16x16xf32>
    %31 = vector.shape_cast %30 : vector<1x16x16xf32> to vector<16x16xf32>
    %cst_28 = arith.constant dense<0.000000e+00> : vector<16x256xf32>
    %32 = tpu.matmul %31, %29, %cst_28 {dimension_numbers = #tpu.dot_dimension_numbers<[1], [0], [0], [1], [0, 0, 1, 1], [], []>} : vector<16x16xf32>, vector<16x256xf32>, vector<16x256xf32> -> vector<16x256xf32>
    %33 = arith.addf %24, %32 : vector<16x256xf32>
    %c0_29 = arith.constant 0 : index
    %c0_30 = arith.constant 0 : index
    %c17 = arith.constant 17 : index
    %34 = vector.load %arg4[%c0_29, %c0_30, %c17] : memref<1x16x290xf32, #tpu.memory_space<vmem>>, vector<1x16x256xf32>
    %35 = vector.shape_cast %34 : vector<1x16x256xf32> to vector<16x256xf32>
    %c4 = arith.constant 4 : index
    %c0_31 = arith.constant 0 : index
    %c0_32 = arith.constant 0 : index
    %36 = vector.load %arg1[%c4, %c0_31, %c0_32] : memref<9x16x16xf32, #tpu.memory_space<vmem>>, vector<1x16x16xf32>
    %37 = vector.shape_cast %36 : vector<1x16x16xf32> to vector<16x16xf32>
    %cst_33 = arith.constant dense<0.000000e+00> : vector<16x256xf32>
    %38 = tpu.matmul %37, %35, %cst_33 {dimension_numbers = #tpu.dot_dimension_numbers<[1], [0], [0], [1], [0, 0, 1, 1], [], []>} : vector<16x16xf32>, vector<16x256xf32>, vector<16x256xf32> -> vector<16x256xf32>
    %39 = arith.addf %33, %38 : vector<16x256xf32>
    %c0_34 = arith.constant 0 : index
    %c0_35 = arith.constant 0 : index
    %c18 = arith.constant 18 : index
    %40 = vector.load %arg4[%c0_34, %c0_35, %c18] : memref<1x16x290xf32, #tpu.memory_space<vmem>>, vector<1x16x256xf32>
    %41 = vector.shape_cast %40 : vector<1x16x256xf32> to vector<16x256xf32>
    %c2_36 = arith.constant 2 : index
    %c0_37 = arith.constant 0 : index
    %42 = vector.load %arg3[%c2_36, %c0_37] : memref<3x256xf32, #tpu.memory_space<vmem>>, vector<1x256xf32>
    %43 = vector.broadcast %42 : vector<1x256xf32> to vector<16x256xf32>
    %44 = arith.mulf %41, %43 : vector<16x256xf32>
    %c5 = arith.constant 5 : index
    %c0_38 = arith.constant 0 : index
    %c0_39 = arith.constant 0 : index
    %45 = vector.load %arg1[%c5, %c0_38, %c0_39] : memref<9x16x16xf32, #tpu.memory_space<vmem>>, vector<1x16x16xf32>
    %46 = vector.shape_cast %45 : vector<1x16x16xf32> to vector<16x16xf32>
    %cst_40 = arith.constant dense<0.000000e+00> : vector<16x256xf32>
    %47 = tpu.matmul %46, %44, %cst_40 {dimension_numbers = #tpu.dot_dimension_numbers<[1], [0], [0], [1], [0, 0, 1, 1], [], []>} : vector<16x16xf32>, vector<16x256xf32>, vector<16x256xf32> -> vector<16x256xf32>
    %48 = arith.addf %39, %47 : vector<16x256xf32>
    %c0_41 = arith.constant 0 : index
    %c0_42 = arith.constant 0 : index
    %c32 = arith.constant 32 : index
    %49 = vector.load %arg4[%c0_41, %c0_42, %c32] : memref<1x16x290xf32, #tpu.memory_space<vmem>>, vector<1x16x256xf32>
    %50 = vector.shape_cast %49 : vector<1x16x256xf32> to vector<16x256xf32>
    %c0_43 = arith.constant 0 : index
    %c0_44 = arith.constant 0 : index
    %51 = vector.load %arg3[%c0_43, %c0_44] : memref<3x256xf32, #tpu.memory_space<vmem>>, vector<1x256xf32>
    %52 = vector.broadcast %51 : vector<1x256xf32> to vector<16x256xf32>
    %53 = arith.mulf %50, %52 : vector<16x256xf32>
    %c6 = arith.constant 6 : index
    %c0_45 = arith.constant 0 : index
    %c0_46 = arith.constant 0 : index
    %54 = vector.load %arg1[%c6, %c0_45, %c0_46] : memref<9x16x16xf32, #tpu.memory_space<vmem>>, vector<1x16x16xf32>
    %55 = vector.shape_cast %54 : vector<1x16x16xf32> to vector<16x16xf32>
    %cst_47 = arith.constant dense<0.000000e+00> : vector<16x256xf32>
    %56 = tpu.matmul %55, %53, %cst_47 {dimension_numbers = #tpu.dot_dimension_numbers<[1], [0], [0], [1], [0, 0, 1, 1], [], []>} : vector<16x16xf32>, vector<16x256xf32>, vector<16x256xf32> -> vector<16x256xf32>
    %57 = arith.addf %48, %56 : vector<16x256xf32>
    %c0_48 = arith.constant 0 : index
    %c0_49 = arith.constant 0 : index
    %c33 = arith.constant 33 : index
    %58 = vector.load %arg4[%c0_48, %c0_49, %c33] : memref<1x16x290xf32, #tpu.memory_space<vmem>>, vector<1x16x256xf32>
    %59 = vector.shape_cast %58 : vector<1x16x256xf32> to vector<16x256xf32>
    %c7 = arith.constant 7 : index
    %c0_50 = arith.constant 0 : index
    %c0_51 = arith.constant 0 : index
    %60 = vector.load %arg1[%c7, %c0_50, %c0_51] : memref<9x16x16xf32, #tpu.memory_space<vmem>>, vector<1x16x16xf32>
    %61 = vector.shape_cast %60 : vector<1x16x16xf32> to vector<16x16xf32>
    %cst_52 = arith.constant dense<0.000000e+00> : vector<16x256xf32>
    %62 = tpu.matmul %61, %59, %cst_52 {dimension_numbers = #tpu.dot_dimension_numbers<[1], [0], [0], [1], [0, 0, 1, 1], [], []>} : vector<16x16xf32>, vector<16x256xf32>, vector<16x256xf32> -> vector<16x256xf32>
    %63 = arith.addf %57, %62 : vector<16x256xf32>
    %c0_53 = arith.constant 0 : index
    %c0_54 = arith.constant 0 : index
    %c34 = arith.constant 34 : index
    %64 = vector.load %arg4[%c0_53, %c0_54, %c34] : memref<1x16x290xf32, #tpu.memory_space<vmem>>, vector<1x16x256xf32>
    %65 = vector.shape_cast %64 : vector<1x16x256xf32> to vector<16x256xf32>
    %c2_55 = arith.constant 2 : index
    %c0_56 = arith.constant 0 : index
    %66 = vector.load %arg3[%c2_55, %c0_56] : memref<3x256xf32, #tpu.memory_space<vmem>>, vector<1x256xf32>
    %67 = vector.broadcast %66 : vector<1x256xf32> to vector<16x256xf32>
    %68 = arith.mulf %65, %67 : vector<16x256xf32>
    %c8 = arith.constant 8 : index
    %c0_57 = arith.constant 0 : index
    %c0_58 = arith.constant 0 : index
    %69 = vector.load %arg1[%c8, %c0_57, %c0_58] : memref<9x16x16xf32, #tpu.memory_space<vmem>>, vector<1x16x16xf32>
    %70 = vector.shape_cast %69 : vector<1x16x16xf32> to vector<16x16xf32>
    %cst_59 = arith.constant dense<0.000000e+00> : vector<16x256xf32>
    %71 = tpu.matmul %70, %68, %cst_59 {dimension_numbers = #tpu.dot_dimension_numbers<[1], [0], [0], [1], [0, 0, 1, 1], [], []>} : vector<16x16xf32>, vector<16x256xf32>, vector<16x256xf32> -> vector<16x256xf32>
    %72 = arith.addf %63, %71 : vector<16x256xf32>
    %c0_60 = arith.constant 0 : index
    %c0_61 = arith.constant 0 : index
    %73 = vector.load %arg2[%c0_60, %c0_61] : memref<16x1xf32, #tpu.memory_space<vmem>>, vector<16x1xf32>
    %74 = vector.broadcast %73 : vector<16x1xf32> to vector<16x256xf32>
    %75 = arith.addf %72, %74 : vector<16x256xf32>
    %cst_62 = arith.constant 0.000000e+00 : f32
    %76 = vector.broadcast %cst_62 : f32 to vector<16x256xf32>
    %77 = arith.maximumf %75, %76 : vector<16x256xf32>
    %c0_63 = arith.constant 0 : index
    %c0_64 = arith.constant 0 : index
    %c0_65 = arith.constant 0 : index
    %78 = vector.load %arg5[%c0_63, %c0_64, %c0_65] : memref<1x16x256xf32, #tpu.memory_space<vmem>>, vector<1x16x256xf32>
    %79 = vector.shape_cast %78 : vector<1x16x256xf32> to vector<16x256xf32>
    %80 = vector.shape_cast %77 : vector<16x256xf32> to vector<1x16x256xf32>
    tpu.vector_store %arg5[%c0_63, %c0_64, %c0_65], %80 {strides = array<i32>} : memref<1x16x256xf32, #tpu.memory_space<vmem>>, vector<1x16x256xf32>,
    return
  }
  func.func @transform_0(%arg0: i32) -> (i32, i32, i32) {
    %c0_i32 = arith.constant 0 : i32
    %c0_i32_0 = arith.constant 0 : i32
    %c0_i32_1 = arith.constant 0 : i32
    %c0_i32_2 = arith.constant 0 : i32
    return %c0_i32, %c0_i32_0, %c0_i32_1 : i32, i32, i32
  }
  func.func @transform_1(%arg0: i32) -> (i32, i32) {
    %c0_i32 = arith.constant 0 : i32
    %c0_i32_0 = arith.constant 0 : i32
    %c0_i32_1 = arith.constant 0 : i32
    return %c0_i32, %c0_i32_0 : i32, i32
  }
  func.func @transform_2(%arg0: i32) -> (i32, i32) {
    %c0_i32 = arith.constant 0 : i32
    %c0_i32_0 = arith.constant 0 : i32
    %c0_i32_1 = arith.constant 0 : i32
    return %c0_i32, %c0_i32_0 : i32, i32
  }
  func.func @transform_3(%arg0: i32) -> (i32, i32, i32) {
    %c0_i32 = arith.constant 0 : i32
    %c0_i32_0 = arith.constant 0 : i32
    %c0_i32_1 = arith.constant 0 : i32
    return %arg0, %c0_i32, %c0_i32_0 : i32, i32, i32
  }
  func.func @transform_4(%arg0: i32) -> (i32, i32, i32) {
    %c0_i32 = arith.constant 0 : i32
    %c0_i32_0 = arith.constant 0 : i32
    %c0_i32_1 = arith.constant 0 : i32
    return %arg0, %c0_i32, %c0_i32_0 : i32, i32, i32
  }
}

module attributes {stable_mosaic.version = 11 : i64} {
  func.func @kernel(%arg0: i32, %arg1: memref<9x16x16xf32, #tpu.memory_space<vmem>>, %arg2: memref<16x1xf32, #tpu.memory_space<vmem>>, %arg3: memref<3x256xf32, #tpu.memory_space<vmem>>, %arg4: memref<1x16x290xf32, #tpu.memory_space<vmem>>, %arg5: memref<1x16x256xf32, #tpu.memory_space<vmem>>) attributes {dimension_semantics = [#tpu.dimension_semantics<parallel>], iteration_bounds = array<i64: 2>, scalar_prefetch = 0 : i64, scratch_operands = 0 : i64, tpu.core_type = #tpu.core_type<tc>, window_params = [{pipeline_mode = #tpu.pipeline_mode<synchronous>, transform_indices = @transform_0, window_bounds = array<i64: 9, 16, 16>}, {pipeline_mode = #tpu.pipeline_mode<synchronous>, transform_indices = @transform_1, window_bounds = array<i64: 16, 1>}, {pipeline_mode = #tpu.pipeline_mode<synchronous>, transform_indices = @transform_2, window_bounds = array<i64: 3, 256>}, {transform_indices = @transform_3, window_bounds = array<i64: 1, 16, 290>}, {transform_indices = @transform_4, window_bounds = array<i64: 1, 16, 256>}]} {
    %cst = arith.constant 0.000000e+00 : f32
    %0 = vector.broadcast %cst : f32 to vector<16x256xf32>
    %c0 = arith.constant 0 : index
    %c0_0 = arith.constant 0 : index
    %c0_1 = arith.constant 0 : index
    %1 = vector.load %arg4[%c0, %c0_0, %c0_1] : memref<1x16x290xf32, #tpu.memory_space<vmem>>, vector<1x16x256xf32>
    %2 = vector.shape_cast %1 : vector<1x16x256xf32> to vector<16x256xf32>
    %c0_2 = arith.constant 0 : index
    %c0_3 = arith.constant 0 : index
    %3 = vector.load %arg3[%c0_2, %c0_3] : memref<3x256xf32, #tpu.memory_space<vmem>>, vector<1x256xf32>
    %4 = vector.broadcast %3 : vector<1x256xf32> to vector<16x256xf32>
    %5 = arith.mulf %2, %4 : vector<16x256xf32>
    %c0_4 = arith.constant 0 : index
    %c0_5 = arith.constant 0 : index
    %c0_6 = arith.constant 0 : index
    %6 = vector.load %arg1[%c0_4, %c0_5, %c0_6] : memref<9x16x16xf32, #tpu.memory_space<vmem>>, vector<1x16x16xf32>
    %7 = vector.shape_cast %6 : vector<1x16x16xf32> to vector<16x16xf32>
    %cst_7 = arith.constant dense<0.000000e+00> : vector<16x256xf32>
    %8 = tpu.matmul %7, %5, %cst_7 {dimension_numbers = #tpu.dot_dimension_numbers<[1], [0], [0], [1], [0, 0, 1, 1], [], []>} : vector<16x16xf32>, vector<16x256xf32>, vector<16x256xf32> -> vector<16x256xf32>
    %9 = arith.addf %0, %8 : vector<16x256xf32>
    %c0_8 = arith.constant 0 : index
    %c0_9 = arith.constant 0 : index
    %c1 = arith.constant 1 : index
    %10 = vector.load %arg4[%c0_8, %c0_9, %c1] : memref<1x16x290xf32, #tpu.memory_space<vmem>>, vector<1x16x256xf32>
    %11 = vector.shape_cast %10 : vector<1x16x256xf32> to vector<16x256xf32>
    %c1_10 = arith.constant 1 : index
    %c0_11 = arith.constant 0 : index
    %c0_12 = arith.constant 0 : index
    %12 = vector.load %arg1[%c1_10, %c0_11, %c0_12] : memref<9x16x16xf32, #tpu.memory_space<vmem>>, vector<1x16x16xf32>
    %13 = vector.shape_cast %12 : vector<1x16x16xf32> to vector<16x16xf32>
    %cst_13 = arith.constant dense<0.000000e+00> : vector<16x256xf32>
    %14 = tpu.matmul %13, %11, %cst_13 {dimension_numbers = #tpu.dot_dimension_numbers<[1], [0], [0], [1], [0, 0, 1, 1], [], []>} : vector<16x16xf32>, vector<16x256xf32>, vector<16x256xf32> -> vector<16x256xf32>
    %15 = arith.addf %9, %14 : vector<16x256xf32>
    %c0_14 = arith.constant 0 : index
    %c0_15 = arith.constant 0 : index
    %c2 = arith.constant 2 : index
    %16 = vector.load %arg4[%c0_14, %c0_15, %c2] : memref<1x16x290xf32, #tpu.memory_space<vmem>>, vector<1x16x256xf32>
    %17 = vector.shape_cast %16 : vector<1x16x256xf32> to vector<16x256xf32>
    %c2_16 = arith.constant 2 : index
    %c0_17 = arith.constant 0 : index
    %18 = vector.load %arg3[%c2_16, %c0_17] : memref<3x256xf32, #tpu.memory_space<vmem>>, vector<1x256xf32>
    %19 = vector.broadcast %18 : vector<1x256xf32> to vector<16x256xf32>
    %20 = arith.mulf %17, %19 : vector<16x256xf32>
    %c2_18 = arith.constant 2 : index
    %c0_19 = arith.constant 0 : index
    %c0_20 = arith.constant 0 : index
    %21 = vector.load %arg1[%c2_18, %c0_19, %c0_20] : memref<9x16x16xf32, #tpu.memory_space<vmem>>, vector<1x16x16xf32>
    %22 = vector.shape_cast %21 : vector<1x16x16xf32> to vector<16x16xf32>
    %cst_21 = arith.constant dense<0.000000e+00> : vector<16x256xf32>
    %23 = tpu.matmul %22, %20, %cst_21 {dimension_numbers = #tpu.dot_dimension_numbers<[1], [0], [0], [1], [0, 0, 1, 1], [], []>} : vector<16x16xf32>, vector<16x256xf32>, vector<16x256xf32> -> vector<16x256xf32>
    %24 = arith.addf %15, %23 : vector<16x256xf32>
    %c0_22 = arith.constant 0 : index
    %c0_23 = arith.constant 0 : index
    %c16 = arith.constant 16 : index
    %25 = vector.load %arg4[%c0_22, %c0_23, %c16] : memref<1x16x290xf32, #tpu.memory_space<vmem>>, vector<1x16x256xf32>
    %26 = vector.shape_cast %25 : vector<1x16x256xf32> to vector<16x256xf32>
    %c0_24 = arith.constant 0 : index
    %c0_25 = arith.constant 0 : index
    %27 = vector.load %arg3[%c0_24, %c0_25] : memref<3x256xf32, #tpu.memory_space<vmem>>, vector<1x256xf32>
    %28 = vector.broadcast %27 : vector<1x256xf32> to vector<16x256xf32>
    %29 = arith.mulf %26, %28 : vector<16x256xf32>
    %c3 = arith.constant 3 : index
    %c0_26 = arith.constant 0 : index
    %c0_27 = arith.constant 0 : index
    %30 = vector.load %arg1[%c3, %c0_26, %c0_27] : memref<9x16x16xf32, #tpu.memory_space<vmem>>, vector<1x16x16xf32>
    %31 = vector.shape_cast %30 : vector<1x16x16xf32> to vector<16x16xf32>
    %cst_28 = arith.constant dense<0.000000e+00> : vector<16x256xf32>
    %32 = tpu.matmul %31, %29, %cst_28 {dimension_numbers = #tpu.dot_dimension_numbers<[1], [0], [0], [1], [0, 0, 1, 1], [], []>} : vector<16x16xf32>, vector<16x256xf32>, vector<16x256xf32> -> vector<16x256xf32>
    %33 = arith.addf %24, %32 : vector<16x256xf32>
    %c0_29 = arith.constant 0 : index
    %c0_30 = arith.constant 0 : index
    %c17 = arith.constant 17 : index
    %34 = vector.load %arg4[%c0_29, %c0_30, %c17] : memref<1x16x290xf32, #tpu.memory_space<vmem>>, vector<1x16x256xf32>
    %35 = vector.shape_cast %34 : vector<1x16x256xf32> to vector<16x256xf32>
    %c4 = arith.constant 4 : index
    %c0_31 = arith.constant 0 : index
    %c0_32 = arith.constant 0 : index
    %36 = vector.load %arg1[%c4, %c0_31, %c0_32] : memref<9x16x16xf32, #tpu.memory_space<vmem>>, vector<1x16x16xf32>
    %37 = vector.shape_cast %36 : vector<1x16x16xf32> to vector<16x16xf32>
    %cst_33 = arith.constant dense<0.000000e+00> : vector<16x256xf32>
    %38 = tpu.matmul %37, %35, %cst_33 {dimension_numbers = #tpu.dot_dimension_numbers<[1], [0], [0], [1], [0, 0, 1, 1], [], []>} : vector<16x16xf32>, vector<16x256xf32>, vector<16x256xf32> -> vector<16x256xf32>
    %39 = arith.addf %33, %38 : vector<16x256xf32>
    %c0_34 = arith.constant 0 : index
    %c0_35 = arith.constant 0 : index
    %c18 = arith.constant 18 : index
    %40 = vector.load %arg4[%c0_34, %c0_35, %c18] : memref<1x16x290xf32, #tpu.memory_space<vmem>>, vector<1x16x256xf32>
    %41 = vector.shape_cast %40 : vector<1x16x256xf32> to vector<16x256xf32>
    %c2_36 = arith.constant 2 : index
    %c0_37 = arith.constant 0 : index
    %42 = vector.load %arg3[%c2_36, %c0_37] : memref<3x256xf32, #tpu.memory_space<vmem>>, vector<1x256xf32>
    %43 = vector.broadcast %42 : vector<1x256xf32> to vector<16x256xf32>
    %44 = arith.mulf %41, %43 : vector<16x256xf32>
    %c5 = arith.constant 5 : index
    %c0_38 = arith.constant 0 : index
    %c0_39 = arith.constant 0 : index
    %45 = vector.load %arg1[%c5, %c0_38, %c0_39] : memref<9x16x16xf32, #tpu.memory_space<vmem>>, vector<1x16x16xf32>
    %46 = vector.shape_cast %45 : vector<1x16x16xf32> to vector<16x16xf32>
    %cst_40 = arith.constant dense<0.000000e+00> : vector<16x256xf32>
    %47 = tpu.matmul %46, %44, %cst_40 {dimension_numbers = #tpu.dot_dimension_numbers<[1], [0], [0], [1], [0, 0, 1, 1], [], []>} : vector<16x16xf32>, vector<16x256xf32>, vector<16x256xf32> -> vector<16x256xf32>
    %48 = arith.addf %39, %47 : vector<16x256xf32>
    %c0_41 = arith.constant 0 : index
    %c0_42 = arith.constant 0 : index
    %c32 = arith.constant 32 : index
    %49 = vector.load %arg4[%c0_41, %c0_42, %c32] : memref<1x16x290xf32, #tpu.memory_space<vmem>>, vector<1x16x256xf32>
    %50 = vector.shape_cast %49 : vector<1x16x256xf32> to vector<16x256xf32>
    %c0_43 = arith.constant 0 : index
    %c0_44 = arith.constant 0 : index
    %51 = vector.load %arg3[%c0_43, %c0_44] : memref<3x256xf32, #tpu.memory_space<vmem>>, vector<1x256xf32>
    %52 = vector.broadcast %51 : vector<1x256xf32> to vector<16x256xf32>
    %53 = arith.mulf %50, %52 : vector<16x256xf32>
    %c6 = arith.constant 6 : index
    %c0_45 = arith.constant 0 : index
    %c0_46 = arith.constant 0 : index
    %54 = vector.load %arg1[%c6, %c0_45, %c0_46] : memref<9x16x16xf32, #tpu.memory_space<vmem>>, vector<1x16x16xf32>
    %55 = vector.shape_cast %54 : vector<1x16x16xf32> to vector<16x16xf32>
    %cst_47 = arith.constant dense<0.000000e+00> : vector<16x256xf32>
    %56 = tpu.matmul %55, %53, %cst_47 {dimension_numbers = #tpu.dot_dimension_numbers<[1], [0], [0], [1], [0, 0, 1, 1], [], []>} : vector<16x16xf32>, vector<16x256xf32>, vector<16x256xf32> -> vector<16x256xf32>
    %57 = arith.addf %48, %56 : vector<16x256xf32>
    %c0_48 = arith.constant 0 : index
    %c0_49 = arith.constant 0 : index
    %c33 = arith.constant 33 : index
    %58 = vector.load %arg4[%c0_48, %c0_49, %c33] : memref<1x16x290xf32, #tpu.memory_space<vmem>>, vector<1x16x256xf32>
    %59 = vector.shape_cast %58 : vector<1x16x256xf32> to vector<16x256xf32>
    %c7 = arith.constant 7 : index
    %c0_50 = arith.constant 0 : index
    %c0_51 = arith.constant 0 : index
    %60 = vector.load %arg1[%c7, %c0_50, %c0_51] : memref<9x16x16xf32, #tpu.memory_space<vmem>>, vector<1x16x16xf32>
    %61 = vector.shape_cast %60 : vector<1x16x16xf32> to vector<16x16xf32>
    %cst_52 = arith.constant dense<0.000000e+00> : vector<16x256xf32>
    %62 = tpu.matmul %61, %59, %cst_52 {dimension_numbers = #tpu.dot_dimension_numbers<[1], [0], [0], [1], [0, 0, 1, 1], [], []>} : vector<16x16xf32>, vector<16x256xf32>, vector<16x256xf32> -> vector<16x256xf32>
    %63 = arith.addf %57, %62 : vector<16x256xf32>
    %c0_53 = arith.constant 0 : index
    %c0_54 = arith.constant 0 : index
    %c34 = arith.constant 34 : index
    %64 = vector.load %arg4[%c0_53, %c0_54, %c34] : memref<1x16x290xf32, #tpu.memory_space<vmem>>, vector<1x16x256xf32>
    %65 = vector.shape_cast %64 : vector<1x16x256xf32> to vector<16x256xf32>
    %c2_55 = arith.constant 2 : index
    %c0_56 = arith.constant 0 : index
    %66 = vector.load %arg3[%c2_55, %c0_56] : memref<3x256xf32, #tpu.memory_space<vmem>>, vector<1x256xf32>
    %67 = vector.broadcast %66 : vector<1x256xf32> to vector<16x256xf32>
    %68 = arith.mulf %65, %67 : vector<16x256xf32>
    %c8 = arith.constant 8 : index
    %c0_57 = arith.constant 0 : index
    %c0_58 = arith.constant 0 : index
    %69 = vector.load %arg1[%c8, %c0_57, %c0_58] : memref<9x16x16xf32, #tpu.memory_space<vmem>>, vector<1x16x16xf32>
    %70 = vector.shape_cast %69 : vector<1x16x16xf32> to vector<16x16xf32>
    %cst_59 = arith.constant dense<0.000000e+00> : vector<16x256xf32>
    %71 = tpu.matmul %70, %68, %cst_59 {dimension_numbers = #tpu.dot_dimension_numbers<[1], [0], [0], [1], [0, 0, 1, 1], [], []>} : vector<16x16xf32>, vector<16x256xf32>, vector<16x256xf32> -> vector<16x256xf32>
    %72 = arith.addf %63, %71 : vector<16x256xf32>
    %c0_60 = arith.constant 0 : index
    %c0_61 = arith.constant 0 : index
    %73 = vector.load %arg2[%c0_60, %c0_61] : memref<16x1xf32, #tpu.memory_space<vmem>>, vector<16x1xf32>
    %74 = vector.broadcast %73 : vector<16x1xf32> to vector<16x256xf32>
    %75 = arith.addf %72, %74 : vector<16x256xf32>
    %c0_62 = arith.constant 0 : index
    %c0_63 = arith.constant 0 : index
    %c0_64 = arith.constant 0 : index
    %76 = vector.load %arg5[%c0_62, %c0_63, %c0_64] : memref<1x16x256xf32, #tpu.memory_space<vmem>>, vector<1x16x256xf32>
    %77 = vector.shape_cast %76 : vector<1x16x256xf32> to vector<16x256xf32>
    %78 = vector.shape_cast %75 : vector<16x256xf32> to vector<1x16x256xf32>
    tpu.vector_store %arg5[%c0_62, %c0_63, %c0_64], %78 {strides = array<i32>} : memref<1x16x256xf32, #tpu.memory_space<vmem>>, vector<1x16x256xf32>,
    return
  }
  func.func @transform_0(%arg0: i32) -> (i32, i32, i32) {
    %c0_i32 = arith.constant 0 : i32
    %c0_i32_0 = arith.constant 0 : i32
    %c0_i32_1 = arith.constant 0 : i32
    %c0_i32_2 = arith.constant 0 : i32
    return %c0_i32, %c0_i32_0, %c0_i32_1 : i32, i32, i32
  }
  func.func @transform_1(%arg0: i32) -> (i32, i32) {
    %c0_i32 = arith.constant 0 : i32
    %c0_i32_0 = arith.constant 0 : i32
    %c0_i32_1 = arith.constant 0 : i32
    return %c0_i32, %c0_i32_0 : i32, i32
  }
  func.func @transform_2(%arg0: i32) -> (i32, i32) {
    %c0_i32 = arith.constant 0 : i32
    %c0_i32_0 = arith.constant 0 : i32
    %c0_i32_1 = arith.constant 0 : i32
    return %c0_i32, %c0_i32_0 : i32, i32
  }
  func.func @transform_3(%arg0: i32) -> (i32, i32, i32) {
    %c0_i32 = arith.constant 0 : i32
    %c0_i32_0 = arith.constant 0 : i32
    %c0_i32_1 = arith.constant 0 : i32
    return %arg0, %c0_i32, %c0_i32_0 : i32, i32, i32
  }
  func.func @transform_4(%arg0: i32) -> (i32, i32, i32) {
    %c0_i32 = arith.constant 0 : i32
    %c0_i32_0 = arith.constant 0 : i32
    %c0_i32_1 = arith.constant 0 : i32
    return %arg0, %c0_i32, %c0_i32_0 : i32, i32, i32
  }
}

module attributes {stable_mosaic.version = 11 : i64} {
  func.func @kernel(%arg0: i32, %arg1: memref<1x9x16xf32, #tpu.memory_space<vmem>>, %arg2: memref<1x16x9xf32, #tpu.memory_space<vmem>>, %arg3: memref<9x16x16xf32, #tpu.memory_space<vmem>>, %arg4: memref<3x256xf32, #tpu.memory_space<vmem>>, %arg5: memref<1x16x290xf32, #tpu.memory_space<vmem>>, %arg6: memref<1x16x256xf32, #tpu.memory_space<vmem>>) attributes {dimension_semantics = [#tpu.dimension_semantics<parallel>], iteration_bounds = array<i64: 2>, scalar_prefetch = 0 : i64, scratch_operands = 0 : i64, tpu.core_type = #tpu.core_type<tc>, window_params = [{transform_indices = @transform_0, window_bounds = array<i64: 1, 9, 16>}, {transform_indices = @transform_1, window_bounds = array<i64: 1, 16, 9>}, {pipeline_mode = #tpu.pipeline_mode<synchronous>, transform_indices = @transform_2, window_bounds = array<i64: 9, 16, 16>}, {pipeline_mode = #tpu.pipeline_mode<synchronous>, transform_indices = @transform_3, window_bounds = array<i64: 3, 256>}, {transform_indices = @transform_4, window_bounds = array<i64: 1, 16, 290>}, {transform_indices = @transform_5, window_bounds = array<i64: 1, 16, 256>}]} {
    %cst = arith.constant 0.000000e+00 : f32
    %0 = vector.broadcast %cst : f32 to vector<16x256xf32>
    %c0 = arith.constant 0 : index
    %c0_0 = arith.constant 0 : index
    %c0_1 = arith.constant 0 : index
    %1 = vector.load %arg5[%c0, %c0_0, %c0_1] : memref<1x16x290xf32, #tpu.memory_space<vmem>>, vector<1x16x256xf32>
    %2 = vector.shape_cast %1 : vector<1x16x256xf32> to vector<16x256xf32>
    %c0_2 = arith.constant 0 : index
    %c0_3 = arith.constant 0 : index
    %3 = vector.load %arg4[%c0_2, %c0_3] : memref<3x256xf32, #tpu.memory_space<vmem>>, vector<1x256xf32>
    %4 = vector.broadcast %3 : vector<1x256xf32> to vector<16x256xf32>
    %5 = arith.mulf %2, %4 : vector<16x256xf32>
    %c0_4 = arith.constant 0 : index
    %c0_5 = arith.constant 0 : index
    %c0_6 = arith.constant 0 : index
    %6 = vector.load %arg2[%c0_4, %c0_5, %c0_6] : memref<1x16x9xf32, #tpu.memory_space<vmem>>, vector<1x16x1xf32>
    %7 = vector.shape_cast %6 : vector<1x16x1xf32> to vector<16x1xf32>
    %c0_7 = arith.constant 0 : index
    %c0_8 = arith.constant 0 : index
    %c0_9 = arith.constant 0 : index
    %8 = vector.load %arg1[%c0_7, %c0_8, %c0_9] : memref<1x9x16xf32, #tpu.memory_space<vmem>>, vector<1x1x16xf32>
    %9 = vector.shape_cast %8 : vector<1x1x16xf32> to vector<1x16xf32>
    %10 = vector.broadcast %7 : vector<16x1xf32> to vector<16x16xf32>
    %11 = vector.broadcast %9 : vector<1x16xf32> to vector<16x16xf32>
    %12 = arith.addf %10, %11 : vector<16x16xf32>
    %13 = arith.negf %12 : vector<16x16xf32>
    %14 = math.exp %13 : vector<16x16xf32>
    %cst_10 = arith.constant 1.000000e+00 : f32
    %15 = vector.broadcast %cst_10 : f32 to vector<16x16xf32>
    %16 = arith.addf %15, %14 : vector<16x16xf32>
    %17 = arith.divf %15, %16 : vector<16x16xf32>
    %c0_11 = arith.constant 0 : index
    %c0_12 = arith.constant 0 : index
    %c0_13 = arith.constant 0 : index
    %18 = vector.load %arg3[%c0_11, %c0_12, %c0_13] : memref<9x16x16xf32, #tpu.memory_space<vmem>>, vector<1x16x16xf32>
    %19 = vector.shape_cast %18 : vector<1x16x16xf32> to vector<16x16xf32>
    %20 = arith.mulf %17, %19 : vector<16x16xf32>
    %cst_14 = arith.constant dense<0.000000e+00> : vector<16x256xf32>
    %21 = tpu.matmul %20, %5, %cst_14 {dimension_numbers = #tpu.dot_dimension_numbers<[1], [0], [0], [1], [0, 0, 1, 1], [], []>} : vector<16x16xf32>, vector<16x256xf32>, vector<16x256xf32> -> vector<16x256xf32>
    %22 = arith.addf %0, %21 : vector<16x256xf32>
    %c0_15 = arith.constant 0 : index
    %c0_16 = arith.constant 0 : index
    %c1 = arith.constant 1 : index
    %23 = vector.load %arg5[%c0_15, %c0_16, %c1] : memref<1x16x290xf32, #tpu.memory_space<vmem>>, vector<1x16x256xf32>
    %24 = vector.shape_cast %23 : vector<1x16x256xf32> to vector<16x256xf32>
    %c0_17 = arith.constant 0 : index
    %c0_18 = arith.constant 0 : index
    %c1_19 = arith.constant 1 : index
    %25 = vector.load %arg2[%c0_17, %c0_18, %c1_19] : memref<1x16x9xf32, #tpu.memory_space<vmem>>, vector<1x16x1xf32>
    %26 = vector.shape_cast %25 : vector<1x16x1xf32> to vector<16x1xf32>
    %c0_20 = arith.constant 0 : index
    %c1_21 = arith.constant 1 : index
    %c0_22 = arith.constant 0 : index
    %27 = vector.load %arg1[%c0_20, %c1_21, %c0_22] : memref<1x9x16xf32, #tpu.memory_space<vmem>>, vector<1x1x16xf32>
    %28 = vector.shape_cast %27 : vector<1x1x16xf32> to vector<1x16xf32>
    %29 = vector.broadcast %26 : vector<16x1xf32> to vector<16x16xf32>
    %30 = vector.broadcast %28 : vector<1x16xf32> to vector<16x16xf32>
    %31 = arith.addf %29, %30 : vector<16x16xf32>
    %32 = arith.negf %31 : vector<16x16xf32>
    %33 = math.exp %32 : vector<16x16xf32>
    %cst_23 = arith.constant 1.000000e+00 : f32
    %34 = vector.broadcast %cst_23 : f32 to vector<16x16xf32>
    %35 = arith.addf %34, %33 : vector<16x16xf32>
    %36 = arith.divf %34, %35 : vector<16x16xf32>
    %c1_24 = arith.constant 1 : index
    %c0_25 = arith.constant 0 : index
    %c0_26 = arith.constant 0 : index
    %37 = vector.load %arg3[%c1_24, %c0_25, %c0_26] : memref<9x16x16xf32, #tpu.memory_space<vmem>>, vector<1x16x16xf32>
    %38 = vector.shape_cast %37 : vector<1x16x16xf32> to vector<16x16xf32>
    %39 = arith.mulf %36, %38 : vector<16x16xf32>
    %cst_27 = arith.constant dense<0.000000e+00> : vector<16x256xf32>
    %40 = tpu.matmul %39, %24, %cst_27 {dimension_numbers = #tpu.dot_dimension_numbers<[1], [0], [0], [1], [0, 0, 1, 1], [], []>} : vector<16x16xf32>, vector<16x256xf32>, vector<16x256xf32> -> vector<16x256xf32>
    %41 = arith.addf %22, %40 : vector<16x256xf32>
    %c0_28 = arith.constant 0 : index
    %c0_29 = arith.constant 0 : index
    %c2 = arith.constant 2 : index
    %42 = vector.load %arg5[%c0_28, %c0_29, %c2] : memref<1x16x290xf32, #tpu.memory_space<vmem>>, vector<1x16x256xf32>
    %43 = vector.shape_cast %42 : vector<1x16x256xf32> to vector<16x256xf32>
    %c2_30 = arith.constant 2 : index
    %c0_31 = arith.constant 0 : index
    %44 = vector.load %arg4[%c2_30, %c0_31] : memref<3x256xf32, #tpu.memory_space<vmem>>, vector<1x256xf32>
    %45 = vector.broadcast %44 : vector<1x256xf32> to vector<16x256xf32>
    %46 = arith.mulf %43, %45 : vector<16x256xf32>
    %c0_32 = arith.constant 0 : index
    %c0_33 = arith.constant 0 : index
    %c2_34 = arith.constant 2 : index
    %47 = vector.load %arg2[%c0_32, %c0_33, %c2_34] : memref<1x16x9xf32, #tpu.memory_space<vmem>>, vector<1x16x1xf32>
    %48 = vector.shape_cast %47 : vector<1x16x1xf32> to vector<16x1xf32>
    %c0_35 = arith.constant 0 : index
    %c2_36 = arith.constant 2 : index
    %c0_37 = arith.constant 0 : index
    %49 = vector.load %arg1[%c0_35, %c2_36, %c0_37] : memref<1x9x16xf32, #tpu.memory_space<vmem>>, vector<1x1x16xf32>
    %50 = vector.shape_cast %49 : vector<1x1x16xf32> to vector<1x16xf32>
    %51 = vector.broadcast %48 : vector<16x1xf32> to vector<16x16xf32>
    %52 = vector.broadcast %50 : vector<1x16xf32> to vector<16x16xf32>
    %53 = arith.addf %51, %52 : vector<16x16xf32>
    %54 = arith.negf %53 : vector<16x16xf32>
    %55 = math.exp %54 : vector<16x16xf32>
    %cst_38 = arith.constant 1.000000e+00 : f32
    %56 = vector.broadcast %cst_38 : f32 to vector<16x16xf32>
    %57 = arith.addf %56, %55 : vector<16x16xf32>
    %58 = arith.divf %56, %57 : vector<16x16xf32>
    %c2_39 = arith.constant 2 : index
    %c0_40 = arith.constant 0 : index
    %c0_41 = arith.constant 0 : index
    %59 = vector.load %arg3[%c2_39, %c0_40, %c0_41] : memref<9x16x16xf32, #tpu.memory_space<vmem>>, vector<1x16x16xf32>
    %60 = vector.shape_cast %59 : vector<1x16x16xf32> to vector<16x16xf32>
    %61 = arith.mulf %58, %60 : vector<16x16xf32>
    %cst_42 = arith.constant dense<0.000000e+00> : vector<16x256xf32>
    %62 = tpu.matmul %61, %46, %cst_42 {dimension_numbers = #tpu.dot_dimension_numbers<[1], [0], [0], [1], [0, 0, 1, 1], [], []>} : vector<16x16xf32>, vector<16x256xf32>, vector<16x256xf32> -> vector<16x256xf32>
    %63 = arith.addf %41, %62 : vector<16x256xf32>
    %c0_43 = arith.constant 0 : index
    %c0_44 = arith.constant 0 : index
    %c16 = arith.constant 16 : index
    %64 = vector.load %arg5[%c0_43, %c0_44, %c16] : memref<1x16x290xf32, #tpu.memory_space<vmem>>, vector<1x16x256xf32>
    %65 = vector.shape_cast %64 : vector<1x16x256xf32> to vector<16x256xf32>
    %c0_45 = arith.constant 0 : index
    %c0_46 = arith.constant 0 : index
    %66 = vector.load %arg4[%c0_45, %c0_46] : memref<3x256xf32, #tpu.memory_space<vmem>>, vector<1x256xf32>
    %67 = vector.broadcast %66 : vector<1x256xf32> to vector<16x256xf32>
    %68 = arith.mulf %65, %67 : vector<16x256xf32>
    %c0_47 = arith.constant 0 : index
    %c0_48 = arith.constant 0 : index
    %c3 = arith.constant 3 : index
    %69 = vector.load %arg2[%c0_47, %c0_48, %c3] : memref<1x16x9xf32, #tpu.memory_space<vmem>>, vector<1x16x1xf32>
    %70 = vector.shape_cast %69 : vector<1x16x1xf32> to vector<16x1xf32>
    %c0_49 = arith.constant 0 : index
    %c3_50 = arith.constant 3 : index
    %c0_51 = arith.constant 0 : index
    %71 = vector.load %arg1[%c0_49, %c3_50, %c0_51] : memref<1x9x16xf32, #tpu.memory_space<vmem>>, vector<1x1x16xf32>
    %72 = vector.shape_cast %71 : vector<1x1x16xf32> to vector<1x16xf32>
    %73 = vector.broadcast %70 : vector<16x1xf32> to vector<16x16xf32>
    %74 = vector.broadcast %72 : vector<1x16xf32> to vector<16x16xf32>
    %75 = arith.addf %73, %74 : vector<16x16xf32>
    %76 = arith.negf %75 : vector<16x16xf32>
    %77 = math.exp %76 : vector<16x16xf32>
    %cst_52 = arith.constant 1.000000e+00 : f32
    %78 = vector.broadcast %cst_52 : f32 to vector<16x16xf32>
    %79 = arith.addf %78, %77 : vector<16x16xf32>
    %80 = arith.divf %78, %79 : vector<16x16xf32>
    %c3_53 = arith.constant 3 : index
    %c0_54 = arith.constant 0 : index
    %c0_55 = arith.constant 0 : index
    %81 = vector.load %arg3[%c3_53, %c0_54, %c0_55] : memref<9x16x16xf32, #tpu.memory_space<vmem>>, vector<1x16x16xf32>
    %82 = vector.shape_cast %81 : vector<1x16x16xf32> to vector<16x16xf32>
    %83 = arith.mulf %80, %82 : vector<16x16xf32>
    %cst_56 = arith.constant dense<0.000000e+00> : vector<16x256xf32>
    %84 = tpu.matmul %83, %68, %cst_56 {dimension_numbers = #tpu.dot_dimension_numbers<[1], [0], [0], [1], [0, 0, 1, 1], [], []>} : vector<16x16xf32>, vector<16x256xf32>, vector<16x256xf32> -> vector<16x256xf32>
    %85 = arith.addf %63, %84 : vector<16x256xf32>
    %c0_57 = arith.constant 0 : index
    %c0_58 = arith.constant 0 : index
    %c17 = arith.constant 17 : index
    %86 = vector.load %arg5[%c0_57, %c0_58, %c17] : memref<1x16x290xf32, #tpu.memory_space<vmem>>, vector<1x16x256xf32>
    %87 = vector.shape_cast %86 : vector<1x16x256xf32> to vector<16x256xf32>
    %c0_59 = arith.constant 0 : index
    %c0_60 = arith.constant 0 : index
    %c4 = arith.constant 4 : index
    %88 = vector.load %arg2[%c0_59, %c0_60, %c4] : memref<1x16x9xf32, #tpu.memory_space<vmem>>, vector<1x16x1xf32>
    %89 = vector.shape_cast %88 : vector<1x16x1xf32> to vector<16x1xf32>
    %c0_61 = arith.constant 0 : index
    %c4_62 = arith.constant 4 : index
    %c0_63 = arith.constant 0 : index
    %90 = vector.load %arg1[%c0_61, %c4_62, %c0_63] : memref<1x9x16xf32, #tpu.memory_space<vmem>>, vector<1x1x16xf32>
    %91 = vector.shape_cast %90 : vector<1x1x16xf32> to vector<1x16xf32>
    %92 = vector.broadcast %89 : vector<16x1xf32> to vector<16x16xf32>
    %93 = vector.broadcast %91 : vector<1x16xf32> to vector<16x16xf32>
    %94 = arith.addf %92, %93 : vector<16x16xf32>
    %95 = arith.negf %94 : vector<16x16xf32>
    %96 = math.exp %95 : vector<16x16xf32>
    %cst_64 = arith.constant 1.000000e+00 : f32
    %97 = vector.broadcast %cst_64 : f32 to vector<16x16xf32>
    %98 = arith.addf %97, %96 : vector<16x16xf32>
    %99 = arith.divf %97, %98 : vector<16x16xf32>
    %c4_65 = arith.constant 4 : index
    %c0_66 = arith.constant 0 : index
    %c0_67 = arith.constant 0 : index
    %100 = vector.load %arg3[%c4_65, %c0_66, %c0_67] : memref<9x16x16xf32, #tpu.memory_space<vmem>>, vector<1x16x16xf32>
    %101 = vector.shape_cast %100 : vector<1x16x16xf32> to vector<16x16xf32>
    %102 = arith.mulf %99, %101 : vector<16x16xf32>
    %cst_68 = arith.constant dense<0.000000e+00> : vector<16x256xf32>
    %103 = tpu.matmul %102, %87, %cst_68 {dimension_numbers = #tpu.dot_dimension_numbers<[1], [0], [0], [1], [0, 0, 1, 1], [], []>} : vector<16x16xf32>, vector<16x256xf32>, vector<16x256xf32> -> vector<16x256xf32>
    %104 = arith.addf %85, %103 : vector<16x256xf32>
    %c0_69 = arith.constant 0 : index
    %c0_70 = arith.constant 0 : index
    %c18 = arith.constant 18 : index
    %105 = vector.load %arg5[%c0_69, %c0_70, %c18] : memref<1x16x290xf32, #tpu.memory_space<vmem>>, vector<1x16x256xf32>
    %106 = vector.shape_cast %105 : vector<1x16x256xf32> to vector<16x256xf32>
    %c2_71 = arith.constant 2 : index
    %c0_72 = arith.constant 0 : index
    %107 = vector.load %arg4[%c2_71, %c0_72] : memref<3x256xf32, #tpu.memory_space<vmem>>, vector<1x256xf32>
    %108 = vector.broadcast %107 : vector<1x256xf32> to vector<16x256xf32>
    %109 = arith.mulf %106, %108 : vector<16x256xf32>
    %c0_73 = arith.constant 0 : index
    %c0_74 = arith.constant 0 : index
    %c5 = arith.constant 5 : index
    %110 = vector.load %arg2[%c0_73, %c0_74, %c5] : memref<1x16x9xf32, #tpu.memory_space<vmem>>, vector<1x16x1xf32>
    %111 = vector.shape_cast %110 : vector<1x16x1xf32> to vector<16x1xf32>
    %c0_75 = arith.constant 0 : index
    %c5_76 = arith.constant 5 : index
    %c0_77 = arith.constant 0 : index
    %112 = vector.load %arg1[%c0_75, %c5_76, %c0_77] : memref<1x9x16xf32, #tpu.memory_space<vmem>>, vector<1x1x16xf32>
    %113 = vector.shape_cast %112 : vector<1x1x16xf32> to vector<1x16xf32>
    %114 = vector.broadcast %111 : vector<16x1xf32> to vector<16x16xf32>
    %115 = vector.broadcast %113 : vector<1x16xf32> to vector<16x16xf32>
    %116 = arith.addf %114, %115 : vector<16x16xf32>
    %117 = arith.negf %116 : vector<16x16xf32>
    %118 = math.exp %117 : vector<16x16xf32>
    %cst_78 = arith.constant 1.000000e+00 : f32
    %119 = vector.broadcast %cst_78 : f32 to vector<16x16xf32>
    %120 = arith.addf %119, %118 : vector<16x16xf32>
    %121 = arith.divf %119, %120 : vector<16x16xf32>
    %c5_79 = arith.constant 5 : index
    %c0_80 = arith.constant 0 : index
    %c0_81 = arith.constant 0 : index
    %122 = vector.load %arg3[%c5_79, %c0_80, %c0_81] : memref<9x16x16xf32, #tpu.memory_space<vmem>>, vector<1x16x16xf32>
    %123 = vector.shape_cast %122 : vector<1x16x16xf32> to vector<16x16xf32>
    %124 = arith.mulf %121, %123 : vector<16x16xf32>
    %cst_82 = arith.constant dense<0.000000e+00> : vector<16x256xf32>
    %125 = tpu.matmul %124, %109, %cst_82 {dimension_numbers = #tpu.dot_dimension_numbers<[1], [0], [0], [1], [0, 0, 1, 1], [], []>} : vector<16x16xf32>, vector<16x256xf32>, vector<16x256xf32> -> vector<16x256xf32>
    %126 = arith.addf %104, %125 : vector<16x256xf32>
    %c0_83 = arith.constant 0 : index
    %c0_84 = arith.constant 0 : index
    %c32 = arith.constant 32 : index
    %127 = vector.load %arg5[%c0_83, %c0_84, %c32] : memref<1x16x290xf32, #tpu.memory_space<vmem>>, vector<1x16x256xf32>
    %128 = vector.shape_cast %127 : vector<1x16x256xf32> to vector<16x256xf32>
    %c0_85 = arith.constant 0 : index
    %c0_86 = arith.constant 0 : index
    %129 = vector.load %arg4[%c0_85, %c0_86] : memref<3x256xf32, #tpu.memory_space<vmem>>, vector<1x256xf32>
    %130 = vector.broadcast %129 : vector<1x256xf32> to vector<16x256xf32>
    %131 = arith.mulf %128, %130 : vector<16x256xf32>
    %c0_87 = arith.constant 0 : index
    %c0_88 = arith.constant 0 : index
    %c6 = arith.constant 6 : index
    %132 = vector.load %arg2[%c0_87, %c0_88, %c6] : memref<1x16x9xf32, #tpu.memory_space<vmem>>, vector<1x16x1xf32>
    %133 = vector.shape_cast %132 : vector<1x16x1xf32> to vector<16x1xf32>
    %c0_89 = arith.constant 0 : index
    %c6_90 = arith.constant 6 : index
    %c0_91 = arith.constant 0 : index
    %134 = vector.load %arg1[%c0_89, %c6_90, %c0_91] : memref<1x9x16xf32, #tpu.memory_space<vmem>>, vector<1x1x16xf32>
    %135 = vector.shape_cast %134 : vector<1x1x16xf32> to vector<1x16xf32>
    %136 = vector.broadcast %133 : vector<16x1xf32> to vector<16x16xf32>
    %137 = vector.broadcast %135 : vector<1x16xf32> to vector<16x16xf32>
    %138 = arith.addf %136, %137 : vector<16x16xf32>
    %139 = arith.negf %138 : vector<16x16xf32>
    %140 = math.exp %139 : vector<16x16xf32>
    %cst_92 = arith.constant 1.000000e+00 : f32
    %141 = vector.broadcast %cst_92 : f32 to vector<16x16xf32>
    %142 = arith.addf %141, %140 : vector<16x16xf32>
    %143 = arith.divf %141, %142 : vector<16x16xf32>
    %c6_93 = arith.constant 6 : index
    %c0_94 = arith.constant 0 : index
    %c0_95 = arith.constant 0 : index
    %144 = vector.load %arg3[%c6_93, %c0_94, %c0_95] : memref<9x16x16xf32, #tpu.memory_space<vmem>>, vector<1x16x16xf32>
    %145 = vector.shape_cast %144 : vector<1x16x16xf32> to vector<16x16xf32>
    %146 = arith.mulf %143, %145 : vector<16x16xf32>
    %cst_96 = arith.constant dense<0.000000e+00> : vector<16x256xf32>
    %147 = tpu.matmul %146, %131, %cst_96 {dimension_numbers = #tpu.dot_dimension_numbers<[1], [0], [0], [1], [0, 0, 1, 1], [], []>} : vector<16x16xf32>, vector<16x256xf32>, vector<16x256xf32> -> vector<16x256xf32>
    %148 = arith.addf %126, %147 : vector<16x256xf32>
    %c0_97 = arith.constant 0 : index
    %c0_98 = arith.constant 0 : index
    %c33 = arith.constant 33 : index
    %149 = vector.load %arg5[%c0_97, %c0_98, %c33] : memref<1x16x290xf32, #tpu.memory_space<vmem>>, vector<1x16x256xf32>
    %150 = vector.shape_cast %149 : vector<1x16x256xf32> to vector<16x256xf32>
    %c0_99 = arith.constant 0 : index
    %c0_100 = arith.constant 0 : index
    %c7 = arith.constant 7 : index
    %151 = vector.load %arg2[%c0_99, %c0_100, %c7] : memref<1x16x9xf32, #tpu.memory_space<vmem>>, vector<1x16x1xf32>
    %152 = vector.shape_cast %151 : vector<1x16x1xf32> to vector<16x1xf32>
    %c0_101 = arith.constant 0 : index
    %c7_102 = arith.constant 7 : index
    %c0_103 = arith.constant 0 : index
    %153 = vector.load %arg1[%c0_101, %c7_102, %c0_103] : memref<1x9x16xf32, #tpu.memory_space<vmem>>, vector<1x1x16xf32>
    %154 = vector.shape_cast %153 : vector<1x1x16xf32> to vector<1x16xf32>
    %155 = vector.broadcast %152 : vector<16x1xf32> to vector<16x16xf32>
    %156 = vector.broadcast %154 : vector<1x16xf32> to vector<16x16xf32>
    %157 = arith.addf %155, %156 : vector<16x16xf32>
    %158 = arith.negf %157 : vector<16x16xf32>
    %159 = math.exp %158 : vector<16x16xf32>
    %cst_104 = arith.constant 1.000000e+00 : f32
    %160 = vector.broadcast %cst_104 : f32 to vector<16x16xf32>
    %161 = arith.addf %160, %159 : vector<16x16xf32>
    %162 = arith.divf %160, %161 : vector<16x16xf32>
    %c7_105 = arith.constant 7 : index
    %c0_106 = arith.constant 0 : index
    %c0_107 = arith.constant 0 : index
    %163 = vector.load %arg3[%c7_105, %c0_106, %c0_107] : memref<9x16x16xf32, #tpu.memory_space<vmem>>, vector<1x16x16xf32>
    %164 = vector.shape_cast %163 : vector<1x16x16xf32> to vector<16x16xf32>
    %165 = arith.mulf %162, %164 : vector<16x16xf32>
    %cst_108 = arith.constant dense<0.000000e+00> : vector<16x256xf32>
    %166 = tpu.matmul %165, %150, %cst_108 {dimension_numbers = #tpu.dot_dimension_numbers<[1], [0], [0], [1], [0, 0, 1, 1], [], []>} : vector<16x16xf32>, vector<16x256xf32>, vector<16x256xf32> -> vector<16x256xf32>
    %167 = arith.addf %148, %166 : vector<16x256xf32>
    %c0_109 = arith.constant 0 : index
    %c0_110 = arith.constant 0 : index
    %c34 = arith.constant 34 : index
    %168 = vector.load %arg5[%c0_109, %c0_110, %c34] : memref<1x16x290xf32, #tpu.memory_space<vmem>>, vector<1x16x256xf32>
    %169 = vector.shape_cast %168 : vector<1x16x256xf32> to vector<16x256xf32>
    %c2_111 = arith.constant 2 : index
    %c0_112 = arith.constant 0 : index
    %170 = vector.load %arg4[%c2_111, %c0_112] : memref<3x256xf32, #tpu.memory_space<vmem>>, vector<1x256xf32>
    %171 = vector.broadcast %170 : vector<1x256xf32> to vector<16x256xf32>
    %172 = arith.mulf %169, %171 : vector<16x256xf32>
    %c0_113 = arith.constant 0 : index
    %c0_114 = arith.constant 0 : index
    %c8 = arith.constant 8 : index
    %173 = vector.load %arg2[%c0_113, %c0_114, %c8] : memref<1x16x9xf32, #tpu.memory_space<vmem>>, vector<1x16x1xf32>
    %174 = vector.shape_cast %173 : vector<1x16x1xf32> to vector<16x1xf32>
    %c0_115 = arith.constant 0 : index
    %c8_116 = arith.constant 8 : index
    %c0_117 = arith.constant 0 : index
    %175 = vector.load %arg1[%c0_115, %c8_116, %c0_117] : memref<1x9x16xf32, #tpu.memory_space<vmem>>, vector<1x1x16xf32>
    %176 = vector.shape_cast %175 : vector<1x1x16xf32> to vector<1x16xf32>
    %177 = vector.broadcast %174 : vector<16x1xf32> to vector<16x16xf32>
    %178 = vector.broadcast %176 : vector<1x16xf32> to vector<16x16xf32>
    %179 = arith.addf %177, %178 : vector<16x16xf32>
    %180 = arith.negf %179 : vector<16x16xf32>
    %181 = math.exp %180 : vector<16x16xf32>
    %cst_118 = arith.constant 1.000000e+00 : f32
    %182 = vector.broadcast %cst_118 : f32 to vector<16x16xf32>
    %183 = arith.addf %182, %181 : vector<16x16xf32>
    %184 = arith.divf %182, %183 : vector<16x16xf32>
    %c8_119 = arith.constant 8 : index
    %c0_120 = arith.constant 0 : index
    %c0_121 = arith.constant 0 : index
    %185 = vector.load %arg3[%c8_119, %c0_120, %c0_121] : memref<9x16x16xf32, #tpu.memory_space<vmem>>, vector<1x16x16xf32>
    %186 = vector.shape_cast %185 : vector<1x16x16xf32> to vector<16x16xf32>
    %187 = arith.mulf %184, %186 : vector<16x16xf32>
    %cst_122 = arith.constant dense<0.000000e+00> : vector<16x256xf32>
    %188 = tpu.matmul %187, %172, %cst_122 {dimension_numbers = #tpu.dot_dimension_numbers<[1], [0], [0], [1], [0, 0, 1, 1], [], []>} : vector<16x16xf32>, vector<16x256xf32>, vector<16x256xf32> -> vector<16x256xf32>
    %189 = arith.addf %167, %188 : vector<16x256xf32>
    %cst_123 = arith.constant 0.000000e+00 : f32
    %190 = vector.broadcast %cst_123 : f32 to vector<16x256xf32>
    %191 = arith.maximumf %189, %190 : vector<16x256xf32>
    %c0_124 = arith.constant 0 : index
    %c0_125 = arith.constant 0 : index
    %c0_126 = arith.constant 0 : index
    %192 = vector.load %arg6[%c0_124, %c0_125, %c0_126] : memref<1x16x256xf32, #tpu.memory_space<vmem>>, vector<1x16x256xf32>
    %193 = vector.shape_cast %192 : vector<1x16x256xf32> to vector<16x256xf32>
    %194 = vector.shape_cast %191 : vector<16x256xf32> to vector<1x16x256xf32>
    tpu.vector_store %arg6[%c0_124, %c0_125, %c0_126], %194 {strides = array<i32>} : memref<1x16x256xf32, #tpu.memory_space<vmem>>, vector<1x16x256xf32>,
    return
  }
  func.func @transform_0(%arg0: i32) -> (i32, i32, i32) {
    %c0_i32 = arith.constant 0 : i32
    %c0_i32_0 = arith.constant 0 : i32
    %c0_i32_1 = arith.constant 0 : i32
    return %arg0, %c0_i32, %c0_i32_0 : i32, i32, i32
  }
  func.func @transform_1(%arg0: i32) -> (i32, i32, i32) {
    %c0_i32 = arith.constant 0 : i32
    %c0_i32_0 = arith.constant 0 : i32
    %c0_i32_1 = arith.constant 0 : i32
    return %arg0, %c0_i32, %c0_i32_0 : i32, i32, i32
  }
  func.func @transform_2(%arg0: i32) -> (i32, i32, i32) {
    %c0_i32 = arith.constant 0 : i32
    %c0_i32_0 = arith.constant 0 : i32
    %c0_i32_1 = arith.constant 0 : i32
    %c0_i32_2 = arith.constant 0 : i32
    return %c0_i32, %c0_i32_0, %c0_i32_1 : i32, i32, i32
  }
  func.func @transform_3(%arg0: i32) -> (i32, i32) {
    %c0_i32 = arith.constant 0 : i32
    %c0_i32_0 = arith.constant 0 : i32
    %c0_i32_1 = arith.constant 0 : i32
    return %c0_i32, %c0_i32_0 : i32, i32
  }
  func.func @transform_4(%arg0: i32) -> (i32, i32, i32) {
    %c0_i32 = arith.constant 0 : i32
    %c0_i32_0 = arith.constant 0 : i32
    %c0_i32_1 = arith.constant 0 : i32
    return %arg0, %c0_i32, %c0_i32_0 : i32, i32, i32
  }
  func.func @transform_5(%arg0: i32) -> (i32, i32, i32) {
    %c0_i32 = arith.constant 0 : i32
    %c0_i32_0 = arith.constant 0 : i32
    %c0_i32_1 = arith.constant 0 : i32
    return %arg0, %c0_i32, %c0_i32_0 : i32, i32, i32
  }
}

module attributes {stable_mosaic.version = 11 : i64} {
  func.func @kernel(%arg0: i32, %arg1: memref<1x9x16xf32, #tpu.memory_space<vmem>>, %arg2: memref<1x16x9xf32, #tpu.memory_space<vmem>>, %arg3: memref<9x16x16xf32, #tpu.memory_space<vmem>>, %arg4: memref<3x256xf32, #tpu.memory_space<vmem>>, %arg5: memref<1x16x290xf32, #tpu.memory_space<vmem>>, %arg6: memref<1x16x256xf32, #tpu.memory_space<vmem>>, %arg7: memref<1x16x256xf32, #tpu.memory_space<vmem>>, %arg8: memref<1x16x256xf32, #tpu.memory_space<vmem>>) attributes {dimension_semantics = [#tpu.dimension_semantics<parallel>], iteration_bounds = array<i64: 2>, scalar_prefetch = 0 : i64, scratch_operands = 0 : i64, tpu.core_type = #tpu.core_type<tc>, window_params = [{transform_indices = @transform_0, window_bounds = array<i64: 1, 9, 16>}, {transform_indices = @transform_1, window_bounds = array<i64: 1, 16, 9>}, {pipeline_mode = #tpu.pipeline_mode<synchronous>, transform_indices = @transform_2, window_bounds = array<i64: 9, 16, 16>}, {pipeline_mode = #tpu.pipeline_mode<synchronous>, transform_indices = @transform_3, window_bounds = array<i64: 3, 256>}, {transform_indices = @transform_4, window_bounds = array<i64: 1, 16, 290>}, {transform_indices = @transform_5, window_bounds = array<i64: 1, 16, 256>}, {transform_indices = @transform_6, window_bounds = array<i64: 1, 16, 256>}, {transform_indices = @transform_7, window_bounds = array<i64: 1, 16, 256>}]} {
    %cst = arith.constant 0.000000e+00 : f32
    %0 = vector.broadcast %cst : f32 to vector<16x256xf32>
    %c0 = arith.constant 0 : index
    %c0_0 = arith.constant 0 : index
    %c0_1 = arith.constant 0 : index
    %1 = vector.load %arg5[%c0, %c0_0, %c0_1] : memref<1x16x290xf32, #tpu.memory_space<vmem>>, vector<1x16x256xf32>
    %2 = vector.shape_cast %1 : vector<1x16x256xf32> to vector<16x256xf32>
    %c0_2 = arith.constant 0 : index
    %c0_3 = arith.constant 0 : index
    %3 = vector.load %arg4[%c0_2, %c0_3] : memref<3x256xf32, #tpu.memory_space<vmem>>, vector<1x256xf32>
    %4 = vector.broadcast %3 : vector<1x256xf32> to vector<16x256xf32>
    %5 = arith.mulf %2, %4 : vector<16x256xf32>
    %c0_4 = arith.constant 0 : index
    %c0_5 = arith.constant 0 : index
    %c0_6 = arith.constant 0 : index
    %6 = vector.load %arg2[%c0_4, %c0_5, %c0_6] : memref<1x16x9xf32, #tpu.memory_space<vmem>>, vector<1x16x1xf32>
    %7 = vector.shape_cast %6 : vector<1x16x1xf32> to vector<16x1xf32>
    %c0_7 = arith.constant 0 : index
    %c0_8 = arith.constant 0 : index
    %c0_9 = arith.constant 0 : index
    %8 = vector.load %arg1[%c0_7, %c0_8, %c0_9] : memref<1x9x16xf32, #tpu.memory_space<vmem>>, vector<1x1x16xf32>
    %9 = vector.shape_cast %8 : vector<1x1x16xf32> to vector<1x16xf32>
    %10 = vector.broadcast %7 : vector<16x1xf32> to vector<16x16xf32>
    %11 = vector.broadcast %9 : vector<1x16xf32> to vector<16x16xf32>
    %12 = arith.addf %10, %11 : vector<16x16xf32>
    %13 = arith.negf %12 : vector<16x16xf32>
    %14 = math.exp %13 : vector<16x16xf32>
    %cst_10 = arith.constant 1.000000e+00 : f32
    %15 = vector.broadcast %cst_10 : f32 to vector<16x16xf32>
    %16 = arith.addf %15, %14 : vector<16x16xf32>
    %17 = arith.divf %15, %16 : vector<16x16xf32>
    %c0_11 = arith.constant 0 : index
    %c0_12 = arith.constant 0 : index
    %c0_13 = arith.constant 0 : index
    %18 = vector.load %arg3[%c0_11, %c0_12, %c0_13] : memref<9x16x16xf32, #tpu.memory_space<vmem>>, vector<1x16x16xf32>
    %19 = vector.shape_cast %18 : vector<1x16x16xf32> to vector<16x16xf32>
    %20 = arith.mulf %17, %19 : vector<16x16xf32>
    %cst_14 = arith.constant dense<0.000000e+00> : vector<16x256xf32>
    %21 = tpu.matmul %20, %5, %cst_14 {dimension_numbers = #tpu.dot_dimension_numbers<[1], [0], [0], [1], [0, 0, 1, 1], [], []>} : vector<16x16xf32>, vector<16x256xf32>, vector<16x256xf32> -> vector<16x256xf32>
    %22 = arith.addf %0, %21 : vector<16x256xf32>
    %c0_15 = arith.constant 0 : index
    %c0_16 = arith.constant 0 : index
    %c1 = arith.constant 1 : index
    %23 = vector.load %arg5[%c0_15, %c0_16, %c1] : memref<1x16x290xf32, #tpu.memory_space<vmem>>, vector<1x16x256xf32>
    %24 = vector.shape_cast %23 : vector<1x16x256xf32> to vector<16x256xf32>
    %c0_17 = arith.constant 0 : index
    %c0_18 = arith.constant 0 : index
    %c1_19 = arith.constant 1 : index
    %25 = vector.load %arg2[%c0_17, %c0_18, %c1_19] : memref<1x16x9xf32, #tpu.memory_space<vmem>>, vector<1x16x1xf32>
    %26 = vector.shape_cast %25 : vector<1x16x1xf32> to vector<16x1xf32>
    %c0_20 = arith.constant 0 : index
    %c1_21 = arith.constant 1 : index
    %c0_22 = arith.constant 0 : index
    %27 = vector.load %arg1[%c0_20, %c1_21, %c0_22] : memref<1x9x16xf32, #tpu.memory_space<vmem>>, vector<1x1x16xf32>
    %28 = vector.shape_cast %27 : vector<1x1x16xf32> to vector<1x16xf32>
    %29 = vector.broadcast %26 : vector<16x1xf32> to vector<16x16xf32>
    %30 = vector.broadcast %28 : vector<1x16xf32> to vector<16x16xf32>
    %31 = arith.addf %29, %30 : vector<16x16xf32>
    %32 = arith.negf %31 : vector<16x16xf32>
    %33 = math.exp %32 : vector<16x16xf32>
    %cst_23 = arith.constant 1.000000e+00 : f32
    %34 = vector.broadcast %cst_23 : f32 to vector<16x16xf32>
    %35 = arith.addf %34, %33 : vector<16x16xf32>
    %36 = arith.divf %34, %35 : vector<16x16xf32>
    %c1_24 = arith.constant 1 : index
    %c0_25 = arith.constant 0 : index
    %c0_26 = arith.constant 0 : index
    %37 = vector.load %arg3[%c1_24, %c0_25, %c0_26] : memref<9x16x16xf32, #tpu.memory_space<vmem>>, vector<1x16x16xf32>
    %38 = vector.shape_cast %37 : vector<1x16x16xf32> to vector<16x16xf32>
    %39 = arith.mulf %36, %38 : vector<16x16xf32>
    %cst_27 = arith.constant dense<0.000000e+00> : vector<16x256xf32>
    %40 = tpu.matmul %39, %24, %cst_27 {dimension_numbers = #tpu.dot_dimension_numbers<[1], [0], [0], [1], [0, 0, 1, 1], [], []>} : vector<16x16xf32>, vector<16x256xf32>, vector<16x256xf32> -> vector<16x256xf32>
    %41 = arith.addf %22, %40 : vector<16x256xf32>
    %c0_28 = arith.constant 0 : index
    %c0_29 = arith.constant 0 : index
    %c2 = arith.constant 2 : index
    %42 = vector.load %arg5[%c0_28, %c0_29, %c2] : memref<1x16x290xf32, #tpu.memory_space<vmem>>, vector<1x16x256xf32>
    %43 = vector.shape_cast %42 : vector<1x16x256xf32> to vector<16x256xf32>
    %c2_30 = arith.constant 2 : index
    %c0_31 = arith.constant 0 : index
    %44 = vector.load %arg4[%c2_30, %c0_31] : memref<3x256xf32, #tpu.memory_space<vmem>>, vector<1x256xf32>
    %45 = vector.broadcast %44 : vector<1x256xf32> to vector<16x256xf32>
    %46 = arith.mulf %43, %45 : vector<16x256xf32>
    %c0_32 = arith.constant 0 : index
    %c0_33 = arith.constant 0 : index
    %c2_34 = arith.constant 2 : index
    %47 = vector.load %arg2[%c0_32, %c0_33, %c2_34] : memref<1x16x9xf32, #tpu.memory_space<vmem>>, vector<1x16x1xf32>
    %48 = vector.shape_cast %47 : vector<1x16x1xf32> to vector<16x1xf32>
    %c0_35 = arith.constant 0 : index
    %c2_36 = arith.constant 2 : index
    %c0_37 = arith.constant 0 : index
    %49 = vector.load %arg1[%c0_35, %c2_36, %c0_37] : memref<1x9x16xf32, #tpu.memory_space<vmem>>, vector<1x1x16xf32>
    %50 = vector.shape_cast %49 : vector<1x1x16xf32> to vector<1x16xf32>
    %51 = vector.broadcast %48 : vector<16x1xf32> to vector<16x16xf32>
    %52 = vector.broadcast %50 : vector<1x16xf32> to vector<16x16xf32>
    %53 = arith.addf %51, %52 : vector<16x16xf32>
    %54 = arith.negf %53 : vector<16x16xf32>
    %55 = math.exp %54 : vector<16x16xf32>
    %cst_38 = arith.constant 1.000000e+00 : f32
    %56 = vector.broadcast %cst_38 : f32 to vector<16x16xf32>
    %57 = arith.addf %56, %55 : vector<16x16xf32>
    %58 = arith.divf %56, %57 : vector<16x16xf32>
    %c2_39 = arith.constant 2 : index
    %c0_40 = arith.constant 0 : index
    %c0_41 = arith.constant 0 : index
    %59 = vector.load %arg3[%c2_39, %c0_40, %c0_41] : memref<9x16x16xf32, #tpu.memory_space<vmem>>, vector<1x16x16xf32>
    %60 = vector.shape_cast %59 : vector<1x16x16xf32> to vector<16x16xf32>
    %61 = arith.mulf %58, %60 : vector<16x16xf32>
    %cst_42 = arith.constant dense<0.000000e+00> : vector<16x256xf32>
    %62 = tpu.matmul %61, %46, %cst_42 {dimension_numbers = #tpu.dot_dimension_numbers<[1], [0], [0], [1], [0, 0, 1, 1], [], []>} : vector<16x16xf32>, vector<16x256xf32>, vector<16x256xf32> -> vector<16x256xf32>
    %63 = arith.addf %41, %62 : vector<16x256xf32>
    %c0_43 = arith.constant 0 : index
    %c0_44 = arith.constant 0 : index
    %c16 = arith.constant 16 : index
    %64 = vector.load %arg5[%c0_43, %c0_44, %c16] : memref<1x16x290xf32, #tpu.memory_space<vmem>>, vector<1x16x256xf32>
    %65 = vector.shape_cast %64 : vector<1x16x256xf32> to vector<16x256xf32>
    %c0_45 = arith.constant 0 : index
    %c0_46 = arith.constant 0 : index
    %66 = vector.load %arg4[%c0_45, %c0_46] : memref<3x256xf32, #tpu.memory_space<vmem>>, vector<1x256xf32>
    %67 = vector.broadcast %66 : vector<1x256xf32> to vector<16x256xf32>
    %68 = arith.mulf %65, %67 : vector<16x256xf32>
    %c0_47 = arith.constant 0 : index
    %c0_48 = arith.constant 0 : index
    %c3 = arith.constant 3 : index
    %69 = vector.load %arg2[%c0_47, %c0_48, %c3] : memref<1x16x9xf32, #tpu.memory_space<vmem>>, vector<1x16x1xf32>
    %70 = vector.shape_cast %69 : vector<1x16x1xf32> to vector<16x1xf32>
    %c0_49 = arith.constant 0 : index
    %c3_50 = arith.constant 3 : index
    %c0_51 = arith.constant 0 : index
    %71 = vector.load %arg1[%c0_49, %c3_50, %c0_51] : memref<1x9x16xf32, #tpu.memory_space<vmem>>, vector<1x1x16xf32>
    %72 = vector.shape_cast %71 : vector<1x1x16xf32> to vector<1x16xf32>
    %73 = vector.broadcast %70 : vector<16x1xf32> to vector<16x16xf32>
    %74 = vector.broadcast %72 : vector<1x16xf32> to vector<16x16xf32>
    %75 = arith.addf %73, %74 : vector<16x16xf32>
    %76 = arith.negf %75 : vector<16x16xf32>
    %77 = math.exp %76 : vector<16x16xf32>
    %cst_52 = arith.constant 1.000000e+00 : f32
    %78 = vector.broadcast %cst_52 : f32 to vector<16x16xf32>
    %79 = arith.addf %78, %77 : vector<16x16xf32>
    %80 = arith.divf %78, %79 : vector<16x16xf32>
    %c3_53 = arith.constant 3 : index
    %c0_54 = arith.constant 0 : index
    %c0_55 = arith.constant 0 : index
    %81 = vector.load %arg3[%c3_53, %c0_54, %c0_55] : memref<9x16x16xf32, #tpu.memory_space<vmem>>, vector<1x16x16xf32>
    %82 = vector.shape_cast %81 : vector<1x16x16xf32> to vector<16x16xf32>
    %83 = arith.mulf %80, %82 : vector<16x16xf32>
    %cst_56 = arith.constant dense<0.000000e+00> : vector<16x256xf32>
    %84 = tpu.matmul %83, %68, %cst_56 {dimension_numbers = #tpu.dot_dimension_numbers<[1], [0], [0], [1], [0, 0, 1, 1], [], []>} : vector<16x16xf32>, vector<16x256xf32>, vector<16x256xf32> -> vector<16x256xf32>
    %85 = arith.addf %63, %84 : vector<16x256xf32>
    %c0_57 = arith.constant 0 : index
    %c0_58 = arith.constant 0 : index
    %c17 = arith.constant 17 : index
    %86 = vector.load %arg5[%c0_57, %c0_58, %c17] : memref<1x16x290xf32, #tpu.memory_space<vmem>>, vector<1x16x256xf32>
    %87 = vector.shape_cast %86 : vector<1x16x256xf32> to vector<16x256xf32>
    %c0_59 = arith.constant 0 : index
    %c0_60 = arith.constant 0 : index
    %c4 = arith.constant 4 : index
    %88 = vector.load %arg2[%c0_59, %c0_60, %c4] : memref<1x16x9xf32, #tpu.memory_space<vmem>>, vector<1x16x1xf32>
    %89 = vector.shape_cast %88 : vector<1x16x1xf32> to vector<16x1xf32>
    %c0_61 = arith.constant 0 : index
    %c4_62 = arith.constant 4 : index
    %c0_63 = arith.constant 0 : index
    %90 = vector.load %arg1[%c0_61, %c4_62, %c0_63] : memref<1x9x16xf32, #tpu.memory_space<vmem>>, vector<1x1x16xf32>
    %91 = vector.shape_cast %90 : vector<1x1x16xf32> to vector<1x16xf32>
    %92 = vector.broadcast %89 : vector<16x1xf32> to vector<16x16xf32>
    %93 = vector.broadcast %91 : vector<1x16xf32> to vector<16x16xf32>
    %94 = arith.addf %92, %93 : vector<16x16xf32>
    %95 = arith.negf %94 : vector<16x16xf32>
    %96 = math.exp %95 : vector<16x16xf32>
    %cst_64 = arith.constant 1.000000e+00 : f32
    %97 = vector.broadcast %cst_64 : f32 to vector<16x16xf32>
    %98 = arith.addf %97, %96 : vector<16x16xf32>
    %99 = arith.divf %97, %98 : vector<16x16xf32>
    %c4_65 = arith.constant 4 : index
    %c0_66 = arith.constant 0 : index
    %c0_67 = arith.constant 0 : index
    %100 = vector.load %arg3[%c4_65, %c0_66, %c0_67] : memref<9x16x16xf32, #tpu.memory_space<vmem>>, vector<1x16x16xf32>
    %101 = vector.shape_cast %100 : vector<1x16x16xf32> to vector<16x16xf32>
    %102 = arith.mulf %99, %101 : vector<16x16xf32>
    %cst_68 = arith.constant dense<0.000000e+00> : vector<16x256xf32>
    %103 = tpu.matmul %102, %87, %cst_68 {dimension_numbers = #tpu.dot_dimension_numbers<[1], [0], [0], [1], [0, 0, 1, 1], [], []>} : vector<16x16xf32>, vector<16x256xf32>, vector<16x256xf32> -> vector<16x256xf32>
    %104 = arith.addf %85, %103 : vector<16x256xf32>
    %c0_69 = arith.constant 0 : index
    %c0_70 = arith.constant 0 : index
    %c18 = arith.constant 18 : index
    %105 = vector.load %arg5[%c0_69, %c0_70, %c18] : memref<1x16x290xf32, #tpu.memory_space<vmem>>, vector<1x16x256xf32>
    %106 = vector.shape_cast %105 : vector<1x16x256xf32> to vector<16x256xf32>
    %c2_71 = arith.constant 2 : index
    %c0_72 = arith.constant 0 : index
    %107 = vector.load %arg4[%c2_71, %c0_72] : memref<3x256xf32, #tpu.memory_space<vmem>>, vector<1x256xf32>
    %108 = vector.broadcast %107 : vector<1x256xf32> to vector<16x256xf32>
    %109 = arith.mulf %106, %108 : vector<16x256xf32>
    %c0_73 = arith.constant 0 : index
    %c0_74 = arith.constant 0 : index
    %c5 = arith.constant 5 : index
    %110 = vector.load %arg2[%c0_73, %c0_74, %c5] : memref<1x16x9xf32, #tpu.memory_space<vmem>>, vector<1x16x1xf32>
    %111 = vector.shape_cast %110 : vector<1x16x1xf32> to vector<16x1xf32>
    %c0_75 = arith.constant 0 : index
    %c5_76 = arith.constant 5 : index
    %c0_77 = arith.constant 0 : index
    %112 = vector.load %arg1[%c0_75, %c5_76, %c0_77] : memref<1x9x16xf32, #tpu.memory_space<vmem>>, vector<1x1x16xf32>
    %113 = vector.shape_cast %112 : vector<1x1x16xf32> to vector<1x16xf32>
    %114 = vector.broadcast %111 : vector<16x1xf32> to vector<16x16xf32>
    %115 = vector.broadcast %113 : vector<1x16xf32> to vector<16x16xf32>
    %116 = arith.addf %114, %115 : vector<16x16xf32>
    %117 = arith.negf %116 : vector<16x16xf32>
    %118 = math.exp %117 : vector<16x16xf32>
    %cst_78 = arith.constant 1.000000e+00 : f32
    %119 = vector.broadcast %cst_78 : f32 to vector<16x16xf32>
    %120 = arith.addf %119, %118 : vector<16x16xf32>
    %121 = arith.divf %119, %120 : vector<16x16xf32>
    %c5_79 = arith.constant 5 : index
    %c0_80 = arith.constant 0 : index
    %c0_81 = arith.constant 0 : index
    %122 = vector.load %arg3[%c5_79, %c0_80, %c0_81] : memref<9x16x16xf32, #tpu.memory_space<vmem>>, vector<1x16x16xf32>
    %123 = vector.shape_cast %122 : vector<1x16x16xf32> to vector<16x16xf32>
    %124 = arith.mulf %121, %123 : vector<16x16xf32>
    %cst_82 = arith.constant dense<0.000000e+00> : vector<16x256xf32>
    %125 = tpu.matmul %124, %109, %cst_82 {dimension_numbers = #tpu.dot_dimension_numbers<[1], [0], [0], [1], [0, 0, 1, 1], [], []>} : vector<16x16xf32>, vector<16x256xf32>, vector<16x256xf32> -> vector<16x256xf32>
    %126 = arith.addf %104, %125 : vector<16x256xf32>
    %c0_83 = arith.constant 0 : index
    %c0_84 = arith.constant 0 : index
    %c32 = arith.constant 32 : index
    %127 = vector.load %arg5[%c0_83, %c0_84, %c32] : memref<1x16x290xf32, #tpu.memory_space<vmem>>, vector<1x16x256xf32>
    %128 = vector.shape_cast %127 : vector<1x16x256xf32> to vector<16x256xf32>
    %c0_85 = arith.constant 0 : index
    %c0_86 = arith.constant 0 : index
    %129 = vector.load %arg4[%c0_85, %c0_86] : memref<3x256xf32, #tpu.memory_space<vmem>>, vector<1x256xf32>
    %130 = vector.broadcast %129 : vector<1x256xf32> to vector<16x256xf32>
    %131 = arith.mulf %128, %130 : vector<16x256xf32>
    %c0_87 = arith.constant 0 : index
    %c0_88 = arith.constant 0 : index
    %c6 = arith.constant 6 : index
    %132 = vector.load %arg2[%c0_87, %c0_88, %c6] : memref<1x16x9xf32, #tpu.memory_space<vmem>>, vector<1x16x1xf32>
    %133 = vector.shape_cast %132 : vector<1x16x1xf32> to vector<16x1xf32>
    %c0_89 = arith.constant 0 : index
    %c6_90 = arith.constant 6 : index
    %c0_91 = arith.constant 0 : index
    %134 = vector.load %arg1[%c0_89, %c6_90, %c0_91] : memref<1x9x16xf32, #tpu.memory_space<vmem>>, vector<1x1x16xf32>
    %135 = vector.shape_cast %134 : vector<1x1x16xf32> to vector<1x16xf32>
    %136 = vector.broadcast %133 : vector<16x1xf32> to vector<16x16xf32>
    %137 = vector.broadcast %135 : vector<1x16xf32> to vector<16x16xf32>
    %138 = arith.addf %136, %137 : vector<16x16xf32>
    %139 = arith.negf %138 : vector<16x16xf32>
    %140 = math.exp %139 : vector<16x16xf32>
    %cst_92 = arith.constant 1.000000e+00 : f32
    %141 = vector.broadcast %cst_92 : f32 to vector<16x16xf32>
    %142 = arith.addf %141, %140 : vector<16x16xf32>
    %143 = arith.divf %141, %142 : vector<16x16xf32>
    %c6_93 = arith.constant 6 : index
    %c0_94 = arith.constant 0 : index
    %c0_95 = arith.constant 0 : index
    %144 = vector.load %arg3[%c6_93, %c0_94, %c0_95] : memref<9x16x16xf32, #tpu.memory_space<vmem>>, vector<1x16x16xf32>
    %145 = vector.shape_cast %144 : vector<1x16x16xf32> to vector<16x16xf32>
    %146 = arith.mulf %143, %145 : vector<16x16xf32>
    %cst_96 = arith.constant dense<0.000000e+00> : vector<16x256xf32>
    %147 = tpu.matmul %146, %131, %cst_96 {dimension_numbers = #tpu.dot_dimension_numbers<[1], [0], [0], [1], [0, 0, 1, 1], [], []>} : vector<16x16xf32>, vector<16x256xf32>, vector<16x256xf32> -> vector<16x256xf32>
    %148 = arith.addf %126, %147 : vector<16x256xf32>
    %c0_97 = arith.constant 0 : index
    %c0_98 = arith.constant 0 : index
    %c33 = arith.constant 33 : index
    %149 = vector.load %arg5[%c0_97, %c0_98, %c33] : memref<1x16x290xf32, #tpu.memory_space<vmem>>, vector<1x16x256xf32>
    %150 = vector.shape_cast %149 : vector<1x16x256xf32> to vector<16x256xf32>
    %c0_99 = arith.constant 0 : index
    %c0_100 = arith.constant 0 : index
    %c7 = arith.constant 7 : index
    %151 = vector.load %arg2[%c0_99, %c0_100, %c7] : memref<1x16x9xf32, #tpu.memory_space<vmem>>, vector<1x16x1xf32>
    %152 = vector.shape_cast %151 : vector<1x16x1xf32> to vector<16x1xf32>
    %c0_101 = arith.constant 0 : index
    %c7_102 = arith.constant 7 : index
    %c0_103 = arith.constant 0 : index
    %153 = vector.load %arg1[%c0_101, %c7_102, %c0_103] : memref<1x9x16xf32, #tpu.memory_space<vmem>>, vector<1x1x16xf32>
    %154 = vector.shape_cast %153 : vector<1x1x16xf32> to vector<1x16xf32>
    %155 = vector.broadcast %152 : vector<16x1xf32> to vector<16x16xf32>
    %156 = vector.broadcast %154 : vector<1x16xf32> to vector<16x16xf32>
    %157 = arith.addf %155, %156 : vector<16x16xf32>
    %158 = arith.negf %157 : vector<16x16xf32>
    %159 = math.exp %158 : vector<16x16xf32>
    %cst_104 = arith.constant 1.000000e+00 : f32
    %160 = vector.broadcast %cst_104 : f32 to vector<16x16xf32>
    %161 = arith.addf %160, %159 : vector<16x16xf32>
    %162 = arith.divf %160, %161 : vector<16x16xf32>
    %c7_105 = arith.constant 7 : index
    %c0_106 = arith.constant 0 : index
    %c0_107 = arith.constant 0 : index
    %163 = vector.load %arg3[%c7_105, %c0_106, %c0_107] : memref<9x16x16xf32, #tpu.memory_space<vmem>>, vector<1x16x16xf32>
    %164 = vector.shape_cast %163 : vector<1x16x16xf32> to vector<16x16xf32>
    %165 = arith.mulf %162, %164 : vector<16x16xf32>
    %cst_108 = arith.constant dense<0.000000e+00> : vector<16x256xf32>
    %166 = tpu.matmul %165, %150, %cst_108 {dimension_numbers = #tpu.dot_dimension_numbers<[1], [0], [0], [1], [0, 0, 1, 1], [], []>} : vector<16x16xf32>, vector<16x256xf32>, vector<16x256xf32> -> vector<16x256xf32>
    %167 = arith.addf %148, %166 : vector<16x256xf32>
    %c0_109 = arith.constant 0 : index
    %c0_110 = arith.constant 0 : index
    %c34 = arith.constant 34 : index
    %168 = vector.load %arg5[%c0_109, %c0_110, %c34] : memref<1x16x290xf32, #tpu.memory_space<vmem>>, vector<1x16x256xf32>
    %169 = vector.shape_cast %168 : vector<1x16x256xf32> to vector<16x256xf32>
    %c2_111 = arith.constant 2 : index
    %c0_112 = arith.constant 0 : index
    %170 = vector.load %arg4[%c2_111, %c0_112] : memref<3x256xf32, #tpu.memory_space<vmem>>, vector<1x256xf32>
    %171 = vector.broadcast %170 : vector<1x256xf32> to vector<16x256xf32>
    %172 = arith.mulf %169, %171 : vector<16x256xf32>
    %c0_113 = arith.constant 0 : index
    %c0_114 = arith.constant 0 : index
    %c8 = arith.constant 8 : index
    %173 = vector.load %arg2[%c0_113, %c0_114, %c8] : memref<1x16x9xf32, #tpu.memory_space<vmem>>, vector<1x16x1xf32>
    %174 = vector.shape_cast %173 : vector<1x16x1xf32> to vector<16x1xf32>
    %c0_115 = arith.constant 0 : index
    %c8_116 = arith.constant 8 : index
    %c0_117 = arith.constant 0 : index
    %175 = vector.load %arg1[%c0_115, %c8_116, %c0_117] : memref<1x9x16xf32, #tpu.memory_space<vmem>>, vector<1x1x16xf32>
    %176 = vector.shape_cast %175 : vector<1x1x16xf32> to vector<1x16xf32>
    %177 = vector.broadcast %174 : vector<16x1xf32> to vector<16x16xf32>
    %178 = vector.broadcast %176 : vector<1x16xf32> to vector<16x16xf32>
    %179 = arith.addf %177, %178 : vector<16x16xf32>
    %180 = arith.negf %179 : vector<16x16xf32>
    %181 = math.exp %180 : vector<16x16xf32>
    %cst_118 = arith.constant 1.000000e+00 : f32
    %182 = vector.broadcast %cst_118 : f32 to vector<16x16xf32>
    %183 = arith.addf %182, %181 : vector<16x16xf32>
    %184 = arith.divf %182, %183 : vector<16x16xf32>
    %c8_119 = arith.constant 8 : index
    %c0_120 = arith.constant 0 : index
    %c0_121 = arith.constant 0 : index
    %185 = vector.load %arg3[%c8_119, %c0_120, %c0_121] : memref<9x16x16xf32, #tpu.memory_space<vmem>>, vector<1x16x16xf32>
    %186 = vector.shape_cast %185 : vector<1x16x16xf32> to vector<16x16xf32>
    %187 = arith.mulf %184, %186 : vector<16x16xf32>
    %cst_122 = arith.constant dense<0.000000e+00> : vector<16x256xf32>
    %188 = tpu.matmul %187, %172, %cst_122 {dimension_numbers = #tpu.dot_dimension_numbers<[1], [0], [0], [1], [0, 0, 1, 1], [], []>} : vector<16x16xf32>, vector<16x256xf32>, vector<16x256xf32> -> vector<16x256xf32>
    %189 = arith.addf %167, %188 : vector<16x256xf32>
    %cst_123 = arith.constant 1.000000e+00 : f32
    %190 = vector.broadcast %cst_123 : f32 to vector<16x256xf32>
    %191 = arith.mulf %189, %190 : vector<16x256xf32>
    %c0_124 = arith.constant 0 : index
    %c0_125 = arith.constant 0 : index
    %c0_126 = arith.constant 0 : index
    %192 = vector.load %arg6[%c0_124, %c0_125, %c0_126] : memref<1x16x256xf32, #tpu.memory_space<vmem>>, vector<1x16x256xf32>
    %193 = vector.shape_cast %192 : vector<1x16x256xf32> to vector<16x256xf32>
    %194 = arith.addf %191, %193 : vector<16x256xf32>
    %cst_127 = arith.constant 1.000000e+00 : f32
    %195 = vector.broadcast %cst_127 : f32 to vector<16x256xf32>
    %196 = arith.mulf %194, %195 : vector<16x256xf32>
    %c0_128 = arith.constant 0 : index
    %c0_129 = arith.constant 0 : index
    %c0_130 = arith.constant 0 : index
    %197 = vector.load %arg7[%c0_128, %c0_129, %c0_130] : memref<1x16x256xf32, #tpu.memory_space<vmem>>, vector<1x16x256xf32>
    %198 = vector.shape_cast %197 : vector<1x16x256xf32> to vector<16x256xf32>
    %199 = arith.addf %196, %198 : vector<16x256xf32>
    %c0_131 = arith.constant 0 : index
    %c0_132 = arith.constant 0 : index
    %c0_133 = arith.constant 0 : index
    %200 = vector.load %arg8[%c0_131, %c0_132, %c0_133] : memref<1x16x256xf32, #tpu.memory_space<vmem>>, vector<1x16x256xf32>
    %201 = vector.shape_cast %200 : vector<1x16x256xf32> to vector<16x256xf32>
    %202 = vector.shape_cast %199 : vector<16x256xf32> to vector<1x16x256xf32>
    tpu.vector_store %arg8[%c0_131, %c0_132, %c0_133], %202 {strides = array<i32>} : memref<1x16x256xf32, #tpu.memory_space<vmem>>, vector<1x16x256xf32>,
    return
  }
  func.func @transform_0(%arg0: i32) -> (i32, i32, i32) {
    %c0_i32 = arith.constant 0 : i32
    %c0_i32_0 = arith.constant 0 : i32
    %c0_i32_1 = arith.constant 0 : i32
    return %arg0, %c0_i32, %c0_i32_0 : i32, i32, i32
  }
  func.func @transform_1(%arg0: i32) -> (i32, i32, i32) {
    %c0_i32 = arith.constant 0 : i32
    %c0_i32_0 = arith.constant 0 : i32
    %c0_i32_1 = arith.constant 0 : i32
    return %arg0, %c0_i32, %c0_i32_0 : i32, i32, i32
  }
  func.func @transform_2(%arg0: i32) -> (i32, i32, i32) {
    %c0_i32 = arith.constant 0 : i32
    %c0_i32_0 = arith.constant 0 : i32
    %c0_i32_1 = arith.constant 0 : i32
    %c0_i32_2 = arith.constant 0 : i32
    return %c0_i32, %c0_i32_0, %c0_i32_1 : i32, i32, i32
  }
  func.func @transform_3(%arg0: i32) -> (i32, i32) {
    %c0_i32 = arith.constant 0 : i32
    %c0_i32_0 = arith.constant 0 : i32
    %c0_i32_1 = arith.constant 0 : i32
    return %c0_i32, %c0_i32_0 : i32, i32
  }
  func.func @transform_4(%arg0: i32) -> (i32, i32, i32) {
    %c0_i32 = arith.constant 0 : i32
    %c0_i32_0 = arith.constant 0 : i32
    %c0_i32_1 = arith.constant 0 : i32
    return %arg0, %c0_i32, %c0_i32_0 : i32, i32, i32
  }
  func.func @transform_5(%arg0: i32) -> (i32, i32, i32) {
    %c0_i32 = arith.constant 0 : i32
    %c0_i32_0 = arith.constant 0 : i32
    %c0_i32_1 = arith.constant 0 : i32
    return %arg0, %c0_i32, %c0_i32_0 : i32, i32, i32
  }
  func.func @transform_6(%arg0: i32) -> (i32, i32, i32) {
    %c0_i32 = arith.constant 0 : i32
    %c0_i32_0 = arith.constant 0 : i32
    %c0_i32_1 = arith.constant 0 : i32
    return %arg0, %c0_i32, %c0_i32_0 : i32, i32, i32
  }
  func.func @transform_7(%arg0: i32) -> (i32, i32, i32) {
    %c0_i32 = arith.constant 0 : i32
    %c0_i32_0 = arith.constant 0 : i32
    %c0_i32_1 = arith.constant 0 : i32
    return %arg0, %c0_i32, %c0_i32_0 : i32, i32, i32
  }
}

</mosaic_0001>

<llo_original>
// kernel: _lambda_.4
$region0: #{_lambda_.4}
  #allocation0 [shape = 'u32[]', space=smem, size = 0x4, offset = 0x4, fixed_abs, tag = 'smem constant byte address 0x4 - core index']
  #allocation1 [shape = 'u32[72,128]{1,0:T(1,128)}', space=vmem, size = 0x9000, scoped, tag = 'internal scratch']
  %s0 = inlined_call_operand.vmem [shape: f32[9,16,16], index: 0, kind: input, shape index: {}]
  %s1 = inlined_call_operand.vmem [shape: f32[16,1], index: 1, kind: input, shape index: {}]
  %s2 = inlined_call_operand.vmem [shape: f32[3,256], index: 2, kind: input, shape index: {}]
  %s3 = inlined_call_operand.vmem [shape: f32[2,16,290], index: 3, kind: input, shape index: {}]
  %s4 = inlined_call_operand.vmem [shape: f32[2,16,256], index: 4, kind: output, shape index: {}]
  %s5 = sld [smem:[#allocation0]]
  $region49: #{_lambda_.4} parent=0
    _
  %s7 = ssub.s32 1, %s5
  %s8 = scalar_select 0, %s7, %s5
  loop: start=0, step=1, limit=4
  $region2: #{_lambda_.4} parent=0 // loop_pre_header
    _
  $region3: #{_lambda_.4} parent=0 // loop_header
    %s10 = sphi 0, %s14
    %p11 = scmp.ge.s32.totalorder %s10, 4
    %s18 = sphi 0, %s18
    %s20 = sphi 0, %s18
    %s21 = sphi 0, %s20
    %s35 = sphi 0, %s21
    %s39 = sphi 0, %s39
    %s41 = sphi 0, %s39
    %s42 = sphi 0, %s41
    %s56 = sphi 0, %s42
    %s60 = sphi 0, %s60
    %s62 = sphi 0, %s60
    %s63 = sphi 0, %s62
    %s77 = sphi 0, %s63
    %s83 = sphi 0, %s85
    %s86 = sphi 0, %s83
    %s87 = sphi 0, %s86
    %s103 = sphi 0, %s87
    %s109 = sphi 0, %s111
    %s112 = sphi 0, %s109
    %s113 = sphi 0, %s112
    %s129 = sphi 0, %s113
  $region4: #{_lambda_.4} parent=0 // loop_header_branch
    %13 = sbr.rel (%p11) target = $region8
  $region5: #{_lambda_.4} parent=0 // loop_body
    %s15 = ssub.s32 %s10, 1
    %s16 = ssub.s32 %s10, 2
    %s17 = sadd.s32 %s10, 1
    %s19 = sadd.s32 %s18, 1
    %p22 = scmp.eq.s32.totalorder %s10, 1
    %p23 = scmp.ne.s32.totalorder %s18, %s20
    %p24 = scmp.eq.s32.totalorder %s10, 0
    %p25 = por %p23, %p24
    %p26 = scmp.ne.s32.totalorder %s18, %s20
    %p27 = scmp.eq.s32.totalorder %s15, 1
    %p28 = por %p26, %p27
    %p29 = scmp.ne.s32.totalorder %s20, %s21
    %p30 = scmp.eq.s32.totalorder %s15, 0
    %p31 = por %p29, %p30
    %p32 = scmp.ne.s32.totalorder %s20, %s21
    %p33 = scmp.eq.s32.totalorder %s16, 1
    %p34 = por %p32, %p33
    %p36 = scmp.ne.s32.totalorder %s21, %s35
    %p37 = scmp.eq.s32.totalorder %s16, 0
    %p38 = por %p36, %p37
    %s40 = sadd.s32 %s39, 1
    %p43 = scmp.eq.s32.totalorder %s10, 1
    %p44 = scmp.ne.s32.totalorder %s39, %s41
    %p45 = scmp.eq.s32.totalorder %s10, 0
    %p46 = por %p44, %p45
    %p47 = scmp.ne.s32.totalorder %s39, %s41
    %p48 = scmp.eq.s32.totalorder %s15, 1
    %p49 = por %p47, %p48
    %p50 = scmp.ne.s32.totalorder %s41, %s42
    %p51 = scmp.eq.s32.totalorder %s15, 0
    %p52 = por %p50, %p51
    %p53 = scmp.ne.s32.totalorder %s41, %s42
    %p54 = scmp.eq.s32.totalorder %s16, 1
    %p55 = por %p53, %p54
    %p57 = scmp.ne.s32.totalorder %s42, %s56
    %p58 = scmp.eq.s32.totalorder %s16, 0
    %p59 = por %p57, %p58
    %s61 = sadd.s32 %s60, 1
    %p64 = scmp.eq.s32.totalorder %s10, 1
    %p65 = scmp.ne.s32.totalorder %s60, %s62
    %p66 = scmp.eq.s32.totalorder %s10, 0
    %p67 = por %p65, %p66
    %p68 = scmp.ne.s32.totalorder %s60, %s62
    %p69 = scmp.eq.s32.totalorder %s15, 1
    %p70 = por %p68, %p69
    %p71 = scmp.ne.s32.totalorder %s62, %s63
    %p72 = scmp.eq.s32.totalorder %s15, 0
    %p73 = por %p71, %p72
    %p74 = scmp.ne.s32.totalorder %s62, %s63
    %p75 = scmp.eq.s32.totalorder %s16, 1
    %p76 = por %p74, %p75
    %p78 = scmp.ne.s32.totalorder %s63, %s77
    %p79 = scmp.eq.s32.totalorder %s16, 0
    %p80 = por %p78, %p79
    %s81 = ssub.s32 %s10, %s17
    %p82 = scmp.eq.s32.totalorder %s81, 0
    %s84 = sadd.s32 %s83, 1
    %s85 = scalar_select %p82, %s83, %s84
    %p88 = pneg %p82
    %p89 = scmp.eq.s32.totalorder %s10, 1
    %p90 = por %p88, %p89
    %p91 = scmp.ne.s32.totalorder %s83, %s86
    %p92 = scmp.eq.s32.totalorder %s10, 0
    %p93 = por %p91, %p92
    %p94 = scmp.ne.s32.totalorder %s83, %s86
    %p95 = scmp.eq.s32.totalorder %s15, 1
    %p96 = por %p94, %p95
    %p97 = scmp.ne.s32.totalorder %s86, %s87
    %p98 = scmp.eq.s32.totalorder %s15, 0
    %p99 = por %p97, %p98
    %p100 = scmp.ne.s32.totalorder %s86, %s87
    %p101 = scmp.eq.s32.totalorder %s16, 1
    %p102 = por %p100, %p101
    %p104 = scmp.ne.s32.totalorder %s87, %s103
    %p105 = scmp.eq.s32.totalorder %s16, 0
    %p106 = por %p104, %p105
    %s107 = ssub.s32 %s10, %s17
    %p108 = scmp.eq.s32.totalorder %s107, 0
    %s110 = sadd.s32 %s109, 1
    %s111 = scalar_select %p108, %s109, %s110
    %p114 = pneg %p108
    %p115 = scmp.eq.s32.totalorder %s10, 1
    %p116 = por %p114, %p115
    %p117 = scmp.ne.s32.totalorder %s109, %s112
    %p118 = scmp.eq.s32.totalorder %s10, 0
    %p119 = por %p117, %p118
    %p120 = scmp.ne.s32.totalorder %s109, %s112
    %p121 = scmp.eq.s32.totalorder %s15, 1
    %p122 = por %p120, %p121
    %p123 = scmp.ne.s32.totalorder %s112, %s113
    %p124 = scmp.eq.s32.totalorder %s15, 0
    %p125 = por %p123, %p124
    %p126 = scmp.ne.s32.totalorder %s112, %s113
    %p127 = scmp.eq.s32.totalorder %s16, 1
    %p128 = por %p126, %p127
    %p130 = scmp.ne.s32.totalorder %s113, %s129
    %p131 = scmp.eq.s32.totalorder %s16, 0
    %p132 = por %p130, %p131
    %p133 = scmp.le.s32.totalorder 1, %s10
    %p134 = scmp.lt.s32.totalorder %s10, 3
    %p135 = pnand %p133, %p134
    %p136 = pneg %p135
    // Predicated region
    $region9: #{_lambda_.4} parent=5 // pred_check
      _
    $region10: #{_lambda_.4} parent=5 // pred_check_branch
      %138 = sbr.rel (%p135) target = $region12
    $region11: #{_lambda_.4} parent=5 // pred_region
      %s139 = ssub.s32 %s10, 1
      // Predicated region
      $region13: #{_lambda_.4} parent=11 // pred_check
        %p140 = pneg %p31
      $region14: #{_lambda_.4} parent=11 // pred_check_branch
        %142 = sbr.rel (%p140) target = $region16
      $region15: #{_lambda_.4} parent=11 // pred_region
        _
      $region16: #{_lambda_.4} parent=11 // pred_fallthru
        _
      // Predicated region
      $region17: #{_lambda_.4} parent=11 // pred_check
        %p143 = pneg %p52
      $region18: #{_lambda_.4} parent=11 // pred_check_branch
        %145 = sbr.rel (%p143) target = $region20
      $region19: #{_lambda_.4} parent=11 // pred_region
        _
      $region20: #{_lambda_.4} parent=11 // pred_fallthru
        _
      // Predicated region
      $region21: #{_lambda_.4} parent=11 // pred_check
        %p146 = pneg %p73
      $region22: #{_lambda_.4} parent=11 // pred_check_branch
        %148 = sbr.rel (%p146) target = $region24
      $region23: #{_lambda_.4} parent=11 // pred_region
        _
      $region24: #{_lambda_.4} parent=11 // pred_fallthru
        _
    $region12: #{_lambda_.4} parent=5 // pred_fallthru
      _
    %p149 = scmp.lt.s32.totalorder %s10, 2
    // Predicated region
    $region25: #{_lambda_.4} parent=5 // pred_check
      %p150 = pneg %p149
    $region26: #{_lambda_.4} parent=5 // pred_check_branch
      %152 = sbr.rel (%p150) target = $region28
    $region27: #{_lambda_.4} parent=5 // pred_region
      // Predicated region
      $region29: #{_lambda_.4} parent=27 // pred_check
        %p153 = pneg %p93
      $region30: #{_lambda_.4} parent=27 // pred_check_branch
        %155 = sbr.rel (%p153) target = $region32
      $region31: #{_lambda_.4} parent=27 // pred_region
        %p156 = scmp.lt.s32.totalorder %s10, 1
        %s157 = scalar_select %p156, %s10, 1
        %s158 = smul.addr %s157, 6
        %s159 = smul.addr %s158, 8
        %s160 = scalar_lea.vmem %s3, %s159
      $region32: #{_lambda_.4} parent=27 // pred_fallthru
        _
    $region28: #{_lambda_.4} parent=5 // pred_fallthru
      _
    %p161 = scmp.le.s32.totalorder 1, %s10
    %p162 = scmp.lt.s32.totalorder %s10, 3
    %p163 = pnand %p161, %p162
    %p164 = pneg %p163
    // Predicated region
    $region33: #{_lambda_.4} parent=5 // pred_check
      _
    $region34: #{_lambda_.4} parent=5 // pred_check_branch
      %166 = sbr.rel (%p163) target = $region36
    $region35: #{_lambda_.4} parent=5 // pred_region
      %s167 = ssub.s32 %s10, 1
      %p168 = pneg %p31
      %p169 = pneg %p28
      %p170 = pneg %p52
      %p171 = pneg %p49
      %p172 = pneg %p73
      %p173 = pneg %p70
      %p174 = scmp.lt.s32.totalorder %s15, 1
      %s175 = scalar_select %p174, %s15, 1
      %s176 = smul.addr %s175, 6
      %s177 = smul.addr %s176, 8
      %s178 = scalar_lea.vmem %s3, %s177
      %p179 = pneg %p99
      %p180 = pneg %p96
      %p181 = pneg %p125
      %p182 = pneg %p122
      %p183 = scmp.lt.s32.totalorder %s15, 1
      %s184 = scalar_select %p183, %s15, 1
      %s185 = smul.addr %s184, 4
      %s186 = smul.addr %s185, 8
      %s187 = scalar_lea.vmem %s4, %s186
      %p188 = scmp.lt.s32.totalorder %s15, 1
      %s189 = scalar_select %p188, %s15, 1
      %s190 = smul.addr %s189, 6
      %s191 = smul.addr %s190, 8
      %s192 = scalar_lea.vmem %s3, %s191
      %p193 = scmp.lt.s32.totalorder %s15, 1
      %s194 = scalar_select %p193, %s15, 1
      %s195 = smul.addr %s194, 4
      %s196 = smul.addr %s195, 8
      %s197 = scalar_lea.vmem %s4, %s196
      %v198 = vld [vmem:[%s192] sm:$0xff]
      %v199 = vld [vmem:[%s192 + $0x8] sm:$0xff]
      %v200 = vld [vmem:[%s192 + $0x18] sm:$0xff]
      %v201 = vld [vmem:[%s192 + $0x20] sm:$0xff]
      %v202 = vld [vmem:[%s2] ss:$4 sm:$0x3]
      %v204 = vperm.slane %v202, 0
      %v205 = vperm.slane %v202, 1
      %v208 = vmul.f32 %v198, %v204
      %v209 = vmul.f32 %v199, %v205
      %v210 = vmul.f32 %v200, %v204
      %v211 = vmul.f32 %v201, %v205
      %v212 = vld [vmem:[%s0] sm:$0xff]
      %v213 = vld [vmem:[%s0 + $0x8] sm:$0xff]
      %v214 = vld [vmem:[%s192 + $0x10] sm:$0xff]
      %v215 = vld [vmem:[%s192 + $0x28] sm:$0xff]
      %s216 = scalar_lea.vmem %s0, 16
      %v217 = vld [vmem:[%s216] sm:$0xff]
      %v218 = vld [vmem:[%s216 + $0x8] sm:$0xff]
      %225 = vrot.lane.b32.xlu0 %v198, 127
      %v226 = vpop.permute.xlu0 %225
      %227 = vrot.lane.b32.xlu0 %v199, 127
      %v228 = vpop.permute.xlu0 %227
      %229 = vrot.lane.b32.xlu0 %v214, 127
      %v230 = vpop.permute.xlu0 %229
      %231 = vrot.lane.b32.xlu0 %v200, 127
      %v232 = vpop.permute.xlu0 %231
      %233 = vrot.lane.b32.xlu0 %v201, 127
      %v234 = vpop.permute.xlu0 %233
      %235 = vrot.lane.b32.xlu0 %v215, 127
      %v236 = vpop.permute.xlu0 %235
      %vm237 = vcmask 1039360
      %v238 = vsel %vm237, %v226, %v228
      %v239 = vsel %vm237, %v228, %v230
      %v240 = vsel %vm237, %v232, %v234
      %v241 = vsel %vm237, %v234, %v236
      %vm246 = vcmask 130048
      %v248 = vsel %vm246, %v217, 0
      %v251 = vsel %vm246, %v218, 0
      %253 = vmatpush.msra.mxu0 0.0
      %254 = vmatpush.msra.mxu0 0.0
      %255 = vmatpush.msra.mxu0 0.0
      %256 = vmatpush.msra.mxu0 0.0
      %257 = vmatpush.msra.mxu0 0.0
      %258 = vmatpush.msra.mxu0 0.0
      %259 = vmatpush.msra.mxu0 0.0
      %260 = vmatpush.msra.mxu0 0.0
      %261 = vmatpush.msra.mxu0 0.0
      %262 = vmatpush.msra.mxu0 0.0
      %263 = vmatpush.msra.mxu0 0.0
      %264 = vmatpush.msra.mxu0 0.0
      %265 = vmatpush.msra.mxu0 0.0
      %266 = vmatpush.msra.mxu0 0.0
      %267 = vmatpush.msra.mxu0 %v240
      %268 = vmatpush.msra.mxu0 %v238
      %269 = vmatmul.f32.gmra.mxu0 %v248
      %v270 = vpop.f32.mrf.mxu0
      %v271 = vadd.f32 0.0, %v270
      %272 = vmatmul.f32.gmra.mxu0 %v251
      %v273 = vpop.f32.mrf.mxu0
      %v274 = vadd.f32 0.0, %v273
      %275 = vdwg.mxu0
      %276 = vmatpush.msra.mxu0 0.0
      %277 = vmatpush.msra.mxu0 0.0
      %278 = vmatpush.msra.mxu0 0.0
      %279 = vmatpush.msra.mxu0 0.0
      %280 = vmatpush.msra.mxu0 0.0
      %281 = vmatpush.msra.mxu0 0.0
      %282 = vmatpush.msra.mxu0 0.0
      %283 = vmatpush.msra.mxu0 0.0
      %284 = vmatpush.msra.mxu0 0.0
      %285 = vmatpush.msra.mxu0 0.0
      %286 = vmatpush.msra.mxu0 0.0
      %287 = vmatpush.msra.mxu0 0.0
      %288 = vmatpush.msra.mxu0 0.0
      %289 = vmatpush.msra.mxu0 0.0
      %290 = vmatpush.msra.mxu0 %v241
      %291 = vmatpush.msra.mxu0 %v239
      %292 = vmatmul.f32.gmra.mxu0 %v248
      %v293 = vpop.f32.mrf.mxu0
      %v294 = vadd.f32 0.0, %v293
      %295 = vmatmul.f32.gmra.mxu0 %v251
      %v296 = vpop.f32.mrf.mxu0
      %v297 = vadd.f32 0.0, %v296
      %298 = vdwg.mxu0
      %v300 = vsel %vm246, %v212, 0
      %v303 = vsel %vm246, %v213, 0
      %305 = vmatpush.msra.mxu0 0.0
      %306 = vmatpush.msra.mxu0 0.0
      %307 = vmatpush.msra.mxu0 0.0
      %308 = vmatpush.msra.mxu0 0.0
      %309 = vmatpush.msra.mxu0 0.0
      %310 = vmatpush.msra.mxu0 0.0
      %311 = vmatpush.msra.mxu0 0.0
      %312 = vmatpush.msra.mxu0 0.0
      %313 = vmatpush.msra.mxu0 0.0
      %314 = vmatpush.msra.mxu0 0.0
      %315 = vmatpush.msra.mxu0 0.0
      %316 = vmatpush.msra.mxu0 0.0
      %317 = vmatpush.msra.mxu0 0.0
      %318 = vmatpush.msra.mxu0 0.0
      %319 = vmatpush.msra.mxu0 %v210
      %320 = vmatpush.msra.mxu0 %v208
      %321 = vmatmul.f32.gmra.mxu0 %v300
      %v322 = vpop.f32.mrf.mxu0
      %v323 = vadd.f32 %v271, %v322
      %324 = vmatmul.f32.gmra.mxu0 %v303
      %v325 = vpop.f32.mrf.mxu0
      %v326 = vadd.f32 %v274, %v325
      %327 = vdwg.mxu0
      %328 = vmatpush.msra.mxu0 0.0
      %329 = vmatpush.msra.mxu0 0.0
      %330 = vmatpush.msra.mxu0 0.0
      %331 = vmatpush.msra.mxu0 0.0
      %332 = vmatpush.msra.mxu0 0.0
      %333 = vmatpush.msra.mxu0 0.0
      %334 = vmatpush.msra.mxu0 0.0
      %335 = vmatpush.msra.mxu0 0.0
      %336 = vmatpush.msra.mxu0 0.0
      %337 = vmatpush.msra.mxu0 0.0
      %338 = vmatpush.msra.mxu0 0.0
      %339 = vmatpush.msra.mxu0 0.0
      %340 = vmatpush.msra.mxu0 0.0
      %341 = vmatpush.msra.mxu0 0.0
      %342 = vmatpush.msra.mxu0 %v211
      %343 = vmatpush.msra.mxu0 %v209
      %344 = vmatmul.f32.gmra.mxu0 %v300
      %v345 = vpop.f32.mrf.mxu0
      %v346 = vadd.f32 %v294, %v345
      %347 = vmatmul.f32.gmra.mxu0 %v303
      %v348 = vpop.f32.mrf.mxu0
      %v349 = vadd.f32 %v297, %v348
      %350 = vdwg.mxu0
      %s351 = scalar_lea.vmem %s2, 2
      %v352 = vld [vmem:[%s351] ss:$4 sm:$0x3]
      %v354 = vperm.slane %v352, 0
      %v355 = vperm.slane %v352, 1
      %356 = vrot.lane.b32.xlu0 %v354, 2
      %v357 = vpop.permute.xlu0 %356
      %358 = vrot.lane.b32.xlu0 %v355, 2
      %v359 = vpop.permute.xlu0 %358
      %vm360 = vcmask 15360
      %v361 = vsel %vm360, %v357, %v359
      %v365 = vmul.f32 %v198, %v357
      %v366 = vmul.f32 %v199, %v361
      %v367 = vmul.f32 %v214, %v359
      %v368 = vmul.f32 %v200, %v357
      %v369 = vmul.f32 %v201, %v361
      %v370 = vmul.f32 %v215, %v359
      %s371 = scalar_lea.vmem %s0, 32
      %v372 = vld [vmem:[%s371] sm:$0xff]
      %v373 = vld [vmem:[%s371 + $0x8] sm:$0xff]
      %380 = vrot.lane.b32.xlu0 %v365, 126
      %v381 = vpop.permute.xlu0 %380
      %382 = vrot.lane.b32.xlu0 %v366, 126
      %v383 = vpop.permute.xlu0 %382
      %384 = vrot.lane.b32.xlu0 %v367, 126
      %v385 = vpop.permute.xlu0 %384
      %386 = vrot.lane.b32.xlu0 %v368, 126
      %v387 = vpop.permute.xlu0 %386
      %388 = vrot.lane.b32.xlu0 %v369, 126
      %v389 = vpop.permute.xlu0 %388
      %390 = vrot.lane.b32.xlu0 %v370, 126
      %v391 = vpop.permute.xlu0 %390
      %vm392 = vcmask 1031168
      %v393 = vsel %vm392, %v381, %v383
      %v394 = vsel %vm392, %v383, %v385
      %v395 = vsel %vm392, %v387, %v389
      %v396 = vsel %vm392, %v389, %v391
      %v402 = vsel %vm246, %v372, 0
      %v405 = vsel %vm246, %v373, 0
      %407 = vmatpush.msra.mxu0 0.0
      %408 = vmatpush.msra.mxu0 0.0
      %409 = vmatpush.msra.mxu0 0.0
      %410 = vmatpush.msra.mxu0 0.0
      %411 = vmatpush.msra.mxu0 0.0
      %412 = vmatpush.msra.mxu0 0.0
      %413 = vmatpush.msra.mxu0 0.0
      %414 = vmatpush.msra.mxu0 0.0
      %415 = vmatpush.msra.mxu0 0.0
      %416 = vmatpush.msra.mxu0 0.0
      %417 = vmatpush.msra.mxu0 0.0
      %418 = vmatpush.msra.mxu0 0.0
      %419 = vmatpush.msra.mxu0 0.0
      %420 = vmatpush.msra.mxu0 0.0
      %421 = vmatpush.msra.mxu0 %v395
      %422 = vmatpush.msra.mxu0 %v393
      %423 = vmatmul.f32.gmra.mxu0 %v402
      %v424 = vpop.f32.mrf.mxu0
      %v425 = vadd.f32 0.0, %v424
      %426 = vmatmul.f32.gmra.mxu0 %v405
      %v427 = vpop.f32.mrf.mxu0
      %v428 = vadd.f32 0.0, %v427
      %429 = vdwg.mxu0
      %430 = vmatpush.msra.mxu0 0.0
      %431 = vmatpush.msra.mxu0 0.0
      %432 = vmatpush.msra.mxu0 0.0
      %433 = vmatpush.msra.mxu0 0.0
      %434 = vmatpush.msra.mxu0 0.0
      %435 = vmatpush.msra.mxu0 0.0
      %436 = vmatpush.msra.mxu0 0.0
      %437 = vmatpush.msra.mxu0 0.0
      %438 = vmatpush.msra.mxu0 0.0
      %439 = vmatpush.msra.mxu0 0.0
      %440 = vmatpush.msra.mxu0 0.0
      %441 = vmatpush.msra.mxu0 0.0
      %442 = vmatpush.msra.mxu0 0.0
      %443 = vmatpush.msra.mxu0 0.0
      %444 = vmatpush.msra.mxu0 %v396
      %445 = vmatpush.msra.mxu0 %v394
      %446 = vmatmul.f32.gmra.mxu0 %v402
      %v447 = vpop.f32.mrf.mxu0
      %v448 = vadd.f32 0.0, %v447
      %449 = vmatmul.f32.gmra.mxu0 %v405
      %v450 = vpop.f32.mrf.mxu0
      %v451 = vadd.f32 0.0, %v450
      %452 = vdwg.mxu0
      %v453 = vadd.f32 %v323, %v425
      %v454 = vadd.f32 %v346, %v448
      %v455 = vadd.f32 %v326, %v428
      %v456 = vadd.f32 %v349, %v451
      %457 = vrot.lane.b32.xlu0 %v204, 16
      %v458 = vpop.permute.xlu0 %457
      %459 = vrot.lane.b32.xlu0 %v205, 16
      %v460 = vpop.permute.xlu0 %459
      %v461 = vsel %vm246, %v458, %v460
      %v465 = vmul.f32 %v198, %v458
      %v466 = vmul.f32 %v199, %v461
      %v467 = vmul.f32 %v214, %v460
      %v468 = vmul.f32 %v200, %v458
      %v469 = vmul.f32 %v201, %v461
      %v470 = vmul.f32 %v215, %v460
      %s471 = scalar_lea.vmem %s0, 48
      %v472 = vld [vmem:[%s471] sm:$0xff]
      %v473 = vld [vmem:[%s471 + $0x8] sm:$0xff]
      %480 = vrot.lane.b32.xlu0 %v465, 112
      %v481 = vpop.permute.xlu0 %480
      %482 = vrot.lane.b32.xlu0 %v466, 112
      %v483 = vpop.permute.xlu0 %482
      %484 = vrot.lane.b32.xlu0 %v467, 112
      %v485 = vpop.permute.xlu0 %484
      %486 = vrot.lane.b32.xlu0 %v468, 112
      %v487 = vpop.permute.xlu0 %486
      %488 = vrot.lane.b32.xlu0 %v469, 112
      %v489 = vpop.permute.xlu0 %488
      %490 = vrot.lane.b32.xlu0 %v470, 112
      %v491 = vpop.permute.xlu0 %490
      %vm492 = vcmask 916480
      %v493 = vsel %vm492, %v481, %v483
      %v494 = vsel %vm492, %v483, %v485
      %v495 = vsel %vm492, %v487, %v489
      %v496 = vsel %vm492, %v489, %v491
      %v502 = vsel %vm246, %v472, 0
      %v505 = vsel %vm246, %v473, 0
      %507 = vmatpush.msra.mxu0 0.0
      %508 = vmatpush.msra.mxu0 0.0
      %509 = vmatpush.msra.mxu0 0.0
      %510 = vmatpush.msra.mxu0 0.0
      %511 = vmatpush.msra.mxu0 0.0
      %512 = vmatpush.msra.mxu0 0.0
      %513 = vmatpush.msra.mxu0 0.0
      %514 = vmatpush.msra.mxu0 0.0
      %515 = vmatpush.msra.mxu0 0.0
      %516 = vmatpush.msra.mxu0 0.0
      %517 = vmatpush.msra.mxu0 0.0
      %518 = vmatpush.msra.mxu0 0.0
      %519 = vmatpush.msra.mxu0 0.0
      %520 = vmatpush.msra.mxu0 0.0
      %521 = vmatpush.msra.mxu0 %v495
      %522 = vmatpush.msra.mxu0 %v493
      %523 = vmatmul.f32.gmra.mxu0 %v502
      %v524 = vpop.f32.mrf.mxu0
      %v525 = vadd.f32 0.0, %v524
      %526 = vmatmul.f32.gmra.mxu0 %v505
      %v527 = vpop.f32.mrf.mxu0
      %v528 = vadd.f32 0.0, %v527
      %529 = vdwg.mxu0
      %530 = vmatpush.msra.mxu0 0.0
      %531 = vmatpush.msra.mxu0 0.0
      %532 = vmatpush.msra.mxu0 0.0
      %533 = vmatpush.msra.mxu0 0.0
      %534 = vmatpush.msra.mxu0 0.0
      %535 = vmatpush.msra.mxu0 0.0
      %536 = vmatpush.msra.mxu0 0.0
      %537 = vmatpush.msra.mxu0 0.0
      %538 = vmatpush.msra.mxu0 0.0
      %539 = vmatpush.msra.mxu0 0.0
      %540 = vmatpush.msra.mxu0 0.0
      %541 = vmatpush.msra.mxu0 0.0
      %542 = vmatpush.msra.mxu0 0.0
      %543 = vmatpush.msra.mxu0 0.0
      %544 = vmatpush.msra.mxu0 %v496
      %545 = vmatpush.msra.mxu0 %v494
      %546 = vmatmul.f32.gmra.mxu0 %v502
      %v547 = vpop.f32.mrf.mxu0
      %v548 = vadd.f32 0.0, %v547
      %549 = vmatmul.f32.gmra.mxu0 %v505
      %v550 = vpop.f32.mrf.mxu0
      %v551 = vadd.f32 0.0, %v550
      %552 = vdwg.mxu0
      %v553 = vadd.f32 %v453, %v525
      %v554 = vadd.f32 %v454, %v548
      %v555 = vadd.f32 %v455, %v528
      %v556 = vadd.f32 %v456, %v551
      %s557 = scalar_lea.vmem %s0, 64
      %v558 = vld [vmem:[%s557] sm:$0xff]
      %v559 = vld [vmem:[%s557 + $0x8] sm:$0xff]
      %560 = vrot.lane.b32.xlu0 %v198, 111
      %v561 = vpop.permute.xlu0 %560
      %562 = vrot.lane.b32.xlu0 %v199, 111
      %v563 = vpop.permute.xlu0 %562
      %564 = vrot.lane.b32.xlu0 %v214, 111
      %v565 = vpop.permute.xlu0 %564
      %566 = vrot.lane.b32.xlu0 %v200, 111
      %v567 = vpop.permute.xlu0 %566
      %568 = vrot.lane.b32.xlu0 %v201, 111
      %v569 = vpop.permute.xlu0 %568
      %570 = vrot.lane.b32.xlu0 %v215, 111
      %v571 = vpop.permute.xlu0 %570
      %vm572 = vcmask 908288
      %v573 = vsel %vm572, %v561, %v563
      %v574 = vsel %vm572, %v563, %v565
      %v575 = vsel %vm572, %v567, %v569
      %v576 = vsel %vm572, %v569, %v571
      %v582 = vsel %vm246, %v558, 0
      %v585 = vsel %vm246, %v559, 0
      %587 = vmatpush.msra.mxu0 0.0
      %588 = vmatpush.msra.mxu0 0.0
      %589 = vmatpush.msra.mxu0 0.0
      %590 = vmatpush.msra.mxu0 0.0
      %591 = vmatpush.msra.mxu0 0.0
      %592 = vmatpush.msra.mxu0 0.0
      %593 = vmatpush.msra.mxu0 0.0
      %594 = vmatpush.msra.mxu0 0.0
      %595 = vmatpush.msra.mxu0 0.0
      %596 = vmatpush.msra.mxu0 0.0
      %597 = vmatpush.msra.mxu0 0.0
      %598 = vmatpush.msra.mxu0 0.0
      %599 = vmatpush.msra.mxu0 0.0
      %600 = vmatpush.msra.mxu0 0.0
      %601 = vmatpush.msra.mxu0 %v575
      %602 = vmatpush.msra.mxu0 %v573
      %603 = vmatmul.f32.gmra.mxu0 %v582
      %v604 = vpop.f32.mrf.mxu0
      %v605 = vadd.f32 0.0, %v604
      %606 = vmatmul.f32.gmra.mxu0 %v585
      %v607 = vpop.f32.mrf.mxu0
      %v608 = vadd.f32 0.0, %v607
      %609 = vdwg.mxu0
      %610 = vmatpush.msra.mxu0 0.0
      %611 = vmatpush.msra.mxu0 0.0
      %612 = vmatpush.msra.mxu0 0.0
      %613 = vmatpush.msra.mxu0 0.0
      %614 = vmatpush.msra.mxu0 0.0
      %615 = vmatpush.msra.mxu0 0.0
      %616 = vmatpush.msra.mxu0 0.0
      %617 = vmatpush.msra.mxu0 0.0
      %618 = vmatpush.msra.mxu0 0.0
      %619 = vmatpush.msra.mxu0 0.0
      %620 = vmatpush.msra.mxu0 0.0
      %621 = vmatpush.msra.mxu0 0.0
      %622 = vmatpush.msra.mxu0 0.0
      %623 = vmatpush.msra.mxu0 0.0
      %624 = vmatpush.msra.mxu0 %v576
      %625 = vmatpush.msra.mxu0 %v574
      %626 = vmatmul.f32.gmra.mxu0 %v582
      %v627 = vpop.f32.mrf.mxu0
      %v628 = vadd.f32 0.0, %v627
      %629 = vmatmul.f32.gmra.mxu0 %v585
      %v630 = vpop.f32.mrf.mxu0
      %v631 = vadd.f32 0.0, %v630
      %632 = vdwg.mxu0
      %v633 = vadd.f32 %v553, %v605
      %v634 = vadd.f32 %v554, %v628
      %v635 = vadd.f32 %v555, %v608
      %v636 = vadd.f32 %v556, %v631
      %637 = vrot.lane.b32.xlu0 %v354, 18
      %v638 = vpop.permute.xlu0 %637
      %639 = vrot.lane.b32.xlu0 %v355, 18
      %v640 = vpop.permute.xlu0 %639
      %vm641 = vcmask 146432
      %v642 = vsel %vm641, %v638, %v640
      %v646 = vmul.f32 %v198, %v638
      %v647 = vmul.f32 %v199, %v642
      %v648 = vmul.f32 %v214, %v640
      %v649 = vmul.f32 %v200, %v638
      %v650 = vmul.f32 %v201, %v642
      %v651 = vmul.f32 %v215, %v640
      %s652 = scalar_lea.vmem %s0, 80
      %v653 = vld [vmem:[%s652] sm:$0xff]
      %v654 = vld [vmem:[%s652 + $0x8] sm:$0xff]
      %661 = vrot.lane.b32.xlu0 %v646, 110
      %v662 = vpop.permute.xlu0 %661
      %663 = vrot.lane.b32.xlu0 %v647, 110
      %v664 = vpop.permute.xlu0 %663
      %665 = vrot.lane.b32.xlu0 %v648, 110
      %v666 = vpop.permute.xlu0 %665
      %667 = vrot.lane.b32.xlu0 %v649, 110
      %v668 = vpop.permute.xlu0 %667
      %669 = vrot.lane.b32.xlu0 %v650, 110
      %v670 = vpop.permute.xlu0 %669
      %671 = vrot.lane.b32.xlu0 %v651, 110
      %v672 = vpop.permute.xlu0 %671
      %vm673 = vcmask 900096
      %v674 = vsel %vm673, %v662, %v664
      %v675 = vsel %vm673, %v664, %v666
      %v676 = vsel %vm673, %v668, %v670
      %v677 = vsel %vm673, %v670, %v672
      %v683 = vsel %vm246, %v653, 0
      %v686 = vsel %vm246, %v654, 0
      %688 = vmatpush.msra.mxu0 0.0
      %689 = vmatpush.msra.mxu0 0.0
      %690 = vmatpush.msra.mxu0 0.0
      %691 = vmatpush.msra.mxu0 0.0
      %692 = vmatpush.msra.mxu0 0.0
      %693 = vmatpush.msra.mxu0 0.0
      %694 = vmatpush.msra.mxu0 0.0
      %695 = vmatpush.msra.mxu0 0.0
      %696 = vmatpush.msra.mxu0 0.0
      %697 = vmatpush.msra.mxu0 0.0
      %698 = vmatpush.msra.mxu0 0.0
      %699 = vmatpush.msra.mxu0 0.0
      %700 = vmatpush.msra.mxu0 0.0
      %701 = vmatpush.msra.mxu0 0.0
      %702 = vmatpush.msra.mxu0 %v676
      %703 = vmatpush.msra.mxu0 %v674
      %704 = vmatmul.f32.gmra.mxu0 %v683
      %v705 = vpop.f32.mrf.mxu0
      %v706 = vadd.f32 0.0, %v705
      %707 = vmatmul.f32.gmra.mxu0 %v686
      %v708 = vpop.f32.mrf.mxu0
      %v709 = vadd.f32 0.0, %v708
      %710 = vdwg.mxu0
      %711 = vmatpush.msra.mxu0 0.0
      %712 = vmatpush.msra.mxu0 0.0
      %713 = vmatpush.msra.mxu0 0.0
      %714 = vmatpush.msra.mxu0 0.0
      %715 = vmatpush.msra.mxu0 0.0
      %716 = vmatpush.msra.mxu0 0.0
      %717 = vmatpush.msra.mxu0 0.0
      %718 = vmatpush.msra.mxu0 0.0
      %719 = vmatpush.msra.mxu0 0.0
      %720 = vmatpush.msra.mxu0 0.0
      %721 = vmatpush.msra.mxu0 0.0
      %722 = vmatpush.msra.mxu0 0.0
      %723 = vmatpush.msra.mxu0 0.0
      %724 = vmatpush.msra.mxu0 0.0
      %725 = vmatpush.msra.mxu0 %v677
      %726 = vmatpush.msra.mxu0 %v675
      %727 = vmatmul.f32.gmra.mxu0 %v683
      %v728 = vpop.f32.mrf.mxu0
      %v729 = vadd.f32 0.0, %v728
      %730 = vmatmul.f32.gmra.mxu0 %v686
      %v731 = vpop.f32.mrf.mxu0
      %v732 = vadd.f32 0.0, %v731
      %733 = vdwg.mxu0
      %v734 = vadd.f32 %v633, %v706
      %v735 = vadd.f32 %v634, %v729
      %v736 = vadd.f32 %v635, %v709
      %v737 = vadd.f32 %v636, %v732
      %738 = vrot.lane.b32.xlu0 %v204, 32
      %v739 = vpop.permute.xlu0 %738
      %740 = vrot.lane.b32.xlu0 %v205, 32
      %v741 = vpop.permute.xlu0 %740
      %vm742 = vcmask 261120
      %v743 = vsel %vm742, %v739, %v741
      %v747 = vmul.f32 %v198, %v739
      %v748 = vmul.f32 %v199, %v743
      %v749 = vmul.f32 %v214, %v741
      %v750 = vmul.f32 %v200, %v739
      %v751 = vmul.f32 %v201, %v743
      %v752 = vmul.f32 %v215, %v741
      %s753 = scalar_lea.vmem %s0, 96
      %v754 = vld [vmem:[%s753] sm:$0xff]
      %v755 = vld [vmem:[%s753 + $0x8] sm:$0xff]
      %762 = vrot.lane.b32.xlu0 %v747, 96
      %v763 = vpop.permute.xlu0 %762
      %764 = vrot.lane.b32.xlu0 %v748, 96
      %v765 = vpop.permute.xlu0 %764
      %766 = vrot.lane.b32.xlu0 %v749, 96
      %v767 = vpop.permute.xlu0 %766
      %768 = vrot.lane.b32.xlu0 %v750, 96
      %v769 = vpop.permute.xlu0 %768
      %770 = vrot.lane.b32.xlu0 %v751, 96
      %v771 = vpop.permute.xlu0 %770
      %772 = vrot.lane.b32.xlu0 %v752, 96
      %v773 = vpop.permute.xlu0 %772
      %vm774 = vcmask 785408
      %v775 = vsel %vm774, %v763, %v765
      %v776 = vsel %vm774, %v765, %v767
      %v777 = vsel %vm774, %v769, %v771
      %v778 = vsel %vm774, %v771, %v773
      %v784 = vsel %vm246, %v754, 0
      %v787 = vsel %vm246, %v755, 0
      %789 = vmatpush.msra.mxu0 0.0
      %790 = vmatpush.msra.mxu0 0.0
      %791 = vmatpush.msra.mxu0 0.0
      %792 = vmatpush.msra.mxu0 0.0
      %793 = vmatpush.msra.mxu0 0.0
      %794 = vmatpush.msra.mxu0 0.0
      %795 = vmatpush.msra.mxu0 0.0
      %796 = vmatpush.msra.mxu0 0.0
      %797 = vmatpush.msra.mxu0 0.0
      %798 = vmatpush.msra.mxu0 0.0
      %799 = vmatpush.msra.mxu0 0.0
      %800 = vmatpush.msra.mxu0 0.0
      %801 = vmatpush.msra.mxu0 0.0
      %802 = vmatpush.msra.mxu0 0.0
      %803 = vmatpush.msra.mxu0 %v777
      %804 = vmatpush.msra.mxu0 %v775
      %805 = vmatmul.f32.gmra.mxu0 %v784
      %v806 = vpop.f32.mrf.mxu0
      %v807 = vadd.f32 0.0, %v806
      %808 = vmatmul.f32.gmra.mxu0 %v787
      %v809 = vpop.f32.mrf.mxu0
      %v810 = vadd.f32 0.0, %v809
      %811 = vdwg.mxu0
      %812 = vmatpush.msra.mxu0 0.0
      %813 = vmatpush.msra.mxu0 0.0
      %814 = vmatpush.msra.mxu0 0.0
      %815 = vmatpush.msra.mxu0 0.0
      %816 = vmatpush.msra.mxu0 0.0
      %817 = vmatpush.msra.mxu0 0.0
      %818 = vmatpush.msra.mxu0 0.0
      %819 = vmatpush.msra.mxu0 0.0
      %820 = vmatpush.msra.mxu0 0.0
      %821 = vmatpush.msra.mxu0 0.0
      %822 = vmatpush.msra.mxu0 0.0
      %823 = vmatpush.msra.mxu0 0.0
      %824 = vmatpush.msra.mxu0 0.0
      %825 = vmatpush.msra.mxu0 0.0
      %826 = vmatpush.msra.mxu0 %v778
      %827 = vmatpush.msra.mxu0 %v776
      %828 = vmatmul.f32.gmra.mxu0 %v784
      %v829 = vpop.f32.mrf.mxu0
      %v830 = vadd.f32 0.0, %v829
      %831 = vmatmul.f32.gmra.mxu0 %v787
      %v832 = vpop.f32.mrf.mxu0
      %v833 = vadd.f32 0.0, %v832
      %834 = vdwg.mxu0
      %v835 = vadd.f32 %v734, %v807
      %v836 = vadd.f32 %v735, %v830
      %v837 = vadd.f32 %v736, %v810
      %v838 = vadd.f32 %v737, %v833
      %s839 = scalar_lea.vmem %s0, 112
      %v840 = vld [vmem:[%s839] sm:$0xff]
      %v841 = vld [vmem:[%s839 + $0x8] sm:$0xff]
      %842 = vrot.lane.b32.xlu0 %v198, 95
      %v843 = vpop.permute.xlu0 %842
      %844 = vrot.lane.b32.xlu0 %v199, 95
      %v845 = vpop.permute.xlu0 %844
      %846 = vrot.lane.b32.xlu0 %v214, 95
      %v847 = vpop.permute.xlu0 %846
      %848 = vrot.lane.b32.xlu0 %v200, 95
      %v849 = vpop.permute.xlu0 %848
      %850 = vrot.lane.b32.xlu0 %v201, 95
      %v851 = vpop.permute.xlu0 %850
      %852 = vrot.lane.b32.xlu0 %v215, 95
      %v853 = vpop.permute.xlu0 %852
      %vm854 = vcmask 777216
      %v855 = vsel %vm854, %v843, %v845
      %v856 = vsel %vm854, %v845, %v847
      %v857 = vsel %vm854, %v849, %v851
      %v858 = vsel %vm854, %v851, %v853
      %v864 = vsel %vm246, %v840, 0
      %v867 = vsel %vm246, %v841, 0
      %869 = vmatpush.msra.mxu0 0.0
      %870 = vmatpush.msra.mxu0 0.0
      %871 = vmatpush.msra.mxu0 0.0
      %872 = vmatpush.msra.mxu0 0.0
      %873 = vmatpush.msra.mxu0 0.0
      %874 = vmatpush.msra.mxu0 0.0
      %875 = vmatpush.msra.mxu0 0.0
      %876 = vmatpush.msra.mxu0 0.0
      %877 = vmatpush.msra.mxu0 0.0
      %878 = vmatpush.msra.mxu0 0.0
      %879 = vmatpush.msra.mxu0 0.0
      %880 = vmatpush.msra.mxu0 0.0
      %881 = vmatpush.msra.mxu0 0.0
      %882 = vmatpush.msra.mxu0 0.0
      %883 = vmatpush.msra.mxu0 %v857
      %884 = vmatpush.msra.mxu0 %v855
      %885 = vmatmul.f32.gmra.mxu0 %v864
      %v886 = vpop.f32.mrf.mxu0
      %v887 = vadd.f32 0.0, %v886
      %888 = vmatmul.f32.gmra.mxu0 %v867
      %v889 = vpop.f32.mrf.mxu0
      %v890 = vadd.f32 0.0, %v889
      %891 = vdwg.mxu0
      %892 = vmatpush.msra.mxu0 0.0
      %893 = vmatpush.msra.mxu0 0.0
      %894 = vmatpush.msra.mxu0 0.0
      %895 = vmatpush.msra.mxu0 0.0
      %896 = vmatpush.msra.mxu0 0.0
      %897 = vmatpush.msra.mxu0 0.0
      %898 = vmatpush.msra.mxu0 0.0
      %899 = vmatpush.msra.mxu0 0.0
      %900 = vmatpush.msra.mxu0 0.0
      %901 = vmatpush.msra.mxu0 0.0
      %902 = vmatpush.msra.mxu0 0.0
      %903 = vmatpush.msra.mxu0 0.0
      %904 = vmatpush.msra.mxu0 0.0
      %905 = vmatpush.msra.mxu0 0.0
      %906 = vmatpush.msra.mxu0 %v858
      %907 = vmatpush.msra.mxu0 %v856
      %908 = vmatmul.f32.gmra.mxu0 %v864
      %v909 = vpop.f32.mrf.mxu0
      %v910 = vadd.f32 0.0, %v909
      %911 = vmatmul.f32.gmra.mxu0 %v867
      %v912 = vpop.f32.mrf.mxu0
      %v913 = vadd.f32 0.0, %v912
      %914 = vdwg.mxu0
      %v915 = vadd.f32 %v835, %v887
      %v916 = vadd.f32 %v836, %v910
      %v917 = vadd.f32 %v837, %v890
      %v918 = vadd.f32 %v838, %v913
      %919 = vrot.lane.b32.xlu0 %v354, 34
      %v920 = vpop.permute.xlu0 %919
      %921 = vrot.lane.b32.xlu0 %v355, 34
      %v922 = vpop.permute.xlu0 %921
      %vm923 = vcmask 277504
      %v924 = vsel %vm923, %v920, %v922
      %v928 = vmul.f32 %v198, %v920
      %v929 = vmul.f32 %v199, %v924
      %v930 = vmul.f32 %v214, %v922
      %v931 = vmul.f32 %v200, %v920
      %v932 = vmul.f32 %v201, %v924
      %v933 = vmul.f32 %v215, %v922
      %s934 = scalar_lea.vmem %s0, 128
      %v935 = vld [vmem:[%s934] sm:$0xff]
      %v936 = vld [vmem:[%s934 + $0x8] sm:$0xff]
      %943 = vrot.lane.b32.xlu0 %v928, 94
      %v944 = vpop.permute.xlu0 %943
      %945 = vrot.lane.b32.xlu0 %v929, 94
      %v946 = vpop.permute.xlu0 %945
      %947 = vrot.lane.b32.xlu0 %v930, 94
      %v948 = vpop.permute.xlu0 %947
      %949 = vrot.lane.b32.xlu0 %v931, 94
      %v950 = vpop.permute.xlu0 %949
      %951 = vrot.lane.b32.xlu0 %v932, 94
      %v952 = vpop.permute.xlu0 %951
      %953 = vrot.lane.b32.xlu0 %v933, 94
      %v954 = vpop.permute.xlu0 %953
      %vm955 = vcmask 769024
      %v956 = vsel %vm955, %v944, %v946
      %v957 = vsel %vm955, %v946, %v948
      %v958 = vsel %vm955, %v950, %v952
      %v959 = vsel %vm955, %v952, %v954
      %v965 = vsel %vm246, %v935, 0
      %v968 = vsel %vm246, %v936, 0
      %970 = vmatpush.msra.mxu0 0.0
      %971 = vmatpush.msra.mxu0 0.0
      %972 = vmatpush.msra.mxu0 0.0
      %973 = vmatpush.msra.mxu0 0.0
      %974 = vmatpush.msra.mxu0 0.0
      %975 = vmatpush.msra.mxu0 0.0
      %976 = vmatpush.msra.mxu0 0.0
      %977 = vmatpush.msra.mxu0 0.0
      %978 = vmatpush.msra.mxu0 0.0
      %979 = vmatpush.msra.mxu0 0.0
      %980 = vmatpush.msra.mxu0 0.0
      %981 = vmatpush.msra.mxu0 0.0
      %982 = vmatpush.msra.mxu0 0.0
      %983 = vmatpush.msra.mxu0 0.0
      %984 = vmatpush.msra.mxu0 %v958
      %985 = vmatpush.msra.mxu0 %v956
      %986 = vmatmul.f32.gmra.mxu0 %v965
      %v987 = vpop.f32.mrf.mxu0
      %v988 = vadd.f32 0.0, %v987
      %989 = vmatmul.f32.gmra.mxu0 %v968
      %v990 = vpop.f32.mrf.mxu0
      %v991 = vadd.f32 0.0, %v990
      %992 = vdwg.mxu0
      %993 = vmatpush.msra.mxu0 0.0
      %994 = vmatpush.msra.mxu0 0.0
      %995 = vmatpush.msra.mxu0 0.0
      %996 = vmatpush.msra.mxu0 0.0
      %997 = vmatpush.msra.mxu0 0.0
      %998 = vmatpush.msra.mxu0 0.0
      %999 = vmatpush.msra.mxu0 0.0
      %1000 = vmatpush.msra.mxu0 0.0
      %1001 = vmatpush.msra.mxu0 0.0
      %1002 = vmatpush.msra.mxu0 0.0
      %1003 = vmatpush.msra.mxu0 0.0
      %1004 = vmatpush.msra.mxu0 0.0
      %1005 = vmatpush.msra.mxu0 0.0
      %1006 = vmatpush.msra.mxu0 0.0
      %1007 = vmatpush.msra.mxu0 %v959
      %1008 = vmatpush.msra.mxu0 %v957
      %1009 = vmatmul.f32.gmra.mxu0 %v965
      %v1010 = vpop.f32.mrf.mxu0
      %v1011 = vadd.f32 0.0, %v1010
      %1012 = vmatmul.f32.gmra.mxu0 %v968
      %v1013 = vpop.f32.mrf.mxu0
      %v1014 = vadd.f32 0.0, %v1013
      %1015 = vdwg.mxu0
      %v1016 = vadd.f32 %v915, %v988
      %v1017 = vadd.f32 %v916, %v1011
      %v1018 = vadd.f32 %v917, %v991
      %v1019 = vadd.f32 %v918, %v1014
      %v1020 = vld [vmem:[%s1] sm:$0xff]
      %v1021 = vld [vmem:[%s1 + $0x8] sm:$0xff]
      %1023 = vset.pattern.permute.xlu0 0
      %1024 = vperm.xlu0 %1023, %v1020
      %v1025 = vpop.permute.xlu0 %1024
      %1028 = vset.pattern.permute.xlu0 0
      %1029 = vperm.xlu0 %1028, %v1021
      %v1030 = vpop.permute.xlu0 %1029
      %v1032 = vadd.f32 %v1016, %v1025
      %v1033 = vadd.f32 %v1017, %v1025
      %v1034 = vadd.f32 %v1018, %v1030
      %v1035 = vadd.f32 %v1019, %v1030
      %v1036 = vmax.f32 %v1032, 0.0
      %v1037 = vmax.f32 %v1033, 0.0
      %v1038 = vmax.f32 %v1034, 0.0
      %v1039 = vmax.f32 %v1035, 0.0
      %1040 = vst [vmem:[%s197] sm:$0xff] %v1036
      %1041 = vst [vmem:[%s197 + $0x8] sm:$0xff] %v1037
      %1042 = vst [vmem:[%s197 + $0x10] sm:$0xff] %v1038
      %1043 = vst [vmem:[%s197 + $0x18] sm:$0xff] %v1039
      %p1044 = scmp.lt.s32.totalorder %s15, 1
      %s1045 = scalar_select %p1044, %s15, 1
      %s1046 = smul.addr %s1045, 4
      %s1047 = smul.addr %s1046, 8
      %s1048 = scalar_lea.vmem %s4, %s1047
      // Predicated region
      $region37: #{_lambda_.4} parent=35 // pred_check
        %p1049 = pneg %p122
      $region38: #{_lambda_.4} parent=35 // pred_check_branch
        %1051 = sbr.rel (%p1049) target = $region40
      $region39: #{_lambda_.4} parent=35 // pred_region
        _
      $region40: #{_lambda_.4} parent=35 // pred_fallthru
        _
    $region36: #{_lambda_.4} parent=5 // pred_fallthru
      _
    %p1052 = scmp.le.s32.totalorder 2, %s10
    // Predicated region
    $region41: #{_lambda_.4} parent=5 // pred_check
      %p1053 = pneg %p1052
    $region42: #{_lambda_.4} parent=5 // pred_check_branch
      %1055 = sbr.rel (%p1053) target = $region44
    $region43: #{_lambda_.4} parent=5 // pred_region
      %s1056 = ssub.s32 %s10, 2
      // Predicated region
      $region45: #{_lambda_.4} parent=43 // pred_check
        %p1057 = pneg %p128
      $region46: #{_lambda_.4} parent=43 // pred_check_branch
        %1059 = sbr.rel (%p1057) target = $region48
      $region47: #{_lambda_.4} parent=43 // pred_region
        %p1060 = scmp.lt.s32.totalorder %s16, 1
        %s1061 = scalar_select %p1060, %s16, 1
        %s1062 = smul.addr %s1061, 4
        %s1063 = smul.addr %s1062, 8
        %s1064 = scalar_lea.vmem %s4, %s1063
      $region48: #{_lambda_.4} parent=43 // pred_fallthru
        _
    $region44: #{_lambda_.4} parent=5 // pred_fallthru
      _
  $region6: #{_lambda_.4} parent=0 // loop_footer
    %s14 = sadd.s32 1, %s10
  $region7: #{_lambda_.4} parent=0 // loop_footer_branch
    %9 = sbr.rel target = $region3
  $region8: #{_lambda_.4} parent=0 // loop_exit
    _

// kernel: _lambda_.5
$region0: #{_lambda_.5}
  #allocation0 [shape = 'u32[]', space=smem, size = 0x4, offset = 0x4, fixed_abs, tag = 'smem constant byte address 0x4 - core index']
  #allocation1 [shape = 'u32[72,128]{1,0:T(1,128)}', space=vmem, size = 0x9000, scoped, tag = 'internal scratch']
  %s0 = inlined_call_operand.vmem [shape: f32[9,16,16], index: 0, kind: input, shape index: {}]
  %s1 = inlined_call_operand.vmem [shape: f32[16,1], index: 1, kind: input, shape index: {}]
  %s2 = inlined_call_operand.vmem [shape: f32[3,256], index: 2, kind: input, shape index: {}]
  %s3 = inlined_call_operand.vmem [shape: f32[2,16,290], index: 3, kind: input, shape index: {}]
  %s4 = inlined_call_operand.vmem [shape: f32[2,16,256], index: 4, kind: output, shape index: {}]
  %s5 = sld [smem:[#allocation0]]
  $region49: #{_lambda_.5} parent=0
    _
  %s7 = ssub.s32 1, %s5
  %s8 = scalar_select 0, %s7, %s5
  loop: start=0, step=1, limit=4
  $region2: #{_lambda_.5} parent=0 // loop_pre_header
    _
  $region3: #{_lambda_.5} parent=0 // loop_header
    %s10 = sphi 0, %s14
    %p11 = scmp.ge.s32.totalorder %s10, 4
    %s18 = sphi 0, %s18
    %s20 = sphi 0, %s18
    %s21 = sphi 0, %s20
    %s35 = sphi 0, %s21
    %s39 = sphi 0, %s39
    %s41 = sphi 0, %s39
    %s42 = sphi 0, %s41
    %s56 = sphi 0, %s42
    %s60 = sphi 0, %s60
    %s62 = sphi 0, %s60
    %s63 = sphi 0, %s62
    %s77 = sphi 0, %s63
    %s83 = sphi 0, %s85
    %s86 = sphi 0, %s83
    %s87 = sphi 0, %s86
    %s103 = sphi 0, %s87
    %s109 = sphi 0, %s111
    %s112 = sphi 0, %s109
    %s113 = sphi 0, %s112
    %s129 = sphi 0, %s113
  $region4: #{_lambda_.5} parent=0 // loop_header_branch
    %13 = sbr.rel (%p11) target = $region8
  $region5: #{_lambda_.5} parent=0 // loop_body
    %s15 = ssub.s32 %s10, 1
    %s16 = ssub.s32 %s10, 2
    %s17 = sadd.s32 %s10, 1
    %s19 = sadd.s32 %s18, 1
    %p22 = scmp.eq.s32.totalorder %s10, 1
    %p23 = scmp.ne.s32.totalorder %s18, %s20
    %p24 = scmp.eq.s32.totalorder %s10, 0
    %p25 = por %p23, %p24
    %p26 = scmp.ne.s32.totalorder %s18, %s20
    %p27 = scmp.eq.s32.totalorder %s15, 1
    %p28 = por %p26, %p27
    %p29 = scmp.ne.s32.totalorder %s20, %s21
    %p30 = scmp.eq.s32.totalorder %s15, 0
    %p31 = por %p29, %p30
    %p32 = scmp.ne.s32.totalorder %s20, %s21
    %p33 = scmp.eq.s32.totalorder %s16, 1
    %p34 = por %p32, %p33
    %p36 = scmp.ne.s32.totalorder %s21, %s35
    %p37 = scmp.eq.s32.totalorder %s16, 0
    %p38 = por %p36, %p37
    %s40 = sadd.s32 %s39, 1
    %p43 = scmp.eq.s32.totalorder %s10, 1
    %p44 = scmp.ne.s32.totalorder %s39, %s41
    %p45 = scmp.eq.s32.totalorder %s10, 0
    %p46 = por %p44, %p45
    %p47 = scmp.ne.s32.totalorder %s39, %s41
    %p48 = scmp.eq.s32.totalorder %s15, 1
    %p49 = por %p47, %p48
    %p50 = scmp.ne.s32.totalorder %s41, %s42
    %p51 = scmp.eq.s32.totalorder %s15, 0
    %p52 = por %p50, %p51
    %p53 = scmp.ne.s32.totalorder %s41, %s42
    %p54 = scmp.eq.s32.totalorder %s16, 1
    %p55 = por %p53, %p54
    %p57 = scmp.ne.s32.totalorder %s42, %s56
    %p58 = scmp.eq.s32.totalorder %s16, 0
    %p59 = por %p57, %p58
    %s61 = sadd.s32 %s60, 1
    %p64 = scmp.eq.s32.totalorder %s10, 1
    %p65 = scmp.ne.s32.totalorder %s60, %s62
    %p66 = scmp.eq.s32.totalorder %s10, 0
    %p67 = por %p65, %p66
    %p68 = scmp.ne.s32.totalorder %s60, %s62
    %p69 = scmp.eq.s32.totalorder %s15, 1
    %p70 = por %p68, %p69
    %p71 = scmp.ne.s32.totalorder %s62, %s63
    %p72 = scmp.eq.s32.totalorder %s15, 0
    %p73 = por %p71, %p72
    %p74 = scmp.ne.s32.totalorder %s62, %s63
    %p75 = scmp.eq.s32.totalorder %s16, 1
    %p76 = por %p74, %p75
    %p78 = scmp.ne.s32.totalorder %s63, %s77
    %p79 = scmp.eq.s32.totalorder %s16, 0
    %p80 = por %p78, %p79
    %s81 = ssub.s32 %s10, %s17
    %p82 = scmp.eq.s32.totalorder %s81, 0
    %s84 = sadd.s32 %s83, 1
    %s85 = scalar_select %p82, %s83, %s84
    %p88 = pneg %p82
    %p89 = scmp.eq.s32.totalorder %s10, 1
    %p90 = por %p88, %p89
    %p91 = scmp.ne.s32.totalorder %s83, %s86
    %p92 = scmp.eq.s32.totalorder %s10, 0
    %p93 = por %p91, %p92
    %p94 = scmp.ne.s32.totalorder %s83, %s86
    %p95 = scmp.eq.s32.totalorder %s15, 1
    %p96 = por %p94, %p95
    %p97 = scmp.ne.s32.totalorder %s86, %s87
    %p98 = scmp.eq.s32.totalorder %s15, 0
    %p99 = por %p97, %p98
    %p100 = scmp.ne.s32.totalorder %s86, %s87
    %p101 = scmp.eq.s32.totalorder %s16, 1
    %p102 = por %p100, %p101
    %p104 = scmp.ne.s32.totalorder %s87, %s103
    %p105 = scmp.eq.s32.totalorder %s16, 0
    %p106 = por %p104, %p105
    %s107 = ssub.s32 %s10, %s17
    %p108 = scmp.eq.s32.totalorder %s107, 0
    %s110 = sadd.s32 %s109, 1
    %s111 = scalar_select %p108, %s109, %s110
    %p114 = pneg %p108
    %p115 = scmp.eq.s32.totalorder %s10, 1
    %p116 = por %p114, %p115
    %p117 = scmp.ne.s32.totalorder %s109, %s112
    %p118 = scmp.eq.s32.totalorder %s10, 0
    %p119 = por %p117, %p118
    %p120 = scmp.ne.s32.totalorder %s109, %s112
    %p121 = scmp.eq.s32.totalorder %s15, 1
    %p122 = por %p120, %p121
    %p123 = scmp.ne.s32.totalorder %s112, %s113
    %p124 = scmp.eq.s32.totalorder %s15, 0
    %p125 = por %p123, %p124
    %p126 = scmp.ne.s32.totalorder %s112, %s113
    %p127 = scmp.eq.s32.totalorder %s16, 1
    %p128 = por %p126, %p127
    %p130 = scmp.ne.s32.totalorder %s113, %s129
    %p131 = scmp.eq.s32.totalorder %s16, 0
    %p132 = por %p130, %p131
    %p133 = scmp.le.s32.totalorder 1, %s10
    %p134 = scmp.lt.s32.totalorder %s10, 3
    %p135 = pnand %p133, %p134
    %p136 = pneg %p135
    // Predicated region
    $region9: #{_lambda_.5} parent=5 // pred_check
      _
    $region10: #{_lambda_.5} parent=5 // pred_check_branch
      %138 = sbr.rel (%p135) target = $region12
    $region11: #{_lambda_.5} parent=5 // pred_region
      %s139 = ssub.s32 %s10, 1
      // Predicated region
      $region13: #{_lambda_.5} parent=11 // pred_check
        %p140 = pneg %p31
      $region14: #{_lambda_.5} parent=11 // pred_check_branch
        %142 = sbr.rel (%p140) target = $region16
      $region15: #{_lambda_.5} parent=11 // pred_region
        _
      $region16: #{_lambda_.5} parent=11 // pred_fallthru
        _
      // Predicated region
      $region17: #{_lambda_.5} parent=11 // pred_check
        %p143 = pneg %p52
      $region18: #{_lambda_.5} parent=11 // pred_check_branch
        %145 = sbr.rel (%p143) target = $region20
      $region19: #{_lambda_.5} parent=11 // pred_region
        _
      $region20: #{_lambda_.5} parent=11 // pred_fallthru
        _
      // Predicated region
      $region21: #{_lambda_.5} parent=11 // pred_check
        %p146 = pneg %p73
      $region22: #{_lambda_.5} parent=11 // pred_check_branch
        %148 = sbr.rel (%p146) target = $region24
      $region23: #{_lambda_.5} parent=11 // pred_region
        _
      $region24: #{_lambda_.5} parent=11 // pred_fallthru
        _
    $region12: #{_lambda_.5} parent=5 // pred_fallthru
      _
    %p149 = scmp.lt.s32.totalorder %s10, 2
    // Predicated region
    $region25: #{_lambda_.5} parent=5 // pred_check
      %p150 = pneg %p149
    $region26: #{_lambda_.5} parent=5 // pred_check_branch
      %152 = sbr.rel (%p150) target = $region28
    $region27: #{_lambda_.5} parent=5 // pred_region
      // Predicated region
      $region29: #{_lambda_.5} parent=27 // pred_check
        %p153 = pneg %p93
      $region30: #{_lambda_.5} parent=27 // pred_check_branch
        %155 = sbr.rel (%p153) target = $region32
      $region31: #{_lambda_.5} parent=27 // pred_region
        %p156 = scmp.lt.s32.totalorder %s10, 1
        %s157 = scalar_select %p156, %s10, 1
        %s158 = smul.addr %s157, 6
        %s159 = smul.addr %s158, 8
        %s160 = scalar_lea.vmem %s3, %s159
      $region32: #{_lambda_.5} parent=27 // pred_fallthru
        _
    $region28: #{_lambda_.5} parent=5 // pred_fallthru
      _
    %p161 = scmp.le.s32.totalorder 1, %s10
    %p162 = scmp.lt.s32.totalorder %s10, 3
    %p163 = pnand %p161, %p162
    %p164 = pneg %p163
    // Predicated region
    $region33: #{_lambda_.5} parent=5 // pred_check
      _
    $region34: #{_lambda_.5} parent=5 // pred_check_branch
      %166 = sbr.rel (%p163) target = $region36
    $region35: #{_lambda_.5} parent=5 // pred_region
      %s167 = ssub.s32 %s10, 1
      %p168 = pneg %p31
      %p169 = pneg %p28
      %p170 = pneg %p52
      %p171 = pneg %p49
      %p172 = pneg %p73
      %p173 = pneg %p70
      %p174 = scmp.lt.s32.totalorder %s15, 1
      %s175 = scalar_select %p174, %s15, 1
      %s176 = smul.addr %s175, 6
      %s177 = smul.addr %s176, 8
      %s178 = scalar_lea.vmem %s3, %s177
      %p179 = pneg %p99
      %p180 = pneg %p96
      %p181 = pneg %p125
      %p182 = pneg %p122
      %p183 = scmp.lt.s32.totalorder %s15, 1
      %s184 = scalar_select %p183, %s15, 1
      %s185 = smul.addr %s184, 4
      %s186 = smul.addr %s185, 8
      %s187 = scalar_lea.vmem %s4, %s186
      %p188 = scmp.lt.s32.totalorder %s15, 1
      %s189 = scalar_select %p188, %s15, 1
      %s190 = smul.addr %s189, 6
      %s191 = smul.addr %s190, 8
      %s192 = scalar_lea.vmem %s3, %s191
      %p193 = scmp.lt.s32.totalorder %s15, 1
      %s194 = scalar_select %p193, %s15, 1
      %s195 = smul.addr %s194, 4
      %s196 = smul.addr %s195, 8
      %s197 = scalar_lea.vmem %s4, %s196
      %v198 = vld [vmem:[%s192] sm:$0xff]
      %v199 = vld [vmem:[%s192 + $0x8] sm:$0xff]
      %v200 = vld [vmem:[%s192 + $0x18] sm:$0xff]
      %v201 = vld [vmem:[%s192 + $0x20] sm:$0xff]
      %v202 = vld [vmem:[%s2] ss:$4 sm:$0x3]
      %v204 = vperm.slane %v202, 0
      %v205 = vperm.slane %v202, 1
      %v208 = vmul.f32 %v198, %v204
      %v209 = vmul.f32 %v199, %v205
      %v210 = vmul.f32 %v200, %v204
      %v211 = vmul.f32 %v201, %v205
      %v212 = vld [vmem:[%s0] sm:$0xff]
      %v213 = vld [vmem:[%s0 + $0x8] sm:$0xff]
      %v214 = vld [vmem:[%s192 + $0x10] sm:$0xff]
      %v215 = vld [vmem:[%s192 + $0x28] sm:$0xff]
      %s216 = scalar_lea.vmem %s0, 16
      %v217 = vld [vmem:[%s216] sm:$0xff]
      %v218 = vld [vmem:[%s216 + $0x8] sm:$0xff]
      %225 = vrot.lane.b32.xlu0 %v198, 127
      %v226 = vpop.permute.xlu0 %225
      %227 = vrot.lane.b32.xlu0 %v199, 127
      %v228 = vpop.permute.xlu0 %227
      %229 = vrot.lane.b32.xlu0 %v214, 127
      %v230 = vpop.permute.xlu0 %229
      %231 = vrot.lane.b32.xlu0 %v200, 127
      %v232 = vpop.permute.xlu0 %231
      %233 = vrot.lane.b32.xlu0 %v201, 127
      %v234 = vpop.permute.xlu0 %233
      %235 = vrot.lane.b32.xlu0 %v215, 127
      %v236 = vpop.permute.xlu0 %235
      %vm237 = vcmask 1039360
      %v238 = vsel %vm237, %v226, %v228
      %v239 = vsel %vm237, %v228, %v230
      %v240 = vsel %vm237, %v232, %v234
      %v241 = vsel %vm237, %v234, %v236
      %vm246 = vcmask 130048
      %v248 = vsel %vm246, %v217, 0
      %v251 = vsel %vm246, %v218, 0
      %253 = vmatpush.msra.mxu0 0.0
      %254 = vmatpush.msra.mxu0 0.0
      %255 = vmatpush.msra.mxu0 0.0
      %256 = vmatpush.msra.mxu0 0.0
      %257 = vmatpush.msra.mxu0 0.0
      %258 = vmatpush.msra.mxu0 0.0
      %259 = vmatpush.msra.mxu0 0.0
      %260 = vmatpush.msra.mxu0 0.0
      %261 = vmatpush.msra.mxu0 0.0
      %262 = vmatpush.msra.mxu0 0.0
      %263 = vmatpush.msra.mxu0 0.0
      %264 = vmatpush.msra.mxu0 0.0
      %265 = vmatpush.msra.mxu0 0.0
      %266 = vmatpush.msra.mxu0 0.0
      %267 = vmatpush.msra.mxu0 %v240
      %268 = vmatpush.msra.mxu0 %v238
      %269 = vmatmul.f32.gmra.mxu0 %v248
      %v270 = vpop.f32.mrf.mxu0
      %v271 = vadd.f32 0.0, %v270
      %272 = vmatmul.f32.gmra.mxu0 %v251
      %v273 = vpop.f32.mrf.mxu0
      %v274 = vadd.f32 0.0, %v273
      %275 = vdwg.mxu0
      %276 = vmatpush.msra.mxu0 0.0
      %277 = vmatpush.msra.mxu0 0.0
      %278 = vmatpush.msra.mxu0 0.0
      %279 = vmatpush.msra.mxu0 0.0
      %280 = vmatpush.msra.mxu0 0.0
      %281 = vmatpush.msra.mxu0 0.0
      %282 = vmatpush.msra.mxu0 0.0
      %283 = vmatpush.msra.mxu0 0.0
      %284 = vmatpush.msra.mxu0 0.0
      %285 = vmatpush.msra.mxu0 0.0
      %286 = vmatpush.msra.mxu0 0.0
      %287 = vmatpush.msra.mxu0 0.0
      %288 = vmatpush.msra.mxu0 0.0
      %289 = vmatpush.msra.mxu0 0.0
      %290 = vmatpush.msra.mxu0 %v241
      %291 = vmatpush.msra.mxu0 %v239
      %292 = vmatmul.f32.gmra.mxu0 %v248
      %v293 = vpop.f32.mrf.mxu0
      %v294 = vadd.f32 0.0, %v293
      %295 = vmatmul.f32.gmra.mxu0 %v251
      %v296 = vpop.f32.mrf.mxu0
      %v297 = vadd.f32 0.0, %v296
      %298 = vdwg.mxu0
      %v300 = vsel %vm246, %v212, 0
      %v303 = vsel %vm246, %v213, 0
      %305 = vmatpush.msra.mxu0 0.0
      %306 = vmatpush.msra.mxu0 0.0
      %307 = vmatpush.msra.mxu0 0.0
      %308 = vmatpush.msra.mxu0 0.0
      %309 = vmatpush.msra.mxu0 0.0
      %310 = vmatpush.msra.mxu0 0.0
      %311 = vmatpush.msra.mxu0 0.0
      %312 = vmatpush.msra.mxu0 0.0
      %313 = vmatpush.msra.mxu0 0.0
      %314 = vmatpush.msra.mxu0 0.0
      %315 = vmatpush.msra.mxu0 0.0
      %316 = vmatpush.msra.mxu0 0.0
      %317 = vmatpush.msra.mxu0 0.0
      %318 = vmatpush.msra.mxu0 0.0
      %319 = vmatpush.msra.mxu0 %v210
      %320 = vmatpush.msra.mxu0 %v208
      %321 = vmatmul.f32.gmra.mxu0 %v300
      %v322 = vpop.f32.mrf.mxu0
      %v323 = vadd.f32 %v271, %v322
      %324 = vmatmul.f32.gmra.mxu0 %v303
      %v325 = vpop.f32.mrf.mxu0
      %v326 = vadd.f32 %v274, %v325
      %327 = vdwg.mxu0
      %328 = vmatpush.msra.mxu0 0.0
      %329 = vmatpush.msra.mxu0 0.0
      %330 = vmatpush.msra.mxu0 0.0
      %331 = vmatpush.msra.mxu0 0.0
      %332 = vmatpush.msra.mxu0 0.0
      %333 = vmatpush.msra.mxu0 0.0
      %334 = vmatpush.msra.mxu0 0.0
      %335 = vmatpush.msra.mxu0 0.0
      %336 = vmatpush.msra.mxu0 0.0
      %337 = vmatpush.msra.mxu0 0.0
      %338 = vmatpush.msra.mxu0 0.0
      %339 = vmatpush.msra.mxu0 0.0
      %340 = vmatpush.msra.mxu0 0.0
      %341 = vmatpush.msra.mxu0 0.0
      %342 = vmatpush.msra.mxu0 %v211
      %343 = vmatpush.msra.mxu0 %v209
      %344 = vmatmul.f32.gmra.mxu0 %v300
      %v345 = vpop.f32.mrf.mxu0
      %v346 = vadd.f32 %v294, %v345
      %347 = vmatmul.f32.gmra.mxu0 %v303
      %v348 = vpop.f32.mrf.mxu0
      %v349 = vadd.f32 %v297, %v348
      %350 = vdwg.mxu0
      %s351 = scalar_lea.vmem %s2, 2
      %v352 = vld [vmem:[%s351] ss:$4 sm:$0x3]
      %v354 = vperm.slane %v352, 0
      %v355 = vperm.slane %v352, 1
      %356 = vrot.lane.b32.xlu0 %v354, 2
      %v357 = vpop.permute.xlu0 %356
      %358 = vrot.lane.b32.xlu0 %v355, 2
      %v359 = vpop.permute.xlu0 %358
      %vm360 = vcmask 15360
      %v361 = vsel %vm360, %v357, %v359
      %v365 = vmul.f32 %v198, %v357
      %v366 = vmul.f32 %v199, %v361
      %v367 = vmul.f32 %v214, %v359
      %v368 = vmul.f32 %v200, %v357
      %v369 = vmul.f32 %v201, %v361
      %v370 = vmul.f32 %v215, %v359
      %s371 = scalar_lea.vmem %s0, 32
      %v372 = vld [vmem:[%s371] sm:$0xff]
      %v373 = vld [vmem:[%s371 + $0x8] sm:$0xff]
      %380 = vrot.lane.b32.xlu0 %v365, 126
      %v381 = vpop.permute.xlu0 %380
      %382 = vrot.lane.b32.xlu0 %v366, 126
      %v383 = vpop.permute.xlu0 %382
      %384 = vrot.lane.b32.xlu0 %v367, 126
      %v385 = vpop.permute.xlu0 %384
      %386 = vrot.lane.b32.xlu0 %v368, 126
      %v387 = vpop.permute.xlu0 %386
      %388 = vrot.lane.b32.xlu0 %v369, 126
      %v389 = vpop.permute.xlu0 %388
      %390 = vrot.lane.b32.xlu0 %v370, 126
      %v391 = vpop.permute.xlu0 %390
      %vm392 = vcmask 1031168
      %v393 = vsel %vm392, %v381, %v383
      %v394 = vsel %vm392, %v383, %v385
      %v395 = vsel %vm392, %v387, %v389
      %v396 = vsel %vm392, %v389, %v391
      %v402 = vsel %vm246, %v372, 0
      %v405 = vsel %vm246, %v373, 0
      %407 = vmatpush.msra.mxu0 0.0
      %408 = vmatpush.msra.mxu0 0.0
      %409 = vmatpush.msra.mxu0 0.0
      %410 = vmatpush.msra.mxu0 0.0
      %411 = vmatpush.msra.mxu0 0.0
      %412 = vmatpush.msra.mxu0 0.0
      %413 = vmatpush.msra.mxu0 0.0
      %414 = vmatpush.msra.mxu0 0.0
      %415 = vmatpush.msra.mxu0 0.0
      %416 = vmatpush.msra.mxu0 0.0
      %417 = vmatpush.msra.mxu0 0.0
      %418 = vmatpush.msra.mxu0 0.0
      %419 = vmatpush.msra.mxu0 0.0
      %420 = vmatpush.msra.mxu0 0.0
      %421 = vmatpush.msra.mxu0 %v395
      %422 = vmatpush.msra.mxu0 %v393
      %423 = vmatmul.f32.gmra.mxu0 %v402
      %v424 = vpop.f32.mrf.mxu0
      %v425 = vadd.f32 0.0, %v424
      %426 = vmatmul.f32.gmra.mxu0 %v405
      %v427 = vpop.f32.mrf.mxu0
      %v428 = vadd.f32 0.0, %v427
      %429 = vdwg.mxu0
      %430 = vmatpush.msra.mxu0 0.0
      %431 = vmatpush.msra.mxu0 0.0
      %432 = vmatpush.msra.mxu0 0.0
      %433 = vmatpush.msra.mxu0 0.0
      %434 = vmatpush.msra.mxu0 0.0
      %435 = vmatpush.msra.mxu0 0.0
      %436 = vmatpush.msra.mxu0 0.0
      %437 = vmatpush.msra.mxu0 0.0
      %438 = vmatpush.msra.mxu0 0.0
      %439 = vmatpush.msra.mxu0 0.0
      %440 = vmatpush.msra.mxu0 0.0
      %441 = vmatpush.msra.mxu0 0.0
      %442 = vmatpush.msra.mxu0 0.0
      %443 = vmatpush.msra.mxu0 0.0
      %444 = vmatpush.msra.mxu0 %v396
      %445 = vmatpush.msra.mxu0 %v394
      %446 = vmatmul.f32.gmra.mxu0 %v402
      %v447 = vpop.f32.mrf.mxu0
      %v448 = vadd.f32 0.0, %v447
      %449 = vmatmul.f32.gmra.mxu0 %v405
      %v450 = vpop.f32.mrf.mxu0
      %v451 = vadd.f32 0.0, %v450
      %452 = vdwg.mxu0
      %v453 = vadd.f32 %v323, %v425
      %v454 = vadd.f32 %v346, %v448
      %v455 = vadd.f32 %v326, %v428
      %v456 = vadd.f32 %v349, %v451
      %457 = vrot.lane.b32.xlu0 %v204, 16
      %v458 = vpop.permute.xlu0 %457
      %459 = vrot.lane.b32.xlu0 %v205, 16
      %v460 = vpop.permute.xlu0 %459
      %v461 = vsel %vm246, %v458, %v460
      %v465 = vmul.f32 %v198, %v458
      %v466 = vmul.f32 %v199, %v461
      %v467 = vmul.f32 %v214, %v460
      %v468 = vmul.f32 %v200, %v458
      %v469 = vmul.f32 %v201, %v461
      %v470 = vmul.f32 %v215, %v460
      %s471 = scalar_lea.vmem %s0, 48
      %v472 = vld [vmem:[%s471] sm:$0xff]
      %v473 = vld [vmem:[%s471 + $0x8] sm:$0xff]
      %480 = vrot.lane.b32.xlu0 %v465, 112
      %v481 = vpop.permute.xlu0 %480
      %482 = vrot.lane.b32.xlu0 %v466, 112
      %v483 = vpop.permute.xlu0 %482
      %484 = vrot.lane.b32.xlu0 %v467, 112
      %v485 = vpop.permute.xlu0 %484
      %486 = vrot.lane.b32.xlu0 %v468, 112
      %v487 = vpop.permute.xlu0 %486
      %488 = vrot.lane.b32.xlu0 %v469, 112
      %v489 = vpop.permute.xlu0 %488
      %490 = vrot.lane.b32.xlu0 %v470, 112
      %v491 = vpop.permute.xlu0 %490
      %vm492 = vcmask 916480
      %v493 = vsel %vm492, %v481, %v483
      %v494 = vsel %vm492, %v483, %v485
      %v495 = vsel %vm492, %v487, %v489
      %v496 = vsel %vm492, %v489, %v491
      %v502 = vsel %vm246, %v472, 0
      %v505 = vsel %vm246, %v473, 0
      %507 = vmatpush.msra.mxu0 0.0
      %508 = vmatpush.msra.mxu0 0.0
      %509 = vmatpush.msra.mxu0 0.0
      %510 = vmatpush.msra.mxu0 0.0
      %511 = vmatpush.msra.mxu0 0.0
      %512 = vmatpush.msra.mxu0 0.0
      %513 = vmatpush.msra.mxu0 0.0
      %514 = vmatpush.msra.mxu0 0.0
      %515 = vmatpush.msra.mxu0 0.0
      %516 = vmatpush.msra.mxu0 0.0
      %517 = vmatpush.msra.mxu0 0.0
      %518 = vmatpush.msra.mxu0 0.0
      %519 = vmatpush.msra.mxu0 0.0
      %520 = vmatpush.msra.mxu0 0.0
      %521 = vmatpush.msra.mxu0 %v495
      %522 = vmatpush.msra.mxu0 %v493
      %523 = vmatmul.f32.gmra.mxu0 %v502
      %v524 = vpop.f32.mrf.mxu0
      %v525 = vadd.f32 0.0, %v524
      %526 = vmatmul.f32.gmra.mxu0 %v505
      %v527 = vpop.f32.mrf.mxu0
      %v528 = vadd.f32 0.0, %v527
      %529 = vdwg.mxu0
      %530 = vmatpush.msra.mxu0 0.0
      %531 = vmatpush.msra.mxu0 0.0
      %532 = vmatpush.msra.mxu0 0.0
      %533 = vmatpush.msra.mxu0 0.0
      %534 = vmatpush.msra.mxu0 0.0
      %535 = vmatpush.msra.mxu0 0.0
      %536 = vmatpush.msra.mxu0 0.0
      %537 = vmatpush.msra.mxu0 0.0
      %538 = vmatpush.msra.mxu0 0.0
      %539 = vmatpush.msra.mxu0 0.0
      %540 = vmatpush.msra.mxu0 0.0
      %541 = vmatpush.msra.mxu0 0.0
      %542 = vmatpush.msra.mxu0 0.0
      %543 = vmatpush.msra.mxu0 0.0
      %544 = vmatpush.msra.mxu0 %v496
      %545 = vmatpush.msra.mxu0 %v494
      %546 = vmatmul.f32.gmra.mxu0 %v502
      %v547 = vpop.f32.mrf.mxu0
      %v548 = vadd.f32 0.0, %v547
      %549 = vmatmul.f32.gmra.mxu0 %v505
      %v550 = vpop.f32.mrf.mxu0
      %v551 = vadd.f32 0.0, %v550
      %552 = vdwg.mxu0
      %v553 = vadd.f32 %v453, %v525
      %v554 = vadd.f32 %v454, %v548
      %v555 = vadd.f32 %v455, %v528
      %v556 = vadd.f32 %v456, %v551
      %s557 = scalar_lea.vmem %s0, 64
      %v558 = vld [vmem:[%s557] sm:$0xff]
      %v559 = vld [vmem:[%s557 + $0x8] sm:$0xff]
      %560 = vrot.lane.b32.xlu0 %v198, 111
      %v561 = vpop.permute.xlu0 %560
      %562 = vrot.lane.b32.xlu0 %v199, 111
      %v563 = vpop.permute.xlu0 %562
      %564 = vrot.lane.b32.xlu0 %v214, 111
      %v565 = vpop.permute.xlu0 %564
      %566 = vrot.lane.b32.xlu0 %v200, 111
      %v567 = vpop.permute.xlu0 %566
      %568 = vrot.lane.b32.xlu0 %v201, 111
      %v569 = vpop.permute.xlu0 %568
      %570 = vrot.lane.b32.xlu0 %v215, 111
      %v571 = vpop.permute.xlu0 %570
      %vm572 = vcmask 908288
      %v573 = vsel %vm572, %v561, %v563
      %v574 = vsel %vm572, %v563, %v565
      %v575 = vsel %vm572, %v567, %v569
      %v576 = vsel %vm572, %v569, %v571
      %v582 = vsel %vm246, %v558, 0
      %v585 = vsel %vm246, %v559, 0
      %587 = vmatpush.msra.mxu0 0.0
      %588 = vmatpush.msra.mxu0 0.0
      %589 = vmatpush.msra.mxu0 0.0
      %590 = vmatpush.msra.mxu0 0.0
      %591 = vmatpush.msra.mxu0 0.0
      %592 = vmatpush.msra.mxu0 0.0
      %593 = vmatpush.msra.mxu0 0.0
      %594 = vmatpush.msra.mxu0 0.0
      %595 = vmatpush.msra.mxu0 0.0
      %596 = vmatpush.msra.mxu0 0.0
      %597 = vmatpush.msra.mxu0 0.0
      %598 = vmatpush.msra.mxu0 0.0
      %599 = vmatpush.msra.mxu0 0.0
      %600 = vmatpush.msra.mxu0 0.0
      %601 = vmatpush.msra.mxu0 %v575
      %602 = vmatpush.msra.mxu0 %v573
      %603 = vmatmul.f32.gmra.mxu0 %v582
      %v604 = vpop.f32.mrf.mxu0
      %v605 = vadd.f32 0.0, %v604
      %606 = vmatmul.f32.gmra.mxu0 %v585
      %v607 = vpop.f32.mrf.mxu0
      %v608 = vadd.f32 0.0, %v607
      %609 = vdwg.mxu0
      %610 = vmatpush.msra.mxu0 0.0
      %611 = vmatpush.msra.mxu0 0.0
      %612 = vmatpush.msra.mxu0 0.0
      %613 = vmatpush.msra.mxu0 0.0
      %614 = vmatpush.msra.mxu0 0.0
      %615 = vmatpush.msra.mxu0 0.0
      %616 = vmatpush.msra.mxu0 0.0
      %617 = vmatpush.msra.mxu0 0.0
      %618 = vmatpush.msra.mxu0 0.0
      %619 = vmatpush.msra.mxu0 0.0
      %620 = vmatpush.msra.mxu0 0.0
      %621 = vmatpush.msra.mxu0 0.0
      %622 = vmatpush.msra.mxu0 0.0
      %623 = vmatpush.msra.mxu0 0.0
      %624 = vmatpush.msra.mxu0 %v576
      %625 = vmatpush.msra.mxu0 %v574
      %626 = vmatmul.f32.gmra.mxu0 %v582
      %v627 = vpop.f32.mrf.mxu0
      %v628 = vadd.f32 0.0, %v627
      %629 = vmatmul.f32.gmra.mxu0 %v585
      %v630 = vpop.f32.mrf.mxu0
      %v631 = vadd.f32 0.0, %v630
      %632 = vdwg.mxu0
      %v633 = vadd.f32 %v553, %v605
      %v634 = vadd.f32 %v554, %v628
      %v635 = vadd.f32 %v555, %v608
      %v636 = vadd.f32 %v556, %v631
      %637 = vrot.lane.b32.xlu0 %v354, 18
      %v638 = vpop.permute.xlu0 %637
      %639 = vrot.lane.b32.xlu0 %v355, 18
      %v640 = vpop.permute.xlu0 %639
      %vm641 = vcmask 146432
      %v642 = vsel %vm641, %v638, %v640
      %v646 = vmul.f32 %v198, %v638
      %v647 = vmul.f32 %v199, %v642
      %v648 = vmul.f32 %v214, %v640
      %v649 = vmul.f32 %v200, %v638
      %v650 = vmul.f32 %v201, %v642
      %v651 = vmul.f32 %v215, %v640
      %s652 = scalar_lea.vmem %s0, 80
      %v653 = vld [vmem:[%s652] sm:$0xff]
      %v654 = vld [vmem:[%s652 + $0x8] sm:$0xff]
      %661 = vrot.lane.b32.xlu0 %v646, 110
      %v662 = vpop.permute.xlu0 %661
      %663 = vrot.lane.b32.xlu0 %v647, 110
      %v664 = vpop.permute.xlu0 %663
      %665 = vrot.lane.b32.xlu0 %v648, 110
      %v666 = vpop.permute.xlu0 %665
      %667 = vrot.lane.b32.xlu0 %v649, 110
      %v668 = vpop.permute.xlu0 %667
      %669 = vrot.lane.b32.xlu0 %v650, 110
      %v670 = vpop.permute.xlu0 %669
      %671 = vrot.lane.b32.xlu0 %v651, 110
      %v672 = vpop.permute.xlu0 %671
      %vm673 = vcmask 900096
      %v674 = vsel %vm673, %v662, %v664
      %v675 = vsel %vm673, %v664, %v666
      %v676 = vsel %vm673, %v668, %v670
      %v677 = vsel %vm673, %v670, %v672
      %v683 = vsel %vm246, %v653, 0
      %v686 = vsel %vm246, %v654, 0
      %688 = vmatpush.msra.mxu0 0.0
      %689 = vmatpush.msra.mxu0 0.0
      %690 = vmatpush.msra.mxu0 0.0
      %691 = vmatpush.msra.mxu0 0.0
      %692 = vmatpush.msra.mxu0 0.0
      %693 = vmatpush.msra.mxu0 0.0
      %694 = vmatpush.msra.mxu0 0.0
      %695 = vmatpush.msra.mxu0 0.0
      %696 = vmatpush.msra.mxu0 0.0
      %697 = vmatpush.msra.mxu0 0.0
      %698 = vmatpush.msra.mxu0 0.0
      %699 = vmatpush.msra.mxu0 0.0
      %700 = vmatpush.msra.mxu0 0.0
      %701 = vmatpush.msra.mxu0 0.0
      %702 = vmatpush.msra.mxu0 %v676
      %703 = vmatpush.msra.mxu0 %v674
      %704 = vmatmul.f32.gmra.mxu0 %v683
      %v705 = vpop.f32.mrf.mxu0
      %v706 = vadd.f32 0.0, %v705
      %707 = vmatmul.f32.gmra.mxu0 %v686
      %v708 = vpop.f32.mrf.mxu0
      %v709 = vadd.f32 0.0, %v708
      %710 = vdwg.mxu0
      %711 = vmatpush.msra.mxu0 0.0
      %712 = vmatpush.msra.mxu0 0.0
      %713 = vmatpush.msra.mxu0 0.0
      %714 = vmatpush.msra.mxu0 0.0
      %715 = vmatpush.msra.mxu0 0.0
      %716 = vmatpush.msra.mxu0 0.0
      %717 = vmatpush.msra.mxu0 0.0
      %718 = vmatpush.msra.mxu0 0.0
      %719 = vmatpush.msra.mxu0 0.0
      %720 = vmatpush.msra.mxu0 0.0
      %721 = vmatpush.msra.mxu0 0.0
      %722 = vmatpush.msra.mxu0 0.0
      %723 = vmatpush.msra.mxu0 0.0
      %724 = vmatpush.msra.mxu0 0.0
      %725 = vmatpush.msra.mxu0 %v677
      %726 = vmatpush.msra.mxu0 %v675
      %727 = vmatmul.f32.gmra.mxu0 %v683
      %v728 = vpop.f32.mrf.mxu0
      %v729 = vadd.f32 0.0, %v728
      %730 = vmatmul.f32.gmra.mxu0 %v686
      %v731 = vpop.f32.mrf.mxu0
      %v732 = vadd.f32 0.0, %v731
      %733 = vdwg.mxu0
      %v734 = vadd.f32 %v633, %v706
      %v735 = vadd.f32 %v634, %v729
      %v736 = vadd.f32 %v635, %v709
      %v737 = vadd.f32 %v636, %v732
      %738 = vrot.lane.b32.xlu0 %v204, 32
      %v739 = vpop.permute.xlu0 %738
      %740 = vrot.lane.b32.xlu0 %v205, 32
      %v741 = vpop.permute.xlu0 %740
      %vm742 = vcmask 261120
      %v743 = vsel %vm742, %v739, %v741
      %v747 = vmul.f32 %v198, %v739
      %v748 = vmul.f32 %v199, %v743
      %v749 = vmul.f32 %v214, %v741
      %v750 = vmul.f32 %v200, %v739
      %v751 = vmul.f32 %v201, %v743
      %v752 = vmul.f32 %v215, %v741
      %s753 = scalar_lea.vmem %s0, 96
      %v754 = vld [vmem:[%s753] sm:$0xff]
      %v755 = vld [vmem:[%s753 + $0x8] sm:$0xff]
      %762 = vrot.lane.b32.xlu0 %v747, 96
      %v763 = vpop.permute.xlu0 %762
      %764 = vrot.lane.b32.xlu0 %v748, 96
      %v765 = vpop.permute.xlu0 %764
      %766 = vrot.lane.b32.xlu0 %v749, 96
      %v767 = vpop.permute.xlu0 %766
      %768 = vrot.lane.b32.xlu0 %v750, 96
      %v769 = vpop.permute.xlu0 %768
      %770 = vrot.lane.b32.xlu0 %v751, 96
      %v771 = vpop.permute.xlu0 %770
      %772 = vrot.lane.b32.xlu0 %v752, 96
      %v773 = vpop.permute.xlu0 %772
      %vm774 = vcmask 785408
      %v775 = vsel %vm774, %v763, %v765
      %v776 = vsel %vm774, %v765, %v767
      %v777 = vsel %vm774, %v769, %v771
      %v778 = vsel %vm774, %v771, %v773
      %v784 = vsel %vm246, %v754, 0
      %v787 = vsel %vm246, %v755, 0
      %789 = vmatpush.msra.mxu0 0.0
      %790 = vmatpush.msra.mxu0 0.0
      %791 = vmatpush.msra.mxu0 0.0
      %792 = vmatpush.msra.mxu0 0.0
      %793 = vmatpush.msra.mxu0 0.0
      %794 = vmatpush.msra.mxu0 0.0
      %795 = vmatpush.msra.mxu0 0.0
      %796 = vmatpush.msra.mxu0 0.0
      %797 = vmatpush.msra.mxu0 0.0
      %798 = vmatpush.msra.mxu0 0.0
      %799 = vmatpush.msra.mxu0 0.0
      %800 = vmatpush.msra.mxu0 0.0
      %801 = vmatpush.msra.mxu0 0.0
      %802 = vmatpush.msra.mxu0 0.0
      %803 = vmatpush.msra.mxu0 %v777
      %804 = vmatpush.msra.mxu0 %v775
      %805 = vmatmul.f32.gmra.mxu0 %v784
      %v806 = vpop.f32.mrf.mxu0
      %v807 = vadd.f32 0.0, %v806
      %808 = vmatmul.f32.gmra.mxu0 %v787
      %v809 = vpop.f32.mrf.mxu0
      %v810 = vadd.f32 0.0, %v809
      %811 = vdwg.mxu0
      %812 = vmatpush.msra.mxu0 0.0
      %813 = vmatpush.msra.mxu0 0.0
      %814 = vmatpush.msra.mxu0 0.0
      %815 = vmatpush.msra.mxu0 0.0
      %816 = vmatpush.msra.mxu0 0.0
      %817 = vmatpush.msra.mxu0 0.0
      %818 = vmatpush.msra.mxu0 0.0
      %819 = vmatpush.msra.mxu0 0.0
      %820 = vmatpush.msra.mxu0 0.0
      %821 = vmatpush.msra.mxu0 0.0
      %822 = vmatpush.msra.mxu0 0.0
      %823 = vmatpush.msra.mxu0 0.0
      %824 = vmatpush.msra.mxu0 0.0
      %825 = vmatpush.msra.mxu0 0.0
      %826 = vmatpush.msra.mxu0 %v778
      %827 = vmatpush.msra.mxu0 %v776
      %828 = vmatmul.f32.gmra.mxu0 %v784
      %v829 = vpop.f32.mrf.mxu0
      %v830 = vadd.f32 0.0, %v829
      %831 = vmatmul.f32.gmra.mxu0 %v787
      %v832 = vpop.f32.mrf.mxu0
      %v833 = vadd.f32 0.0, %v832
      %834 = vdwg.mxu0
      %v835 = vadd.f32 %v734, %v807
      %v836 = vadd.f32 %v735, %v830
      %v837 = vadd.f32 %v736, %v810
      %v838 = vadd.f32 %v737, %v833
      %s839 = scalar_lea.vmem %s0, 112
      %v840 = vld [vmem:[%s839] sm:$0xff]
      %v841 = vld [vmem:[%s839 + $0x8] sm:$0xff]
      %842 = vrot.lane.b32.xlu0 %v198, 95
      %v843 = vpop.permute.xlu0 %842
      %844 = vrot.lane.b32.xlu0 %v199, 95
      %v845 = vpop.permute.xlu0 %844
      %846 = vrot.lane.b32.xlu0 %v214, 95
      %v847 = vpop.permute.xlu0 %846
      %848 = vrot.lane.b32.xlu0 %v200, 95
      %v849 = vpop.permute.xlu0 %848
      %850 = vrot.lane.b32.xlu0 %v201, 95
      %v851 = vpop.permute.xlu0 %850
      %852 = vrot.lane.b32.xlu0 %v215, 95
      %v853 = vpop.permute.xlu0 %852
      %vm854 = vcmask 777216
      %v855 = vsel %vm854, %v843, %v845
      %v856 = vsel %vm854, %v845, %v847
      %v857 = vsel %vm854, %v849, %v851
      %v858 = vsel %vm854, %v851, %v853
      %v864 = vsel %vm246, %v840, 0
      %v867 = vsel %vm246, %v841, 0
      %869 = vmatpush.msra.mxu0 0.0
      %870 = vmatpush.msra.mxu0 0.0
      %871 = vmatpush.msra.mxu0 0.0
      %872 = vmatpush.msra.mxu0 0.0
      %873 = vmatpush.msra.mxu0 0.0
      %874 = vmatpush.msra.mxu0 0.0
      %875 = vmatpush.msra.mxu0 0.0
      %876 = vmatpush.msra.mxu0 0.0
      %877 = vmatpush.msra.mxu0 0.0
      %878 = vmatpush.msra.mxu0 0.0
      %879 = vmatpush.msra.mxu0 0.0
      %880 = vmatpush.msra.mxu0 0.0
      %881 = vmatpush.msra.mxu0 0.0
      %882 = vmatpush.msra.mxu0 0.0
      %883 = vmatpush.msra.mxu0 %v857
      %884 = vmatpush.msra.mxu0 %v855
      %885 = vmatmul.f32.gmra.mxu0 %v864
      %v886 = vpop.f32.mrf.mxu0
      %v887 = vadd.f32 0.0, %v886
      %888 = vmatmul.f32.gmra.mxu0 %v867
      %v889 = vpop.f32.mrf.mxu0
      %v890 = vadd.f32 0.0, %v889
      %891 = vdwg.mxu0
      %892 = vmatpush.msra.mxu0 0.0
      %893 = vmatpush.msra.mxu0 0.0
      %894 = vmatpush.msra.mxu0 0.0
      %895 = vmatpush.msra.mxu0 0.0
      %896 = vmatpush.msra.mxu0 0.0
      %897 = vmatpush.msra.mxu0 0.0
      %898 = vmatpush.msra.mxu0 0.0
      %899 = vmatpush.msra.mxu0 0.0
      %900 = vmatpush.msra.mxu0 0.0
      %901 = vmatpush.msra.mxu0 0.0
      %902 = vmatpush.msra.mxu0 0.0
      %903 = vmatpush.msra.mxu0 0.0
      %904 = vmatpush.msra.mxu0 0.0
      %905 = vmatpush.msra.mxu0 0.0
      %906 = vmatpush.msra.mxu0 %v858
      %907 = vmatpush.msra.mxu0 %v856
      %908 = vmatmul.f32.gmra.mxu0 %v864
      %v909 = vpop.f32.mrf.mxu0
      %v910 = vadd.f32 0.0, %v909
      %911 = vmatmul.f32.gmra.mxu0 %v867
      %v912 = vpop.f32.mrf.mxu0
      %v913 = vadd.f32 0.0, %v912
      %914 = vdwg.mxu0
      %v915 = vadd.f32 %v835, %v887
      %v916 = vadd.f32 %v836, %v910
      %v917 = vadd.f32 %v837, %v890
      %v918 = vadd.f32 %v838, %v913
      %919 = vrot.lane.b32.xlu0 %v354, 34
      %v920 = vpop.permute.xlu0 %919
      %921 = vrot.lane.b32.xlu0 %v355, 34
      %v922 = vpop.permute.xlu0 %921
      %vm923 = vcmask 277504
      %v924 = vsel %vm923, %v920, %v922
      %v928 = vmul.f32 %v198, %v920
      %v929 = vmul.f32 %v199, %v924
      %v930 = vmul.f32 %v214, %v922
      %v931 = vmul.f32 %v200, %v920
      %v932 = vmul.f32 %v201, %v924
      %v933 = vmul.f32 %v215, %v922
      %s934 = scalar_lea.vmem %s0, 128
      %v935 = vld [vmem:[%s934] sm:$0xff]
      %v936 = vld [vmem:[%s934 + $0x8] sm:$0xff]
      %943 = vrot.lane.b32.xlu0 %v928, 94
      %v944 = vpop.permute.xlu0 %943
      %945 = vrot.lane.b32.xlu0 %v929, 94
      %v946 = vpop.permute.xlu0 %945
      %947 = vrot.lane.b32.xlu0 %v930, 94
      %v948 = vpop.permute.xlu0 %947
      %949 = vrot.lane.b32.xlu0 %v931, 94
      %v950 = vpop.permute.xlu0 %949
      %951 = vrot.lane.b32.xlu0 %v932, 94
      %v952 = vpop.permute.xlu0 %951
      %953 = vrot.lane.b32.xlu0 %v933, 94
      %v954 = vpop.permute.xlu0 %953
      %vm955 = vcmask 769024
      %v956 = vsel %vm955, %v944, %v946
      %v957 = vsel %vm955, %v946, %v948
      %v958 = vsel %vm955, %v950, %v952
      %v959 = vsel %vm955, %v952, %v954
      %v965 = vsel %vm246, %v935, 0
      %v968 = vsel %vm246, %v936, 0
      %970 = vmatpush.msra.mxu0 0.0
      %971 = vmatpush.msra.mxu0 0.0
      %972 = vmatpush.msra.mxu0 0.0
      %973 = vmatpush.msra.mxu0 0.0
      %974 = vmatpush.msra.mxu0 0.0
      %975 = vmatpush.msra.mxu0 0.0
      %976 = vmatpush.msra.mxu0 0.0
      %977 = vmatpush.msra.mxu0 0.0
      %978 = vmatpush.msra.mxu0 0.0
      %979 = vmatpush.msra.mxu0 0.0
      %980 = vmatpush.msra.mxu0 0.0
      %981 = vmatpush.msra.mxu0 0.0
      %982 = vmatpush.msra.mxu0 0.0
      %983 = vmatpush.msra.mxu0 0.0
      %984 = vmatpush.msra.mxu0 %v958
      %985 = vmatpush.msra.mxu0 %v956
      %986 = vmatmul.f32.gmra.mxu0 %v965
      %v987 = vpop.f32.mrf.mxu0
      %v988 = vadd.f32 0.0, %v987
      %989 = vmatmul.f32.gmra.mxu0 %v968
      %v990 = vpop.f32.mrf.mxu0
      %v991 = vadd.f32 0.0, %v990
      %992 = vdwg.mxu0
      %993 = vmatpush.msra.mxu0 0.0
      %994 = vmatpush.msra.mxu0 0.0
      %995 = vmatpush.msra.mxu0 0.0
      %996 = vmatpush.msra.mxu0 0.0
      %997 = vmatpush.msra.mxu0 0.0
      %998 = vmatpush.msra.mxu0 0.0
      %999 = vmatpush.msra.mxu0 0.0
      %1000 = vmatpush.msra.mxu0 0.0
      %1001 = vmatpush.msra.mxu0 0.0
      %1002 = vmatpush.msra.mxu0 0.0
      %1003 = vmatpush.msra.mxu0 0.0
      %1004 = vmatpush.msra.mxu0 0.0
      %1005 = vmatpush.msra.mxu0 0.0
      %1006 = vmatpush.msra.mxu0 0.0
      %1007 = vmatpush.msra.mxu0 %v959
      %1008 = vmatpush.msra.mxu0 %v957
      %1009 = vmatmul.f32.gmra.mxu0 %v965
      %v1010 = vpop.f32.mrf.mxu0
      %v1011 = vadd.f32 0.0, %v1010
      %1012 = vmatmul.f32.gmra.mxu0 %v968
      %v1013 = vpop.f32.mrf.mxu0
      %v1014 = vadd.f32 0.0, %v1013
      %1015 = vdwg.mxu0
      %v1016 = vadd.f32 %v915, %v988
      %v1017 = vadd.f32 %v916, %v1011
      %v1018 = vadd.f32 %v917, %v991
      %v1019 = vadd.f32 %v918, %v1014
      %v1020 = vld [vmem:[%s1] sm:$0xff]
      %v1021 = vld [vmem:[%s1 + $0x8] sm:$0xff]
      %1023 = vset.pattern.permute.xlu0 0
      %1024 = vperm.xlu0 %1023, %v1020
      %v1025 = vpop.permute.xlu0 %1024
      %1028 = vset.pattern.permute.xlu0 0
      %1029 = vperm.xlu0 %1028, %v1021
      %v1030 = vpop.permute.xlu0 %1029
      %v1032 = vadd.f32 %v1016, %v1025
      %v1033 = vadd.f32 %v1017, %v1025
      %v1034 = vadd.f32 %v1018, %v1030
      %v1035 = vadd.f32 %v1019, %v1030
      %1036 = vst [vmem:[%s197] sm:$0xff] %v1032
      %1037 = vst [vmem:[%s197 + $0x8] sm:$0xff] %v1033
      %1038 = vst [vmem:[%s197 + $0x10] sm:$0xff] %v1034
      %1039 = vst [vmem:[%s197 + $0x18] sm:$0xff] %v1035
      %p1040 = scmp.lt.s32.totalorder %s15, 1
      %s1041 = scalar_select %p1040, %s15, 1
      %s1042 = smul.addr %s1041, 4
      %s1043 = smul.addr %s1042, 8
      %s1044 = scalar_lea.vmem %s4, %s1043
      // Predicated region
      $region37: #{_lambda_.5} parent=35 // pred_check
        %p1045 = pneg %p122
      $region38: #{_lambda_.5} parent=35 // pred_check_branch
        %1047 = sbr.rel (%p1045) target = $region40
      $region39: #{_lambda_.5} parent=35 // pred_region
        _
      $region40: #{_lambda_.5} parent=35 // pred_fallthru
        _
    $region36: #{_lambda_.5} parent=5 // pred_fallthru
      _
    %p1048 = scmp.le.s32.totalorder 2, %s10
    // Predicated region
    $region41: #{_lambda_.5} parent=5 // pred_check
      %p1049 = pneg %p1048
    $region42: #{_lambda_.5} parent=5 // pred_check_branch
      %1051 = sbr.rel (%p1049) target = $region44
    $region43: #{_lambda_.5} parent=5 // pred_region
      %s1052 = ssub.s32 %s10, 2
      // Predicated region
      $region45: #{_lambda_.5} parent=43 // pred_check
        %p1053 = pneg %p128
      $region46: #{_lambda_.5} parent=43 // pred_check_branch
        %1055 = sbr.rel (%p1053) target = $region48
      $region47: #{_lambda_.5} parent=43 // pred_region
        %p1056 = scmp.lt.s32.totalorder %s16, 1
        %s1057 = scalar_select %p1056, %s16, 1
        %s1058 = smul.addr %s1057, 4
        %s1059 = smul.addr %s1058, 8
        %s1060 = scalar_lea.vmem %s4, %s1059
      $region48: #{_lambda_.5} parent=43 // pred_fallthru
        _
    $region44: #{_lambda_.5} parent=5 // pred_fallthru
      _
  $region6: #{_lambda_.5} parent=0 // loop_footer
    %s14 = sadd.s32 1, %s10
  $region7: #{_lambda_.5} parent=0 // loop_footer_branch
    %9 = sbr.rel target = $region3
  $region8: #{_lambda_.5} parent=0 // loop_exit
    _

// kernel: _lambda_.6
$region0: #{_lambda_.6}
  #allocation0 [shape = 'u32[]', space=smem, size = 0x4, offset = 0x4, fixed_abs, tag = 'smem constant byte address 0x4 - core index']
  #allocation1 [shape = 'u32[72,128]{1,0:T(1,128)}', space=vmem, size = 0x9000, scoped, tag = 'internal scratch']
  %s0 = inlined_call_operand.vmem [shape: f32[2,9,16], index: 0, kind: input, shape index: {}]
  %s1 = inlined_call_operand.vmem [shape: f32[2,16,9], index: 1, kind: input, shape index: {}]
  %s2 = inlined_call_operand.vmem [shape: f32[9,16,16], index: 2, kind: input, shape index: {}]
  %s3 = inlined_call_operand.vmem [shape: f32[3,256], index: 3, kind: input, shape index: {}]
  %s4 = inlined_call_operand.vmem [shape: f32[2,16,290], index: 4, kind: input, shape index: {}]
  %s5 = inlined_call_operand.vmem [shape: f32[2,16,256], index: 5, kind: output, shape index: {}]
  %s6 = sld [smem:[#allocation0]]
  $region53: #{_lambda_.6} parent=0
    _
  %s8 = ssub.s32 1, %s6
  %s9 = scalar_select 0, %s8, %s6
  loop: start=0, step=1, limit=4
  $region2: #{_lambda_.6} parent=0 // loop_pre_header
    _
  $region3: #{_lambda_.6} parent=0 // loop_header
    %s11 = sphi 0, %s15
    %p12 = scmp.ge.s32.totalorder %s11, 4
    %s21 = sphi 0, %s23
    %s24 = sphi 0, %s21
    %s25 = sphi 0, %s24
    %s41 = sphi 0, %s25
    %s47 = sphi 0, %s49
    %s50 = sphi 0, %s47
    %s51 = sphi 0, %s50
    %s67 = sphi 0, %s51
    %s71 = sphi 0, %s71
    %s73 = sphi 0, %s71
    %s74 = sphi 0, %s73
    %s88 = sphi 0, %s74
    %s92 = sphi 0, %s92
    %s94 = sphi 0, %s92
    %s95 = sphi 0, %s94
    %s109 = sphi 0, %s95
    %s115 = sphi 0, %s117
    %s118 = sphi 0, %s115
    %s119 = sphi 0, %s118
    %s135 = sphi 0, %s119
    %s141 = sphi 0, %s143
    %s144 = sphi 0, %s141
    %s145 = sphi 0, %s144
    %s161 = sphi 0, %s145
  $region4: #{_lambda_.6} parent=0 // loop_header_branch
    %14 = sbr.rel (%p12) target = $region8
  $region5: #{_lambda_.6} parent=0 // loop_body
    %s16 = ssub.s32 %s11, 1
    %s17 = ssub.s32 %s11, 2
    %s18 = sadd.s32 %s11, 1
    %s19 = ssub.s32 %s11, %s18
    %p20 = scmp.eq.s32.totalorder %s19, 0
    %s22 = sadd.s32 %s21, 1
    %s23 = scalar_select %p20, %s21, %s22
    %p26 = pneg %p20
    %p27 = scmp.eq.s32.totalorder %s11, 1
    %p28 = por %p26, %p27
    %p29 = scmp.ne.s32.totalorder %s21, %s24
    %p30 = scmp.eq.s32.totalorder %s11, 0
    %p31 = por %p29, %p30
    %p32 = scmp.ne.s32.totalorder %s21, %s24
    %p33 = scmp.eq.s32.totalorder %s16, 1
    %p34 = por %p32, %p33
    %p35 = scmp.ne.s32.totalorder %s24, %s25
    %p36 = scmp.eq.s32.totalorder %s16, 0
    %p37 = por %p35, %p36
    %p38 = scmp.ne.s32.totalorder %s24, %s25
    %p39 = scmp.eq.s32.totalorder %s17, 1
    %p40 = por %p38, %p39
    %p42 = scmp.ne.s32.totalorder %s25, %s41
    %p43 = scmp.eq.s32.totalorder %s17, 0
    %p44 = por %p42, %p43
    %s45 = ssub.s32 %s11, %s18
    %p46 = scmp.eq.s32.totalorder %s45, 0
    %s48 = sadd.s32 %s47, 1
    %s49 = scalar_select %p46, %s47, %s48
    %p52 = pneg %p46
    %p53 = scmp.eq.s32.totalorder %s11, 1
    %p54 = por %p52, %p53
    %p55 = scmp.ne.s32.totalorder %s47, %s50
    %p56 = scmp.eq.s32.totalorder %s11, 0
    %p57 = por %p55, %p56
    %p58 = scmp.ne.s32.totalorder %s47, %s50
    %p59 = scmp.eq.s32.totalorder %s16, 1
    %p60 = por %p58, %p59
    %p61 = scmp.ne.s32.totalorder %s50, %s51
    %p62 = scmp.eq.s32.totalorder %s16, 0
    %p63 = por %p61, %p62
    %p64 = scmp.ne.s32.totalorder %s50, %s51
    %p65 = scmp.eq.s32.totalorder %s17, 1
    %p66 = por %p64, %p65
    %p68 = scmp.ne.s32.totalorder %s51, %s67
    %p69 = scmp.eq.s32.totalorder %s17, 0
    %p70 = por %p68, %p69
    %s72 = sadd.s32 %s71, 1
    %p75 = scmp.eq.s32.totalorder %s11, 1
    %p76 = scmp.ne.s32.totalorder %s71, %s73
    %p77 = scmp.eq.s32.totalorder %s11, 0
    %p78 = por %p76, %p77
    %p79 = scmp.ne.s32.totalorder %s71, %s73
    %p80 = scmp.eq.s32.totalorder %s16, 1
    %p81 = por %p79, %p80
    %p82 = scmp.ne.s32.totalorder %s73, %s74
    %p83 = scmp.eq.s32.totalorder %s16, 0
    %p84 = por %p82, %p83
    %p85 = scmp.ne.s32.totalorder %s73, %s74
    %p86 = scmp.eq.s32.totalorder %s17, 1
    %p87 = por %p85, %p86
    %p89 = scmp.ne.s32.totalorder %s74, %s88
    %p90 = scmp.eq.s32.totalorder %s17, 0
    %p91 = por %p89, %p90
    %s93 = sadd.s32 %s92, 1
    %p96 = scmp.eq.s32.totalorder %s11, 1
    %p97 = scmp.ne.s32.totalorder %s92, %s94
    %p98 = scmp.eq.s32.totalorder %s11, 0
    %p99 = por %p97, %p98
    %p100 = scmp.ne.s32.totalorder %s92, %s94
    %p101 = scmp.eq.s32.totalorder %s16, 1
    %p102 = por %p100, %p101
    %p103 = scmp.ne.s32.totalorder %s94, %s95
    %p104 = scmp.eq.s32.totalorder %s16, 0
    %p105 = por %p103, %p104
    %p106 = scmp.ne.s32.totalorder %s94, %s95
    %p107 = scmp.eq.s32.totalorder %s17, 1
    %p108 = por %p106, %p107
    %p110 = scmp.ne.s32.totalorder %s95, %s109
    %p111 = scmp.eq.s32.totalorder %s17, 0
    %p112 = por %p110, %p111
    %s113 = ssub.s32 %s11, %s18
    %p114 = scmp.eq.s32.totalorder %s113, 0
    %s116 = sadd.s32 %s115, 1
    %s117 = scalar_select %p114, %s115, %s116
    %p120 = pneg %p114
    %p121 = scmp.eq.s32.totalorder %s11, 1
    %p122 = por %p120, %p121
    %p123 = scmp.ne.s32.totalorder %s115, %s118
    %p124 = scmp.eq.s32.totalorder %s11, 0
    %p125 = por %p123, %p124
    %p126 = scmp.ne.s32.totalorder %s115, %s118
    %p127 = scmp.eq.s32.totalorder %s16, 1
    %p128 = por %p126, %p127
    %p129 = scmp.ne.s32.totalorder %s118, %s119
    %p130 = scmp.eq.s32.totalorder %s16, 0
    %p131 = por %p129, %p130
    %p132 = scmp.ne.s32.totalorder %s118, %s119
    %p133 = scmp.eq.s32.totalorder %s17, 1
    %p134 = por %p132, %p133
    %p136 = scmp.ne.s32.totalorder %s119, %s135
    %p137 = scmp.eq.s32.totalorder %s17, 0
    %p138 = por %p136, %p137
    %s139 = ssub.s32 %s11, %s18
    %p140 = scmp.eq.s32.totalorder %s139, 0
    %s142 = sadd.s32 %s141, 1
    %s143 = scalar_select %p140, %s141, %s142
    %p146 = pneg %p140
    %p147 = scmp.eq.s32.totalorder %s11, 1
    %p148 = por %p146, %p147
    %p149 = scmp.ne.s32.totalorder %s141, %s144
    %p150 = scmp.eq.s32.totalorder %s11, 0
    %p151 = por %p149, %p150
    %p152 = scmp.ne.s32.totalorder %s141, %s144
    %p153 = scmp.eq.s32.totalorder %s16, 1
    %p154 = por %p152, %p153
    %p155 = scmp.ne.s32.totalorder %s144, %s145
    %p156 = scmp.eq.s32.totalorder %s16, 0
    %p157 = por %p155, %p156
    %p158 = scmp.ne.s32.totalorder %s144, %s145
    %p159 = scmp.eq.s32.totalorder %s17, 1
    %p160 = por %p158, %p159
    %p162 = scmp.ne.s32.totalorder %s145, %s161
    %p163 = scmp.eq.s32.totalorder %s17, 0
    %p164 = por %p162, %p163
    %p165 = scmp.le.s32.totalorder 1, %s11
    %p166 = scmp.lt.s32.totalorder %s11, 3
    %p167 = pnand %p165, %p166
    %p168 = pneg %p167
    // Predicated region
    $region9: #{_lambda_.6} parent=5 // pred_check
      _
    $region10: #{_lambda_.6} parent=5 // pred_check_branch
      %170 = sbr.rel (%p167) target = $region12
    $region11: #{_lambda_.6} parent=5 // pred_region
      %s171 = ssub.s32 %s11, 1
      // Predicated region
      $region13: #{_lambda_.6} parent=11 // pred_check
        %p172 = pneg %p84
      $region14: #{_lambda_.6} parent=11 // pred_check_branch
        %174 = sbr.rel (%p172) target = $region16
      $region15: #{_lambda_.6} parent=11 // pred_region
        _
      $region16: #{_lambda_.6} parent=11 // pred_fallthru
        _
      // Predicated region
      $region17: #{_lambda_.6} parent=11 // pred_check
        %p175 = pneg %p105
      $region18: #{_lambda_.6} parent=11 // pred_check_branch
        %177 = sbr.rel (%p175) target = $region20
      $region19: #{_lambda_.6} parent=11 // pred_region
        _
      $region20: #{_lambda_.6} parent=11 // pred_fallthru
        _
    $region12: #{_lambda_.6} parent=5 // pred_fallthru
      _
    %p178 = scmp.lt.s32.totalorder %s11, 2
    // Predicated region
    $region21: #{_lambda_.6} parent=5 // pred_check
      %p179 = pneg %p178
    $region22: #{_lambda_.6} parent=5 // pred_check_branch
      %181 = sbr.rel (%p179) target = $region24
    $region23: #{_lambda_.6} parent=5 // pred_region
      // Predicated region
      $region25: #{_lambda_.6} parent=23 // pred_check
        %p182 = pneg %p31
      $region26: #{_lambda_.6} parent=23 // pred_check_branch
        %184 = sbr.rel (%p182) target = $region28
      $region27: #{_lambda_.6} parent=23 // pred_region
        %p185 = scmp.lt.s32.totalorder %s11, 1
        %s186 = scalar_select %p185, %s11, 1
        %s187 = smul.addr %s186, 2
        %s188 = smul.addr %s187, 8
        %s189 = scalar_lea.vmem %s0, %s188
      $region28: #{_lambda_.6} parent=23 // pred_fallthru
        _
      // Predicated region
      $region29: #{_lambda_.6} parent=23 // pred_check
        %p190 = pneg %p57
      $region30: #{_lambda_.6} parent=23 // pred_check_branch
        %192 = sbr.rel (%p190) target = $region32
      $region31: #{_lambda_.6} parent=23 // pred_region
        %p193 = scmp.lt.s32.totalorder %s11, 1
        %s194 = scalar_select %p193, %s11, 1
        %s195 = smul.addr %s194, 2
        %s196 = smul.addr %s195, 8
        %s197 = scalar_lea.vmem %s1, %s196
      $region32: #{_lambda_.6} parent=23 // pred_fallthru
        _
      // Predicated region
      $region33: #{_lambda_.6} parent=23 // pred_check
        %p198 = pneg %p125
      $region34: #{_lambda_.6} parent=23 // pred_check_branch
        %200 = sbr.rel (%p198) target = $region36
      $region35: #{_lambda_.6} parent=23 // pred_region
        %p201 = scmp.lt.s32.totalorder %s11, 1
        %s202 = scalar_select %p201, %s11, 1
        %s203 = smul.addr %s202, 6
        %s204 = smul.addr %s203, 8
        %s205 = scalar_lea.vmem %s4, %s204
      $region36: #{_lambda_.6} parent=23 // pred_fallthru
        _
    $region24: #{_lambda_.6} parent=5 // pred_fallthru
      _
    %p206 = scmp.le.s32.totalorder 1, %s11
    %p207 = scmp.lt.s32.totalorder %s11, 3
    %p208 = pnand %p206, %p207
    %p209 = pneg %p208
    // Predicated region
    $region37: #{_lambda_.6} parent=5 // pred_check
      _
    $region38: #{_lambda_.6} parent=5 // pred_check_branch
      %211 = sbr.rel (%p208) target = $region40
    $region39: #{_lambda_.6} parent=5 // pred_region
      %s212 = ssub.s32 %s11, 1
      %p213 = scmp.lt.s32.totalorder %s16, 1
      %s214 = scalar_select %p213, %s16, 1
      %s215 = smul.addr %s214, 2
      %s216 = smul.addr %s215, 8
      %s217 = scalar_lea.vmem %s0, %s216
      %p218 = pneg %p37
      %p219 = pneg %p34
      %p220 = scmp.lt.s32.totalorder %s16, 1
      %s221 = scalar_select %p220, %s16, 1
      %s222 = smul.addr %s221, 2
      %s223 = smul.addr %s222, 8
      %s224 = scalar_lea.vmem %s1, %s223
      %p225 = pneg %p63
      %p226 = pneg %p60
      %p227 = pneg %p84
      %p228 = pneg %p81
      %p229 = pneg %p105
      %p230 = pneg %p102
      %p231 = scmp.lt.s32.totalorder %s16, 1
      %s232 = scalar_select %p231, %s16, 1
      %s233 = smul.addr %s232, 6
      %s234 = smul.addr %s233, 8
      %s235 = scalar_lea.vmem %s4, %s234
      %p236 = pneg %p131
      %p237 = pneg %p128
      %p238 = pneg %p157
      %p239 = pneg %p154
      %p240 = scmp.lt.s32.totalorder %s16, 1
      %s241 = scalar_select %p240, %s16, 1
      %s242 = smul.addr %s241, 4
      %s243 = smul.addr %s242, 8
      %s244 = scalar_lea.vmem %s5, %s243
      %p245 = scmp.lt.s32.totalorder %s16, 1
      %s246 = scalar_select %p245, %s16, 1
      %s247 = smul.addr %s246, 2
      %s248 = smul.addr %s247, 8
      %s249 = scalar_lea.vmem %s0, %s248
      %p250 = scmp.lt.s32.totalorder %s16, 1
      %s251 = scalar_select %p250, %s16, 1
      %s252 = smul.addr %s251, 2
      %s253 = smul.addr %s252, 8
      %s254 = scalar_lea.vmem %s1, %s253
      %p255 = scmp.lt.s32.totalorder %s16, 1
      %s256 = scalar_select %p255, %s16, 1
      %s257 = smul.addr %s256, 6
      %s258 = smul.addr %s257, 8
      %s259 = scalar_lea.vmem %s4, %s258
      %p260 = scmp.lt.s32.totalorder %s16, 1
      %s261 = scalar_select %p260, %s16, 1
      %s262 = smul.addr %s261, 4
      %s263 = smul.addr %s262, 8
      %s264 = scalar_lea.vmem %s5, %s263
      %v265 = vld [vmem:[%s259] sm:$0xff]
      %v266 = vld [vmem:[%s259 + $0x8] sm:$0xff]
      %v267 = vld [vmem:[%s259 + $0x18] sm:$0xff]
      %v268 = vld [vmem:[%s259 + $0x20] sm:$0xff]
      %v269 = vld [vmem:[%s3] ss:$4 sm:$0x3]
      %v271 = vperm.slane %v269, 0
      %v272 = vperm.slane %v269, 1
      %v275 = vmul.f32 %v265, %v271
      %v276 = vmul.f32 %v266, %v272
      %v277 = vmul.f32 %v267, %v271
      %v278 = vmul.f32 %v268, %v272
      %v279 = vld [vmem:[%s254] sm:$0xff]
      %v280 = vld [vmem:[%s254 + $0x8] sm:$0xff]
      %v281 = vld [vmem:[%s249] sm:$0x1]
      %283 = vset.pattern.permute.xlu0 0
      %284 = vperm.xlu0 %283, %v279
      %v285 = vpop.permute.xlu0 %284
      %288 = vset.pattern.permute.xlu0 0
      %289 = vperm.xlu0 %288, %v280
      %v290 = vpop.permute.xlu0 %289
      %v292 = vperm.slane %v281, 0
      %v293 = vadd.f32 %v285, %v292
      %v294 = vadd.f32 %v290, %v292
      %v295 = vxor.u32 %v293, 2147483648
      %v296 = vxor.u32 %v294, 2147483648
      %v297 = vmul.f32 %v295, 1.442695
      %v298 = vpow.pop %v297
      %v299 = vmul.f32 %v296, 1.442695
      %v300 = vpow.pop %v299
      %v301 = vadd.f32 %v298, 1.0
      %v302 = vadd.f32 %v300, 1.0
      %v303 = vrcp.pop %v301
      %v304 = vmul.f32 %v301, %v303
      %v305 = vsub.f32 1.0, %v304
      %v306 = vmul.f32 %v303, %v305
      %v307 = vadd.f32 %v303, %v306
      %vm308 = vweird.f32 %v301
      %vm309 = vweird.f32 %v303
      %vm310 = vmor %vm308, %vm309
      %v311 = vsel %vm310, %v303, %v307
      %v312 = vand.u32 2147483647, %v301
      %vm313 = vcmp.eq.f32.partialorder %v312, 8.507059e+37
      %v314 = vand.u32 %v301, 2147483648
      %v315 = vor.u32 1.1754944e-38, %v314
      %v316 = vsel %vm313, %v315, %v311
      %v317 = vmul.f32 1.0, %v316
      %v318 = vrcp.pop %v302
      %v319 = vmul.f32 %v302, %v318
      %v320 = vsub.f32 1.0, %v319
      %v321 = vmul.f32 %v318, %v320
      %v322 = vadd.f32 %v318, %v321
      %vm323 = vweird.f32 %v302
      %vm324 = vweird.f32 %v318
      %vm325 = vmor %vm323, %vm324
      %v326 = vsel %vm325, %v318, %v322
      %v327 = vand.u32 2147483647, %v302
      %vm328 = vcmp.eq.f32.partialorder %v327, 8.507059e+37
      %v329 = vand.u32 %v302, 2147483648
      %v330 = vor.u32 1.1754944e-38, %v329
      %v331 = vsel %vm328, %v330, %v326
      %v332 = vmul.f32 1.0, %v331
      %v333 = vld [vmem:[%s2] sm:$0xff]
      %v334 = vld [vmem:[%s2 + $0x8] sm:$0xff]
      %v335 = vmul.f32 %v317, %v333
      %v336 = vmul.f32 %v332, %v334
      %v337 = vld [vmem:[%s259] sm:$0xff]
      %v338 = vld [vmem:[%s259 + $0x8] sm:$0xff]
      %v339 = vld [vmem:[%s259 + $0x10] sm:$0xff]
      %v340 = vld [vmem:[%s259 + $0x18] sm:$0xff]
      %v341 = vld [vmem:[%s259 + $0x20] sm:$0xff]
      %v342 = vld [vmem:[%s259 + $0x28] sm:$0xff]
      %v343 = vld [vmem:[%s249 + $0x1] sm:$0x1]
      %344 = vset.pattern.permute.xlu0 1
      %345 = vperm.xlu0 %344, %v279
      %v346 = vpop.permute.xlu0 %345
      %348 = vset.pattern.permute.xlu0 1
      %349 = vperm.xlu0 %348, %v280
      %v350 = vpop.permute.xlu0 %349
      %v352 = vperm.slane %v343, 0
      %v353 = vadd.f32 %v346, %v352
      %v354 = vadd.f32 %v350, %v352
      %v355 = vxor.u32 %v353, 2147483648
      %v356 = vxor.u32 %v354, 2147483648
      %v357 = vmul.f32 %v355, 1.442695
      %v358 = vpow.pop %v357
      %v359 = vmul.f32 %v356, 1.442695
      %v360 = vpow.pop %v359
      %v361 = vadd.f32 %v358, 1.0
      %v362 = vadd.f32 %v360, 1.0
      %v363 = vrcp.pop %v361
      %v364 = vmul.f32 %v361, %v363
      %v365 = vsub.f32 1.0, %v364
      %v366 = vmul.f32 %v363, %v365
      %v367 = vadd.f32 %v363, %v366
      %vm368 = vweird.f32 %v361
      %vm369 = vweird.f32 %v363
      %vm370 = vmor %vm368, %vm369
      %v371 = vsel %vm370, %v363, %v367
      %v372 = vand.u32 2147483647, %v361
      %vm373 = vcmp.eq.f32.partialorder %v372, 8.507059e+37
      %v374 = vand.u32 %v361, 2147483648
      %v375 = vor.u32 1.1754944e-38, %v374
      %v376 = vsel %vm373, %v375, %v371
      %v377 = vmul.f32 1.0, %v376
      %v378 = vrcp.pop %v362
      %v379 = vmul.f32 %v362, %v378
      %v380 = vsub.f32 1.0, %v379
      %v381 = vmul.f32 %v378, %v380
      %v382 = vadd.f32 %v378, %v381
      %vm383 = vweird.f32 %v362
      %vm384 = vweird.f32 %v378
      %vm385 = vmor %vm383, %vm384
      %v386 = vsel %vm385, %v378, %v382
      %v387 = vand.u32 2147483647, %v362
      %vm388 = vcmp.eq.f32.partialorder %v387, 8.507059e+37
      %v389 = vand.u32 %v362, 2147483648
      %v390 = vor.u32 1.1754944e-38, %v389
      %v391 = vsel %vm388, %v390, %v386
      %v392 = vmul.f32 1.0, %v391
      %s393 = scalar_lea.vmem %s2, 16
      %v394 = vld [vmem:[%s393] sm:$0xff]
      %v395 = vld [vmem:[%s393 + $0x8] sm:$0xff]
      %v396 = vmul.f32 %v377, %v394
      %v397 = vmul.f32 %v392, %v395
      %404 = vrot.lane.b32.xlu0 %v337, 127
      %v405 = vpop.permute.xlu0 %404
      %406 = vrot.lane.b32.xlu0 %v338, 127
      %v407 = vpop.permute.xlu0 %406
      %408 = vrot.lane.b32.xlu0 %v339, 127
      %v409 = vpop.permute.xlu0 %408
      %410 = vrot.lane.b32.xlu0 %v340, 127
      %v411 = vpop.permute.xlu0 %410
      %412 = vrot.lane.b32.xlu0 %v341, 127
      %v413 = vpop.permute.xlu0 %412
      %414 = vrot.lane.b32.xlu0 %v342, 127
      %v415 = vpop.permute.xlu0 %414
      %vm416 = vcmask 1039360
      %v417 = vsel %vm416, %v405, %v407
      %v418 = vsel %vm416, %v407, %v409
      %v419 = vsel %vm416, %v411, %v413
      %v420 = vsel %vm416, %v413, %v415
      %vm425 = vcmask 130048
      %v427 = vsel %vm425, %v396, 0
      %v430 = vsel %vm425, %v397, 0
      %432 = vmatpush.msra.mxu0 0.0
      %433 = vmatpush.msra.mxu0 0.0
      %434 = vmatpush.msra.mxu0 0.0
      %435 = vmatpush.msra.mxu0 0.0
      %436 = vmatpush.msra.mxu0 0.0
      %437 = vmatpush.msra.mxu0 0.0
      %438 = vmatpush.msra.mxu0 0.0
      %439 = vmatpush.msra.mxu0 0.0
      %440 = vmatpush.msra.mxu0 0.0
      %441 = vmatpush.msra.mxu0 0.0
      %442 = vmatpush.msra.mxu0 0.0
      %443 = vmatpush.msra.mxu0 0.0
      %444 = vmatpush.msra.mxu0 0.0
      %445 = vmatpush.msra.mxu0 0.0
      %446 = vmatpush.msra.mxu0 %v419
      %447 = vmatpush.msra.mxu0 %v417
      %448 = vmatmul.f32.gmra.mxu0 %v427
      %v449 = vpop.f32.mrf.mxu0
      %v450 = vadd.f32 0.0, %v449
      %451 = vmatmul.f32.gmra.mxu0 %v430
      %v452 = vpop.f32.mrf.mxu0
      %v453 = vadd.f32 0.0, %v452
      %454 = vdwg.mxu0
      %455 = vmatpush.msra.mxu0 0.0
      %456 = vmatpush.msra.mxu0 0.0
      %457 = vmatpush.msra.mxu0 0.0
      %458 = vmatpush.msra.mxu0 0.0
      %459 = vmatpush.msra.mxu0 0.0
      %460 = vmatpush.msra.mxu0 0.0
      %461 = vmatpush.msra.mxu0 0.0
      %462 = vmatpush.msra.mxu0 0.0
      %463 = vmatpush.msra.mxu0 0.0
      %464 = vmatpush.msra.mxu0 0.0
      %465 = vmatpush.msra.mxu0 0.0
      %466 = vmatpush.msra.mxu0 0.0
      %467 = vmatpush.msra.mxu0 0.0
      %468 = vmatpush.msra.mxu0 0.0
      %469 = vmatpush.msra.mxu0 %v420
      %470 = vmatpush.msra.mxu0 %v418
      %471 = vmatmul.f32.gmra.mxu0 %v427
      %v472 = vpop.f32.mrf.mxu0
      %v473 = vadd.f32 0.0, %v472
      %474 = vmatmul.f32.gmra.mxu0 %v430
      %v475 = vpop.f32.mrf.mxu0
      %v476 = vadd.f32 0.0, %v475
      %477 = vdwg.mxu0
      %v479 = vsel %vm425, %v335, 0
      %v482 = vsel %vm425, %v336, 0
      %484 = vmatpush.msra.mxu0 0.0
      %485 = vmatpush.msra.mxu0 0.0
      %486 = vmatpush.msra.mxu0 0.0
      %487 = vmatpush.msra.mxu0 0.0
      %488 = vmatpush.msra.mxu0 0.0
      %489 = vmatpush.msra.mxu0 0.0
      %490 = vmatpush.msra.mxu0 0.0
      %491 = vmatpush.msra.mxu0 0.0
      %492 = vmatpush.msra.mxu0 0.0
      %493 = vmatpush.msra.mxu0 0.0
      %494 = vmatpush.msra.mxu0 0.0
      %495 = vmatpush.msra.mxu0 0.0
      %496 = vmatpush.msra.mxu0 0.0
      %497 = vmatpush.msra.mxu0 0.0
      %498 = vmatpush.msra.mxu0 %v277
      %499 = vmatpush.msra.mxu0 %v275
      %500 = vmatmul.f32.gmra.mxu0 %v479
      %v501 = vpop.f32.mrf.mxu0
      %v502 = vadd.f32 %v450, %v501
      %503 = vmatmul.f32.gmra.mxu0 %v482
      %v504 = vpop.f32.mrf.mxu0
      %v505 = vadd.f32 %v453, %v504
      %506 = vdwg.mxu0
      %507 = vmatpush.msra.mxu0 0.0
      %508 = vmatpush.msra.mxu0 0.0
      %509 = vmatpush.msra.mxu0 0.0
      %510 = vmatpush.msra.mxu0 0.0
      %511 = vmatpush.msra.mxu0 0.0
      %512 = vmatpush.msra.mxu0 0.0
      %513 = vmatpush.msra.mxu0 0.0
      %514 = vmatpush.msra.mxu0 0.0
      %515 = vmatpush.msra.mxu0 0.0
      %516 = vmatpush.msra.mxu0 0.0
      %517 = vmatpush.msra.mxu0 0.0
      %518 = vmatpush.msra.mxu0 0.0
      %519 = vmatpush.msra.mxu0 0.0
      %520 = vmatpush.msra.mxu0 0.0
      %521 = vmatpush.msra.mxu0 %v278
      %522 = vmatpush.msra.mxu0 %v276
      %523 = vmatmul.f32.gmra.mxu0 %v479
      %v524 = vpop.f32.mrf.mxu0
      %v525 = vadd.f32 %v473, %v524
      %526 = vmatmul.f32.gmra.mxu0 %v482
      %v527 = vpop.f32.mrf.mxu0
      %v528 = vadd.f32 %v476, %v527
      %529 = vdwg.mxu0
      %s530 = scalar_lea.vmem %s3, 2
      %v531 = vld [vmem:[%s530] ss:$4 sm:$0x3]
      %v533 = vperm.slane %v531, 0
      %v534 = vperm.slane %v531, 1
      %535 = vrot.lane.b32.xlu0 %v533, 2
      %v536 = vpop.permute.xlu0 %535
      %537 = vrot.lane.b32.xlu0 %v534, 2
      %v538 = vpop.permute.xlu0 %537
      %vm539 = vcmask 15360
      %v540 = vsel %vm539, %v536, %v538
      %v544 = vmul.f32 %v337, %v536
      %v545 = vmul.f32 %v338, %v540
      %v546 = vmul.f32 %v339, %v538
      %v547 = vmul.f32 %v340, %v536
      %v548 = vmul.f32 %v341, %v540
      %v549 = vmul.f32 %v342, %v538
      %v550 = vld [vmem:[%s249 + $0x2] sm:$0x1]
      %551 = vset.pattern.permute.xlu0 2
      %552 = vperm.xlu0 %551, %v279
      %v553 = vpop.permute.xlu0 %552
      %555 = vset.pattern.permute.xlu0 2
      %556 = vperm.xlu0 %555, %v280
      %v557 = vpop.permute.xlu0 %556
      %v559 = vperm.slane %v550, 0
      %v560 = vadd.f32 %v553, %v559
      %v561 = vadd.f32 %v557, %v559
      %v562 = vxor.u32 %v560, 2147483648
      %v563 = vxor.u32 %v561, 2147483648
      %v564 = vmul.f32 %v562, 1.442695
      %v565 = vpow.pop %v564
      %v566 = vmul.f32 %v563, 1.442695
      %v567 = vpow.pop %v566
      %v568 = vadd.f32 %v565, 1.0
      %v569 = vadd.f32 %v567, 1.0
      %v570 = vrcp.pop %v568
      %v571 = vmul.f32 %v568, %v570
      %v572 = vsub.f32 1.0, %v571
      %v573 = vmul.f32 %v570, %v572
      %v574 = vadd.f32 %v570, %v573
      %vm575 = vweird.f32 %v568
      %vm576 = vweird.f32 %v570
      %vm577 = vmor %vm575, %vm576
      %v578 = vsel %vm577, %v570, %v574
      %v579 = vand.u32 2147483647, %v568
      %vm580 = vcmp.eq.f32.partialorder %v579, 8.507059e+37
      %v581 = vand.u32 %v568, 2147483648
      %v582 = vor.u32 1.1754944e-38, %v581
      %v583 = vsel %vm580, %v582, %v578
      %v584 = vmul.f32 1.0, %v583
      %v585 = vrcp.pop %v569
      %v586 = vmul.f32 %v569, %v585
      %v587 = vsub.f32 1.0, %v586
      %v588 = vmul.f32 %v585, %v587
      %v589 = vadd.f32 %v585, %v588
      %vm590 = vweird.f32 %v569
      %vm591 = vweird.f32 %v585
      %vm592 = vmor %vm590, %vm591
      %v593 = vsel %vm592, %v585, %v589
      %v594 = vand.u32 2147483647, %v569
      %vm595 = vcmp.eq.f32.partialorder %v594, 8.507059e+37
      %v596 = vand.u32 %v569, 2147483648
      %v597 = vor.u32 1.1754944e-38, %v596
      %v598 = vsel %vm595, %v597, %v593
      %v599 = vmul.f32 1.0, %v598
      %s600 = scalar_lea.vmem %s2, 32
      %v601 = vld [vmem:[%s600] sm:$0xff]
      %v602 = vld [vmem:[%s600 + $0x8] sm:$0xff]
      %v603 = vmul.f32 %v584, %v601
      %v604 = vmul.f32 %v599, %v602
      %611 = vrot.lane.b32.xlu0 %v544, 126
      %v612 = vpop.permute.xlu0 %611
      %613 = vrot.lane.b32.xlu0 %v545, 126
      %v614 = vpop.permute.xlu0 %613
      %615 = vrot.lane.b32.xlu0 %v546, 126
      %v616 = vpop.permute.xlu0 %615
      %617 = vrot.lane.b32.xlu0 %v547, 126
      %v618 = vpop.permute.xlu0 %617
      %619 = vrot.lane.b32.xlu0 %v548, 126
      %v620 = vpop.permute.xlu0 %619
      %621 = vrot.lane.b32.xlu0 %v549, 126
      %v622 = vpop.permute.xlu0 %621
      %vm623 = vcmask 1031168
      %v624 = vsel %vm623, %v612, %v614
      %v625 = vsel %vm623, %v614, %v616
      %v626 = vsel %vm623, %v618, %v620
      %v627 = vsel %vm623, %v620, %v622
      %v633 = vsel %vm425, %v603, 0
      %v636 = vsel %vm425, %v604, 0
      %638 = vmatpush.msra.mxu0 0.0
      %639 = vmatpush.msra.mxu0 0.0
      %640 = vmatpush.msra.mxu0 0.0
      %641 = vmatpush.msra.mxu0 0.0
      %642 = vmatpush.msra.mxu0 0.0
      %643 = vmatpush.msra.mxu0 0.0
      %644 = vmatpush.msra.mxu0 0.0
      %645 = vmatpush.msra.mxu0 0.0
      %646 = vmatpush.msra.mxu0 0.0
      %647 = vmatpush.msra.mxu0 0.0
      %648 = vmatpush.msra.mxu0 0.0
      %649 = vmatpush.msra.mxu0 0.0
      %650 = vmatpush.msra.mxu0 0.0
      %651 = vmatpush.msra.mxu0 0.0
      %652 = vmatpush.msra.mxu0 %v626
      %653 = vmatpush.msra.mxu0 %v624
      %654 = vmatmul.f32.gmra.mxu0 %v633
      %v655 = vpop.f32.mrf.mxu0
      %v656 = vadd.f32 0.0, %v655
      %657 = vmatmul.f32.gmra.mxu0 %v636
      %v658 = vpop.f32.mrf.mxu0
      %v659 = vadd.f32 0.0, %v658
      %660 = vdwg.mxu0
      %661 = vmatpush.msra.mxu0 0.0
      %662 = vmatpush.msra.mxu0 0.0
      %663 = vmatpush.msra.mxu0 0.0
      %664 = vmatpush.msra.mxu0 0.0
      %665 = vmatpush.msra.mxu0 0.0
      %666 = vmatpush.msra.mxu0 0.0
      %667 = vmatpush.msra.mxu0 0.0
      %668 = vmatpush.msra.mxu0 0.0
      %669 = vmatpush.msra.mxu0 0.0
      %670 = vmatpush.msra.mxu0 0.0
      %671 = vmatpush.msra.mxu0 0.0
      %672 = vmatpush.msra.mxu0 0.0
      %673 = vmatpush.msra.mxu0 0.0
      %674 = vmatpush.msra.mxu0 0.0
      %675 = vmatpush.msra.mxu0 %v627
      %676 = vmatpush.msra.mxu0 %v625
      %677 = vmatmul.f32.gmra.mxu0 %v633
      %v678 = vpop.f32.mrf.mxu0
      %v679 = vadd.f32 0.0, %v678
      %680 = vmatmul.f32.gmra.mxu0 %v636
      %v681 = vpop.f32.mrf.mxu0
      %v682 = vadd.f32 0.0, %v681
      %683 = vdwg.mxu0
      %v684 = vadd.f32 %v502, %v656
      %v685 = vadd.f32 %v525, %v679
      %v686 = vadd.f32 %v505, %v659
      %v687 = vadd.f32 %v528, %v682
      %688 = vrot.lane.b32.xlu0 %v271, 16
      %v689 = vpop.permute.xlu0 %688
      %690 = vrot.lane.b32.xlu0 %v272, 16
      %v691 = vpop.permute.xlu0 %690
      %v692 = vsel %vm425, %v689, %v691
      %v696 = vmul.f32 %v337, %v689
      %v697 = vmul.f32 %v338, %v692
      %v698 = vmul.f32 %v339, %v691
      %v699 = vmul.f32 %v340, %v689
      %v700 = vmul.f32 %v341, %v692
      %v701 = vmul.f32 %v342, %v691
      %v702 = vld [vmem:[%s249 + $0x3] sm:$0x1]
      %703 = vset.pattern.permute.xlu0 3
      %704 = vperm.xlu0 %703, %v279
      %v705 = vpop.permute.xlu0 %704
      %707 = vset.pattern.permute.xlu0 3
      %708 = vperm.xlu0 %707, %v280
      %v709 = vpop.permute.xlu0 %708
      %v711 = vperm.slane %v702, 0
      %v712 = vadd.f32 %v705, %v711
      %v713 = vadd.f32 %v709, %v711
      %v714 = vxor.u32 %v712, 2147483648
      %v715 = vxor.u32 %v713, 2147483648
      %v716 = vmul.f32 %v714, 1.442695
      %v717 = vpow.pop %v716
      %v718 = vmul.f32 %v715, 1.442695
      %v719 = vpow.pop %v718
      %v720 = vadd.f32 %v717, 1.0
      %v721 = vadd.f32 %v719, 1.0
      %v722 = vrcp.pop %v720
      %v723 = vmul.f32 %v720, %v722
      %v724 = vsub.f32 1.0, %v723
      %v725 = vmul.f32 %v722, %v724
      %v726 = vadd.f32 %v722, %v725
      %vm727 = vweird.f32 %v720
      %vm728 = vweird.f32 %v722
      %vm729 = vmor %vm727, %vm728
      %v730 = vsel %vm729, %v722, %v726
      %v731 = vand.u32 2147483647, %v720
      %vm732 = vcmp.eq.f32.partialorder %v731, 8.507059e+37
      %v733 = vand.u32 %v720, 2147483648
      %v734 = vor.u32 1.1754944e-38, %v733
      %v735 = vsel %vm732, %v734, %v730
      %v736 = vmul.f32 1.0, %v735
      %v737 = vrcp.pop %v721
      %v738 = vmul.f32 %v721, %v737
      %v739 = vsub.f32 1.0, %v738
      %v740 = vmul.f32 %v737, %v739
      %v741 = vadd.f32 %v737, %v740
      %vm742 = vweird.f32 %v721
      %vm743 = vweird.f32 %v737
      %vm744 = vmor %vm742, %vm743
      %v745 = vsel %vm744, %v737, %v741
      %v746 = vand.u32 2147483647, %v721
      %vm747 = vcmp.eq.f32.partialorder %v746, 8.507059e+37
      %v748 = vand.u32 %v721, 2147483648
      %v749 = vor.u32 1.1754944e-38, %v748
      %v750 = vsel %vm747, %v749, %v745
      %v751 = vmul.f32 1.0, %v750
      %s752 = scalar_lea.vmem %s2, 48
      %v753 = vld [vmem:[%s752] sm:$0xff]
      %v754 = vld [vmem:[%s752 + $0x8] sm:$0xff]
      %v755 = vmul.f32 %v736, %v753
      %v756 = vmul.f32 %v751, %v754
      %763 = vrot.lane.b32.xlu0 %v696, 112
      %v764 = vpop.permute.xlu0 %763
      %765 = vrot.lane.b32.xlu0 %v697, 112
      %v766 = vpop.permute.xlu0 %765
      %767 = vrot.lane.b32.xlu0 %v698, 112
      %v768 = vpop.permute.xlu0 %767
      %769 = vrot.lane.b32.xlu0 %v699, 112
      %v770 = vpop.permute.xlu0 %769
      %771 = vrot.lane.b32.xlu0 %v700, 112
      %v772 = vpop.permute.xlu0 %771
      %773 = vrot.lane.b32.xlu0 %v701, 112
      %v774 = vpop.permute.xlu0 %773
      %vm775 = vcmask 916480
      %v776 = vsel %vm775, %v764, %v766
      %v777 = vsel %vm775, %v766, %v768
      %v778 = vsel %vm775, %v770, %v772
      %v779 = vsel %vm775, %v772, %v774
      %v785 = vsel %vm425, %v755, 0
      %v788 = vsel %vm425, %v756, 0
      %790 = vmatpush.msra.mxu0 0.0
      %791 = vmatpush.msra.mxu0 0.0
      %792 = vmatpush.msra.mxu0 0.0
      %793 = vmatpush.msra.mxu0 0.0
      %794 = vmatpush.msra.mxu0 0.0
      %795 = vmatpush.msra.mxu0 0.0
      %796 = vmatpush.msra.mxu0 0.0
      %797 = vmatpush.msra.mxu0 0.0
      %798 = vmatpush.msra.mxu0 0.0
      %799 = vmatpush.msra.mxu0 0.0
      %800 = vmatpush.msra.mxu0 0.0
      %801 = vmatpush.msra.mxu0 0.0
      %802 = vmatpush.msra.mxu0 0.0
      %803 = vmatpush.msra.mxu0 0.0
      %804 = vmatpush.msra.mxu0 %v778
      %805 = vmatpush.msra.mxu0 %v776
      %806 = vmatmul.f32.gmra.mxu0 %v785
      %v807 = vpop.f32.mrf.mxu0
      %v808 = vadd.f32 0.0, %v807
      %809 = vmatmul.f32.gmra.mxu0 %v788
      %v810 = vpop.f32.mrf.mxu0
      %v811 = vadd.f32 0.0, %v810
      %812 = vdwg.mxu0
      %813 = vmatpush.msra.mxu0 0.0
      %814 = vmatpush.msra.mxu0 0.0
      %815 = vmatpush.msra.mxu0 0.0
      %816 = vmatpush.msra.mxu0 0.0
      %817 = vmatpush.msra.mxu0 0.0
      %818 = vmatpush.msra.mxu0 0.0
      %819 = vmatpush.msra.mxu0 0.0
      %820 = vmatpush.msra.mxu0 0.0
      %821 = vmatpush.msra.mxu0 0.0
      %822 = vmatpush.msra.mxu0 0.0
      %823 = vmatpush.msra.mxu0 0.0
      %824 = vmatpush.msra.mxu0 0.0
      %825 = vmatpush.msra.mxu0 0.0
      %826 = vmatpush.msra.mxu0 0.0
      %827 = vmatpush.msra.mxu0 %v779
      %828 = vmatpush.msra.mxu0 %v777
      %829 = vmatmul.f32.gmra.mxu0 %v785
      %v830 = vpop.f32.mrf.mxu0
      %v831 = vadd.f32 0.0, %v830
      %832 = vmatmul.f32.gmra.mxu0 %v788
      %v833 = vpop.f32.mrf.mxu0
      %v834 = vadd.f32 0.0, %v833
      %835 = vdwg.mxu0
      %v836 = vadd.f32 %v684, %v808
      %v837 = vadd.f32 %v685, %v831
      %v838 = vadd.f32 %v686, %v811
      %v839 = vadd.f32 %v687, %v834
      %v840 = vld [vmem:[%s249 + $0x4] sm:$0x1]
      %841 = vset.pattern.permute.xlu0 4
      %842 = vperm.xlu0 %841, %v279
      %v843 = vpop.permute.xlu0 %842
      %845 = vset.pattern.permute.xlu0 4
      %846 = vperm.xlu0 %845, %v280
      %v847 = vpop.permute.xlu0 %846
      %v849 = vperm.slane %v840, 0
      %v850 = vadd.f32 %v843, %v849
      %v851 = vadd.f32 %v847, %v849
      %v852 = vxor.u32 %v850, 2147483648
      %v853 = vxor.u32 %v851, 2147483648
      %v854 = vmul.f32 %v852, 1.442695
      %v855 = vpow.pop %v854
      %v856 = vmul.f32 %v853, 1.442695
      %v857 = vpow.pop %v856
      %v858 = vadd.f32 %v855, 1.0
      %v859 = vadd.f32 %v857, 1.0
      %v860 = vrcp.pop %v858
      %v861 = vmul.f32 %v858, %v860
      %v862 = vsub.f32 1.0, %v861
      %v863 = vmul.f32 %v860, %v862
      %v864 = vadd.f32 %v860, %v863
      %vm865 = vweird.f32 %v858
      %vm866 = vweird.f32 %v860
      %vm867 = vmor %vm865, %vm866
      %v868 = vsel %vm867, %v860, %v864
      %v869 = vand.u32 2147483647, %v858
      %vm870 = vcmp.eq.f32.partialorder %v869, 8.507059e+37
      %v871 = vand.u32 %v858, 2147483648
      %v872 = vor.u32 1.1754944e-38, %v871
      %v873 = vsel %vm870, %v872, %v868
      %v874 = vmul.f32 1.0, %v873
      %v875 = vrcp.pop %v859
      %v876 = vmul.f32 %v859, %v875
      %v877 = vsub.f32 1.0, %v876
      %v878 = vmul.f32 %v875, %v877
      %v879 = vadd.f32 %v875, %v878
      %vm880 = vweird.f32 %v859
      %vm881 = vweird.f32 %v875
      %vm882 = vmor %vm880, %vm881
      %v883 = vsel %vm882, %v875, %v879
      %v884 = vand.u32 2147483647, %v859
      %vm885 = vcmp.eq.f32.partialorder %v884, 8.507059e+37
      %v886 = vand.u32 %v859, 2147483648
      %v887 = vor.u32 1.1754944e-38, %v886
      %v888 = vsel %vm885, %v887, %v883
      %v889 = vmul.f32 1.0, %v888
      %s890 = scalar_lea.vmem %s2, 64
      %v891 = vld [vmem:[%s890] sm:$0xff]
      %v892 = vld [vmem:[%s890 + $0x8] sm:$0xff]
      %v893 = vmul.f32 %v874, %v891
      %v894 = vmul.f32 %v889, %v892
      %895 = vrot.lane.b32.xlu0 %v337, 111
      %v896 = vpop.permute.xlu0 %895
      %897 = vrot.lane.b32.xlu0 %v338, 111
      %v898 = vpop.permute.xlu0 %897
      %899 = vrot.lane.b32.xlu0 %v339, 111
      %v900 = vpop.permute.xlu0 %899
      %901 = vrot.lane.b32.xlu0 %v340, 111
      %v902 = vpop.permute.xlu0 %901
      %903 = vrot.lane.b32.xlu0 %v341, 111
      %v904 = vpop.permute.xlu0 %903
      %905 = vrot.lane.b32.xlu0 %v342, 111
      %v906 = vpop.permute.xlu0 %905
      %vm907 = vcmask 908288
      %v908 = vsel %vm907, %v896, %v898
      %v909 = vsel %vm907, %v898, %v900
      %v910 = vsel %vm907, %v902, %v904
      %v911 = vsel %vm907, %v904, %v906
      %v917 = vsel %vm425, %v893, 0
      %v920 = vsel %vm425, %v894, 0
      %922 = vmatpush.msra.mxu0 0.0
      %923 = vmatpush.msra.mxu0 0.0
      %924 = vmatpush.msra.mxu0 0.0
      %925 = vmatpush.msra.mxu0 0.0
      %926 = vmatpush.msra.mxu0 0.0
      %927 = vmatpush.msra.mxu0 0.0
      %928 = vmatpush.msra.mxu0 0.0
      %929 = vmatpush.msra.mxu0 0.0
      %930 = vmatpush.msra.mxu0 0.0
      %931 = vmatpush.msra.mxu0 0.0
      %932 = vmatpush.msra.mxu0 0.0
      %933 = vmatpush.msra.mxu0 0.0
      %934 = vmatpush.msra.mxu0 0.0
      %935 = vmatpush.msra.mxu0 0.0
      %936 = vmatpush.msra.mxu0 %v910
      %937 = vmatpush.msra.mxu0 %v908
      %938 = vmatmul.f32.gmra.mxu0 %v917
      %v939 = vpop.f32.mrf.mxu0
      %v940 = vadd.f32 0.0, %v939
      %941 = vmatmul.f32.gmra.mxu0 %v920
      %v942 = vpop.f32.mrf.mxu0
      %v943 = vadd.f32 0.0, %v942
      %944 = vdwg.mxu0
      %945 = vmatpush.msra.mxu0 0.0
      %946 = vmatpush.msra.mxu0 0.0
      %947 = vmatpush.msra.mxu0 0.0
      %948 = vmatpush.msra.mxu0 0.0
      %949 = vmatpush.msra.mxu0 0.0
      %950 = vmatpush.msra.mxu0 0.0
      %951 = vmatpush.msra.mxu0 0.0
      %952 = vmatpush.msra.mxu0 0.0
      %953 = vmatpush.msra.mxu0 0.0
      %954 = vmatpush.msra.mxu0 0.0
      %955 = vmatpush.msra.mxu0 0.0
      %956 = vmatpush.msra.mxu0 0.0
      %957 = vmatpush.msra.mxu0 0.0
      %958 = vmatpush.msra.mxu0 0.0
      %959 = vmatpush.msra.mxu0 %v911
      %960 = vmatpush.msra.mxu0 %v909
      %961 = vmatmul.f32.gmra.mxu0 %v917
      %v962 = vpop.f32.mrf.mxu0
      %v963 = vadd.f32 0.0, %v962
      %964 = vmatmul.f32.gmra.mxu0 %v920
      %v965 = vpop.f32.mrf.mxu0
      %v966 = vadd.f32 0.0, %v965
      %967 = vdwg.mxu0
      %v968 = vadd.f32 %v836, %v940
      %v969 = vadd.f32 %v837, %v963
      %v970 = vadd.f32 %v838, %v943
      %v971 = vadd.f32 %v839, %v966
      %972 = vrot.lane.b32.xlu0 %v533, 18
      %v973 = vpop.permute.xlu0 %972
      %974 = vrot.lane.b32.xlu0 %v534, 18
      %v975 = vpop.permute.xlu0 %974
      %vm976 = vcmask 146432
      %v977 = vsel %vm976, %v973, %v975
      %v981 = vmul.f32 %v337, %v973
      %v982 = vmul.f32 %v338, %v977
      %v983 = vmul.f32 %v339, %v975
      %v984 = vmul.f32 %v340, %v973
      %v985 = vmul.f32 %v341, %v977
      %v986 = vmul.f32 %v342, %v975
      %v987 = vld [vmem:[%s249 + $0x5] sm:$0x1]
      %988 = vset.pattern.permute.xlu0 5
      %989 = vperm.xlu0 %988, %v279
      %v990 = vpop.permute.xlu0 %989
      %992 = vset.pattern.permute.xlu0 5
      %993 = vperm.xlu0 %992, %v280
      %v994 = vpop.permute.xlu0 %993
      %v996 = vperm.slane %v987, 0
      %v997 = vadd.f32 %v990, %v996
      %v998 = vadd.f32 %v994, %v996
      %v999 = vxor.u32 %v997, 2147483648
      %v1000 = vxor.u32 %v998, 2147483648
      %v1001 = vmul.f32 %v999, 1.442695
      %v1002 = vpow.pop %v1001
      %v1003 = vmul.f32 %v1000, 1.442695
      %v1004 = vpow.pop %v1003
      %v1005 = vadd.f32 %v1002, 1.0
      %v1006 = vadd.f32 %v1004, 1.0
      %v1007 = vrcp.pop %v1005
      %v1008 = vmul.f32 %v1005, %v1007
      %v1009 = vsub.f32 1.0, %v1008
      %v1010 = vmul.f32 %v1007, %v1009
      %v1011 = vadd.f32 %v1007, %v1010
      %vm1012 = vweird.f32 %v1005
      %vm1013 = vweird.f32 %v1007
      %vm1014 = vmor %vm1012, %vm1013
      %v1015 = vsel %vm1014, %v1007, %v1011
      %v1016 = vand.u32 2147483647, %v1005
      %vm1017 = vcmp.eq.f32.partialorder %v1016, 8.507059e+37
      %v1018 = vand.u32 %v1005, 2147483648
      %v1019 = vor.u32 1.1754944e-38, %v1018
      %v1020 = vsel %vm1017, %v1019, %v1015
      %v1021 = vmul.f32 1.0, %v1020
      %v1022 = vrcp.pop %v1006
      %v1023 = vmul.f32 %v1006, %v1022
      %v1024 = vsub.f32 1.0, %v1023
      %v1025 = vmul.f32 %v1022, %v1024
      %v1026 = vadd.f32 %v1022, %v1025
      %vm1027 = vweird.f32 %v1006
      %vm1028 = vweird.f32 %v1022
      %vm1029 = vmor %vm1027, %vm1028
      %v1030 = vsel %vm1029, %v1022, %v1026
      %v1031 = vand.u32 2147483647, %v1006
      %vm1032 = vcmp.eq.f32.partialorder %v1031, 8.507059e+37
      %v1033 = vand.u32 %v1006, 2147483648
      %v1034 = vor.u32 1.1754944e-38, %v1033
      %v1035 = vsel %vm1032, %v1034, %v1030
      %v1036 = vmul.f32 1.0, %v1035
      %s1037 = scalar_lea.vmem %s2, 80
      %v1038 = vld [vmem:[%s1037] sm:$0xff]
      %v1039 = vld [vmem:[%s1037 + $0x8] sm:$0xff]
      %v1040 = vmul.f32 %v1021, %v1038
      %v1041 = vmul.f32 %v1036, %v1039
      %1048 = vrot.lane.b32.xlu0 %v981, 110
      %v1049 = vpop.permute.xlu0 %1048
      %1050 = vrot.lane.b32.xlu0 %v982, 110
      %v1051 = vpop.permute.xlu0 %1050
      %1052 = vrot.lane.b32.xlu0 %v983, 110
      %v1053 = vpop.permute.xlu0 %1052
      %1054 = vrot.lane.b32.xlu0 %v984, 110
      %v1055 = vpop.permute.xlu0 %1054
      %1056 = vrot.lane.b32.xlu0 %v985, 110
      %v1057 = vpop.permute.xlu0 %1056
      %1058 = vrot.lane.b32.xlu0 %v986, 110
      %v1059 = vpop.permute.xlu0 %1058
      %vm1060 = vcmask 900096
      %v1061 = vsel %vm1060, %v1049, %v1051
      %v1062 = vsel %vm1060, %v1051, %v1053
      %v1063 = vsel %vm1060, %v1055, %v1057
      %v1064 = vsel %vm1060, %v1057, %v1059
      %v1070 = vsel %vm425, %v1040, 0
      %v1073 = vsel %vm425, %v1041, 0
      %1075 = vmatpush.msra.mxu0 0.0
      %1076 = vmatpush.msra.mxu0 0.0
      %1077 = vmatpush.msra.mxu0 0.0
      %1078 = vmatpush.msra.mxu0 0.0
      %1079 = vmatpush.msra.mxu0 0.0
      %1080 = vmatpush.msra.mxu0 0.0
      %1081 = vmatpush.msra.mxu0 0.0
      %1082 = vmatpush.msra.mxu0 0.0
      %1083 = vmatpush.msra.mxu0 0.0
      %1084 = vmatpush.msra.mxu0 0.0
      %1085 = vmatpush.msra.mxu0 0.0
      %1086 = vmatpush.msra.mxu0 0.0
      %1087 = vmatpush.msra.mxu0 0.0
      %1088 = vmatpush.msra.mxu0 0.0
      %1089 = vmatpush.msra.mxu0 %v1063
      %1090 = vmatpush.msra.mxu0 %v1061
      %1091 = vmatmul.f32.gmra.mxu0 %v1070
      %v1092 = vpop.f32.mrf.mxu0
      %v1093 = vadd.f32 0.0, %v1092
      %1094 = vmatmul.f32.gmra.mxu0 %v1073
      %v1095 = vpop.f32.mrf.mxu0
      %v1096 = vadd.f32 0.0, %v1095
      %1097 = vdwg.mxu0
      %1098 = vmatpush.msra.mxu0 0.0
      %1099 = vmatpush.msra.mxu0 0.0
      %1100 = vmatpush.msra.mxu0 0.0
      %1101 = vmatpush.msra.mxu0 0.0
      %1102 = vmatpush.msra.mxu0 0.0
      %1103 = vmatpush.msra.mxu0 0.0
      %1104 = vmatpush.msra.mxu0 0.0
      %1105 = vmatpush.msra.mxu0 0.0
      %1106 = vmatpush.msra.mxu0 0.0
      %1107 = vmatpush.msra.mxu0 0.0
      %1108 = vmatpush.msra.mxu0 0.0
      %1109 = vmatpush.msra.mxu0 0.0
      %1110 = vmatpush.msra.mxu0 0.0
      %1111 = vmatpush.msra.mxu0 0.0
      %1112 = vmatpush.msra.mxu0 %v1064
      %1113 = vmatpush.msra.mxu0 %v1062
      %1114 = vmatmul.f32.gmra.mxu0 %v1070
      %v1115 = vpop.f32.mrf.mxu0
      %v1116 = vadd.f32 0.0, %v1115
      %1117 = vmatmul.f32.gmra.mxu0 %v1073
      %v1118 = vpop.f32.mrf.mxu0
      %v1119 = vadd.f32 0.0, %v1118
      %1120 = vdwg.mxu0
      %v1121 = vadd.f32 %v968, %v1093
      %v1122 = vadd.f32 %v969, %v1116
      %v1123 = vadd.f32 %v970, %v1096
      %v1124 = vadd.f32 %v971, %v1119
      %1125 = vrot.lane.b32.xlu0 %v271, 32
      %v1126 = vpop.permute.xlu0 %1125
      %1127 = vrot.lane.b32.xlu0 %v272, 32
      %v1128 = vpop.permute.xlu0 %1127
      %vm1129 = vcmask 261120
      %v1130 = vsel %vm1129, %v1126, %v1128
      %v1134 = vmul.f32 %v337, %v1126
      %v1135 = vmul.f32 %v338, %v1130
      %v1136 = vmul.f32 %v339, %v1128
      %v1137 = vmul.f32 %v340, %v1126
      %v1138 = vmul.f32 %v341, %v1130
      %v1139 = vmul.f32 %v342, %v1128
      %v1140 = vld [vmem:[%s249 + $0x6] sm:$0x1]
      %1141 = vset.pattern.permute.xlu0 6
      %1142 = vperm.xlu0 %1141, %v279
      %v1143 = vpop.permute.xlu0 %1142
      %1145 = vset.pattern.permute.xlu0 6
      %1146 = vperm.xlu0 %1145, %v280
      %v1147 = vpop.permute.xlu0 %1146
      %v1149 = vperm.slane %v1140, 0
      %v1150 = vadd.f32 %v1143, %v1149
      %v1151 = vadd.f32 %v1147, %v1149
      %v1152 = vxor.u32 %v1150, 2147483648
      %v1153 = vxor.u32 %v1151, 2147483648
      %v1154 = vmul.f32 %v1152, 1.442695
      %v1155 = vpow.pop %v1154
      %v1156 = vmul.f32 %v1153, 1.442695
      %v1157 = vpow.pop %v1156
      %v1158 = vadd.f32 %v1155, 1.0
      %v1159 = vadd.f32 %v1157, 1.0
      %v1160 = vrcp.pop %v1158
      %v1161 = vmul.f32 %v1158, %v1160
      %v1162 = vsub.f32 1.0, %v1161
      %v1163 = vmul.f32 %v1160, %v1162
      %v1164 = vadd.f32 %v1160, %v1163
      %vm1165 = vweird.f32 %v1158
      %vm1166 = vweird.f32 %v1160
      %vm1167 = vmor %vm1165, %vm1166
      %v1168 = vsel %vm1167, %v1160, %v1164
      %v1169 = vand.u32 2147483647, %v1158
      %vm1170 = vcmp.eq.f32.partialorder %v1169, 8.507059e+37
      %v1171 = vand.u32 %v1158, 2147483648
      %v1172 = vor.u32 1.1754944e-38, %v1171
      %v1173 = vsel %vm1170, %v1172, %v1168
      %v1174 = vmul.f32 1.0, %v1173
      %v1175 = vrcp.pop %v1159
      %v1176 = vmul.f32 %v1159, %v1175
      %v1177 = vsub.f32 1.0, %v1176
      %v1178 = vmul.f32 %v1175, %v1177
      %v1179 = vadd.f32 %v1175, %v1178
      %vm1180 = vweird.f32 %v1159
      %vm1181 = vweird.f32 %v1175
      %vm1182 = vmor %vm1180, %vm1181
      %v1183 = vsel %vm1182, %v1175, %v1179
      %v1184 = vand.u32 2147483647, %v1159
      %vm1185 = vcmp.eq.f32.partialorder %v1184, 8.507059e+37
      %v1186 = vand.u32 %v1159, 2147483648
      %v1187 = vor.u32 1.1754944e-38, %v1186
      %v1188 = vsel %vm1185, %v1187, %v1183
      %v1189 = vmul.f32 1.0, %v1188
      %s1190 = scalar_lea.vmem %s2, 96
      %v1191 = vld [vmem:[%s1190] sm:$0xff]
      %v1192 = vld [vmem:[%s1190 + $0x8] sm:$0xff]
      %v1193 = vmul.f32 %v1174, %v1191
      %v1194 = vmul.f32 %v1189, %v1192
      %1201 = vrot.lane.b32.xlu0 %v1134, 96
      %v1202 = vpop.permute.xlu0 %1201
      %1203 = vrot.lane.b32.xlu0 %v1135, 96
      %v1204 = vpop.permute.xlu0 %1203
      %1205 = vrot.lane.b32.xlu0 %v1136, 96
      %v1206 = vpop.permute.xlu0 %1205
      %1207 = vrot.lane.b32.xlu0 %v1137, 96
      %v1208 = vpop.permute.xlu0 %1207
      %1209 = vrot.lane.b32.xlu0 %v1138, 96
      %v1210 = vpop.permute.xlu0 %1209
      %1211 = vrot.lane.b32.xlu0 %v1139, 96
      %v1212 = vpop.permute.xlu0 %1211
      %vm1213 = vcmask 785408
      %v1214 = vsel %vm1213, %v1202, %v1204
      %v1215 = vsel %vm1213, %v1204, %v1206
      %v1216 = vsel %vm1213, %v1208, %v1210
      %v1217 = vsel %vm1213, %v1210, %v1212
      %v1223 = vsel %vm425, %v1193, 0
      %v1226 = vsel %vm425, %v1194, 0
      %1228 = vmatpush.msra.mxu0 0.0
      %1229 = vmatpush.msra.mxu0 0.0
      %1230 = vmatpush.msra.mxu0 0.0
      %1231 = vmatpush.msra.mxu0 0.0
      %1232 = vmatpush.msra.mxu0 0.0
      %1233 = vmatpush.msra.mxu0 0.0
      %1234 = vmatpush.msra.mxu0 0.0
      %1235 = vmatpush.msra.mxu0 0.0
      %1236 = vmatpush.msra.mxu0 0.0
      %1237 = vmatpush.msra.mxu0 0.0
      %1238 = vmatpush.msra.mxu0 0.0
      %1239 = vmatpush.msra.mxu0 0.0
      %1240 = vmatpush.msra.mxu0 0.0
      %1241 = vmatpush.msra.mxu0 0.0
      %1242 = vmatpush.msra.mxu0 %v1216
      %1243 = vmatpush.msra.mxu0 %v1214
      %1244 = vmatmul.f32.gmra.mxu0 %v1223
      %v1245 = vpop.f32.mrf.mxu0
      %v1246 = vadd.f32 0.0, %v1245
      %1247 = vmatmul.f32.gmra.mxu0 %v1226
      %v1248 = vpop.f32.mrf.mxu0
      %v1249 = vadd.f32 0.0, %v1248
      %1250 = vdwg.mxu0
      %1251 = vmatpush.msra.mxu0 0.0
      %1252 = vmatpush.msra.mxu0 0.0
      %1253 = vmatpush.msra.mxu0 0.0
      %1254 = vmatpush.msra.mxu0 0.0
      %1255 = vmatpush.msra.mxu0 0.0
      %1256 = vmatpush.msra.mxu0 0.0
      %1257 = vmatpush.msra.mxu0 0.0
      %1258 = vmatpush.msra.mxu0 0.0
      %1259 = vmatpush.msra.mxu0 0.0
      %1260 = vmatpush.msra.mxu0 0.0
      %1261 = vmatpush.msra.mxu0 0.0
      %1262 = vmatpush.msra.mxu0 0.0
      %1263 = vmatpush.msra.mxu0 0.0
      %1264 = vmatpush.msra.mxu0 0.0
      %1265 = vmatpush.msra.mxu0 %v1217
      %1266 = vmatpush.msra.mxu0 %v1215
      %1267 = vmatmul.f32.gmra.mxu0 %v1223
      %v1268 = vpop.f32.mrf.mxu0
      %v1269 = vadd.f32 0.0, %v1268
      %1270 = vmatmul.f32.gmra.mxu0 %v1226
      %v1271 = vpop.f32.mrf.mxu0
      %v1272 = vadd.f32 0.0, %v1271
      %1273 = vdwg.mxu0
      %v1274 = vadd.f32 %v1121, %v1246
      %v1275 = vadd.f32 %v1122, %v1269
      %v1276 = vadd.f32 %v1123, %v1249
      %v1277 = vadd.f32 %v1124, %v1272
      %v1278 = vld [vmem:[%s249 + $0x7] sm:$0x1]
      %1279 = vset.pattern.permute.xlu0 7
      %1280 = vperm.xlu0 %1279, %v279
      %v1281 = vpop.permute.xlu0 %1280
      %1283 = vset.pattern.permute.xlu0 7
      %1284 = vperm.xlu0 %1283, %v280
      %v1285 = vpop.permute.xlu0 %1284
      %v1287 = vperm.slane %v1278, 0
      %v1288 = vadd.f32 %v1281, %v1287
      %v1289 = vadd.f32 %v1285, %v1287
      %v1290 = vxor.u32 %v1288, 2147483648
      %v1291 = vxor.u32 %v1289, 2147483648
      %v1292 = vmul.f32 %v1290, 1.442695
      %v1293 = vpow.pop %v1292
      %v1294 = vmul.f32 %v1291, 1.442695
      %v1295 = vpow.pop %v1294
      %v1296 = vadd.f32 %v1293, 1.0
      %v1297 = vadd.f32 %v1295, 1.0
      %v1298 = vrcp.pop %v1296
      %v1299 = vmul.f32 %v1296, %v1298
      %v1300 = vsub.f32 1.0, %v1299
      %v1301 = vmul.f32 %v1298, %v1300
      %v1302 = vadd.f32 %v1298, %v1301
      %vm1303 = vweird.f32 %v1296
      %vm1304 = vweird.f32 %v1298
      %vm1305 = vmor %vm1303, %vm1304
      %v1306 = vsel %vm1305, %v1298, %v1302
      %v1307 = vand.u32 2147483647, %v1296
      %vm1308 = vcmp.eq.f32.partialorder %v1307, 8.507059e+37
      %v1309 = vand.u32 %v1296, 2147483648
      %v1310 = vor.u32 1.1754944e-38, %v1309
      %v1311 = vsel %vm1308, %v1310, %v1306
      %v1312 = vmul.f32 1.0, %v1311
      %v1313 = vrcp.pop %v1297
      %v1314 = vmul.f32 %v1297, %v1313
      %v1315 = vsub.f32 1.0, %v1314
      %v1316 = vmul.f32 %v1313, %v1315
      %v1317 = vadd.f32 %v1313, %v1316
      %vm1318 = vweird.f32 %v1297
      %vm1319 = vweird.f32 %v1313
      %vm1320 = vmor %vm1318, %vm1319
      %v1321 = vsel %vm1320, %v1313, %v1317
      %v1322 = vand.u32 2147483647, %v1297
      %vm1323 = vcmp.eq.f32.partialorder %v1322, 8.507059e+37
      %v1324 = vand.u32 %v1297, 2147483648
      %v1325 = vor.u32 1.1754944e-38, %v1324
      %v1326 = vsel %vm1323, %v1325, %v1321
      %v1327 = vmul.f32 1.0, %v1326
      %s1328 = scalar_lea.vmem %s2, 112
      %v1329 = vld [vmem:[%s1328] sm:$0xff]
      %v1330 = vld [vmem:[%s1328 + $0x8] sm:$0xff]
      %v1331 = vmul.f32 %v1312, %v1329
      %v1332 = vmul.f32 %v1327, %v1330
      %1333 = vrot.lane.b32.xlu0 %v337, 95
      %v1334 = vpop.permute.xlu0 %1333
      %1335 = vrot.lane.b32.xlu0 %v338, 95
      %v1336 = vpop.permute.xlu0 %1335
      %1337 = vrot.lane.b32.xlu0 %v339, 95
      %v1338 = vpop.permute.xlu0 %1337
      %1339 = vrot.lane.b32.xlu0 %v340, 95
      %v1340 = vpop.permute.xlu0 %1339
      %1341 = vrot.lane.b32.xlu0 %v341, 95
      %v1342 = vpop.permute.xlu0 %1341
      %1343 = vrot.lane.b32.xlu0 %v342, 95
      %v1344 = vpop.permute.xlu0 %1343
      %vm1345 = vcmask 777216
      %v1346 = vsel %vm1345, %v1334, %v1336
      %v1347 = vsel %vm1345, %v1336, %v1338
      %v1348 = vsel %vm1345, %v1340, %v1342
      %v1349 = vsel %vm1345, %v1342, %v1344
      %v1355 = vsel %vm425, %v1331, 0
      %v1358 = vsel %vm425, %v1332, 0
      %1360 = vmatpush.msra.mxu0 0.0
      %1361 = vmatpush.msra.mxu0 0.0
      %1362 = vmatpush.msra.mxu0 0.0
      %1363 = vmatpush.msra.mxu0 0.0
      %1364 = vmatpush.msra.mxu0 0.0
      %1365 = vmatpush.msra.mxu0 0.0
      %1366 = vmatpush.msra.mxu0 0.0
      %1367 = vmatpush.msra.mxu0 0.0
      %1368 = vmatpush.msra.mxu0 0.0
      %1369 = vmatpush.msra.mxu0 0.0
      %1370 = vmatpush.msra.mxu0 0.0
      %1371 = vmatpush.msra.mxu0 0.0
      %1372 = vmatpush.msra.mxu0 0.0
      %1373 = vmatpush.msra.mxu0 0.0
      %1374 = vmatpush.msra.mxu0 %v1348
      %1375 = vmatpush.msra.mxu0 %v1346
      %1376 = vmatmul.f32.gmra.mxu0 %v1355
      %v1377 = vpop.f32.mrf.mxu0
      %v1378 = vadd.f32 0.0, %v1377
      %1379 = vmatmul.f32.gmra.mxu0 %v1358
      %v1380 = vpop.f32.mrf.mxu0
      %v1381 = vadd.f32 0.0, %v1380
      %1382 = vdwg.mxu0
      %1383 = vmatpush.msra.mxu0 0.0
      %1384 = vmatpush.msra.mxu0 0.0
      %1385 = vmatpush.msra.mxu0 0.0
      %1386 = vmatpush.msra.mxu0 0.0
      %1387 = vmatpush.msra.mxu0 0.0
      %1388 = vmatpush.msra.mxu0 0.0
      %1389 = vmatpush.msra.mxu0 0.0
      %1390 = vmatpush.msra.mxu0 0.0
      %1391 = vmatpush.msra.mxu0 0.0
      %1392 = vmatpush.msra.mxu0 0.0
      %1393 = vmatpush.msra.mxu0 0.0
      %1394 = vmatpush.msra.mxu0 0.0
      %1395 = vmatpush.msra.mxu0 0.0
      %1396 = vmatpush.msra.mxu0 0.0
      %1397 = vmatpush.msra.mxu0 %v1349
      %1398 = vmatpush.msra.mxu0 %v1347
      %1399 = vmatmul.f32.gmra.mxu0 %v1355
      %v1400 = vpop.f32.mrf.mxu0
      %v1401 = vadd.f32 0.0, %v1400
      %1402 = vmatmul.f32.gmra.mxu0 %v1358
      %v1403 = vpop.f32.mrf.mxu0
      %v1404 = vadd.f32 0.0, %v1403
      %1405 = vdwg.mxu0
      %v1406 = vadd.f32 %v1274, %v1378
      %v1407 = vadd.f32 %v1275, %v1401
      %v1408 = vadd.f32 %v1276, %v1381
      %v1409 = vadd.f32 %v1277, %v1404
      %1410 = vrot.lane.b32.xlu0 %v533, 34
      %v1411 = vpop.permute.xlu0 %1410
      %1412 = vrot.lane.b32.xlu0 %v534, 34
      %v1413 = vpop.permute.xlu0 %1412
      %vm1414 = vcmask 277504
      %v1415 = vsel %vm1414, %v1411, %v1413
      %v1419 = vmul.f32 %v337, %v1411
      %v1420 = vmul.f32 %v338, %v1415
      %v1421 = vmul.f32 %v339, %v1413
      %v1422 = vmul.f32 %v340, %v1411
      %v1423 = vmul.f32 %v341, %v1415
      %v1424 = vmul.f32 %v342, %v1413
      %v1425 = vld [vmem:[%s249 + $0x8] sm:$0x1]
      %1426 = vset.pattern.permute.xlu0 8
      %1427 = vperm.xlu0 %1426, %v279
      %v1428 = vpop.permute.xlu0 %1427
      %1430 = vset.pattern.permute.xlu0 8
      %1431 = vperm.xlu0 %1430, %v280
      %v1432 = vpop.permute.xlu0 %1431
      %v1434 = vperm.slane %v1425, 0
      %v1435 = vadd.f32 %v1428, %v1434
      %v1436 = vadd.f32 %v1432, %v1434
      %v1437 = vxor.u32 %v1435, 2147483648
      %v1438 = vxor.u32 %v1436, 2147483648
      %v1439 = vmul.f32 %v1437, 1.442695
      %v1440 = vpow.pop %v1439
      %v1441 = vmul.f32 %v1438, 1.442695
      %v1442 = vpow.pop %v1441
      %v1443 = vadd.f32 %v1440, 1.0
      %v1444 = vadd.f32 %v1442, 1.0
      %v1445 = vrcp.pop %v1443
      %v1446 = vmul.f32 %v1443, %v1445
      %v1447 = vsub.f32 1.0, %v1446
      %v1448 = vmul.f32 %v1445, %v1447
      %v1449 = vadd.f32 %v1445, %v1448
      %vm1450 = vweird.f32 %v1443
      %vm1451 = vweird.f32 %v1445
      %vm1452 = vmor %vm1450, %vm1451
      %v1453 = vsel %vm1452, %v1445, %v1449
      %v1454 = vand.u32 2147483647, %v1443
      %vm1455 = vcmp.eq.f32.partialorder %v1454, 8.507059e+37
      %v1456 = vand.u32 %v1443, 2147483648
      %v1457 = vor.u32 1.1754944e-38, %v1456
      %v1458 = vsel %vm1455, %v1457, %v1453
      %v1459 = vmul.f32 1.0, %v1458
      %v1460 = vrcp.pop %v1444
      %v1461 = vmul.f32 %v1444, %v1460
      %v1462 = vsub.f32 1.0, %v1461
      %v1463 = vmul.f32 %v1460, %v1462
      %v1464 = vadd.f32 %v1460, %v1463
      %vm1465 = vweird.f32 %v1444
      %vm1466 = vweird.f32 %v1460
      %vm1467 = vmor %vm1465, %vm1466
      %v1468 = vsel %vm1467, %v1460, %v1464
      %v1469 = vand.u32 2147483647, %v1444
      %vm1470 = vcmp.eq.f32.partialorder %v1469, 8.507059e+37
      %v1471 = vand.u32 %v1444, 2147483648
      %v1472 = vor.u32 1.1754944e-38, %v1471
      %v1473 = vsel %vm1470, %v1472, %v1468
      %v1474 = vmul.f32 1.0, %v1473
      %s1475 = scalar_lea.vmem %s2, 128
      %v1476 = vld [vmem:[%s1475] sm:$0xff]
      %v1477 = vld [vmem:[%s1475 + $0x8] sm:$0xff]
      %v1478 = vmul.f32 %v1459, %v1476
      %v1479 = vmul.f32 %v1474, %v1477
      %1486 = vrot.lane.b32.xlu0 %v1419, 94
      %v1487 = vpop.permute.xlu0 %1486
      %1488 = vrot.lane.b32.xlu0 %v1420, 94
      %v1489 = vpop.permute.xlu0 %1488
      %1490 = vrot.lane.b32.xlu0 %v1421, 94
      %v1491 = vpop.permute.xlu0 %1490
      %1492 = vrot.lane.b32.xlu0 %v1422, 94
      %v1493 = vpop.permute.xlu0 %1492
      %1494 = vrot.lane.b32.xlu0 %v1423, 94
      %v1495 = vpop.permute.xlu0 %1494
      %1496 = vrot.lane.b32.xlu0 %v1424, 94
      %v1497 = vpop.permute.xlu0 %1496
      %vm1498 = vcmask 769024
      %v1499 = vsel %vm1498, %v1487, %v1489
      %v1500 = vsel %vm1498, %v1489, %v1491
      %v1501 = vsel %vm1498, %v1493, %v1495
      %v1502 = vsel %vm1498, %v1495, %v1497
      %v1508 = vsel %vm425, %v1478, 0
      %v1511 = vsel %vm425, %v1479, 0
      %1513 = vmatpush.msra.mxu0 0.0
      %1514 = vmatpush.msra.mxu0 0.0
      %1515 = vmatpush.msra.mxu0 0.0
      %1516 = vmatpush.msra.mxu0 0.0
      %1517 = vmatpush.msra.mxu0 0.0
      %1518 = vmatpush.msra.mxu0 0.0
      %1519 = vmatpush.msra.mxu0 0.0
      %1520 = vmatpush.msra.mxu0 0.0
      %1521 = vmatpush.msra.mxu0 0.0
      %1522 = vmatpush.msra.mxu0 0.0
      %1523 = vmatpush.msra.mxu0 0.0
      %1524 = vmatpush.msra.mxu0 0.0
      %1525 = vmatpush.msra.mxu0 0.0
      %1526 = vmatpush.msra.mxu0 0.0
      %1527 = vmatpush.msra.mxu0 %v1501
      %1528 = vmatpush.msra.mxu0 %v1499
      %1529 = vmatmul.f32.gmra.mxu0 %v1508
      %v1530 = vpop.f32.mrf.mxu0
      %v1531 = vadd.f32 0.0, %v1530
      %1532 = vmatmul.f32.gmra.mxu0 %v1511
      %v1533 = vpop.f32.mrf.mxu0
      %v1534 = vadd.f32 0.0, %v1533
      %1535 = vdwg.mxu0
      %1536 = vmatpush.msra.mxu0 0.0
      %1537 = vmatpush.msra.mxu0 0.0
      %1538 = vmatpush.msra.mxu0 0.0
      %1539 = vmatpush.msra.mxu0 0.0
      %1540 = vmatpush.msra.mxu0 0.0
      %1541 = vmatpush.msra.mxu0 0.0
      %1542 = vmatpush.msra.mxu0 0.0
      %1543 = vmatpush.msra.mxu0 0.0
      %1544 = vmatpush.msra.mxu0 0.0
      %1545 = vmatpush.msra.mxu0 0.0
      %1546 = vmatpush.msra.mxu0 0.0
      %1547 = vmatpush.msra.mxu0 0.0
      %1548 = vmatpush.msra.mxu0 0.0
      %1549 = vmatpush.msra.mxu0 0.0
      %1550 = vmatpush.msra.mxu0 %v1502
      %1551 = vmatpush.msra.mxu0 %v1500
      %1552 = vmatmul.f32.gmra.mxu0 %v1508
      %v1553 = vpop.f32.mrf.mxu0
      %v1554 = vadd.f32 0.0, %v1553
      %1555 = vmatmul.f32.gmra.mxu0 %v1511
      %v1556 = vpop.f32.mrf.mxu0
      %v1557 = vadd.f32 0.0, %v1556
      %1558 = vdwg.mxu0
      %v1559 = vadd.f32 %v1406, %v1531
      %v1560 = vadd.f32 %v1407, %v1554
      %v1561 = vadd.f32 %v1408, %v1534
      %v1562 = vadd.f32 %v1409, %v1557
      %v1563 = vmax.f32 %v1559, 0.0
      %v1564 = vmax.f32 %v1560, 0.0
      %v1565 = vmax.f32 %v1561, 0.0
      %v1566 = vmax.f32 %v1562, 0.0
      %1567 = vst [vmem:[%s264] sm:$0xff] %v1563
      %1568 = vst [vmem:[%s264 + $0x8] sm:$0xff] %v1564
      %1569 = vst [vmem:[%s264 + $0x10] sm:$0xff] %v1565
      %1570 = vst [vmem:[%s264 + $0x18] sm:$0xff] %v1566
      %p1571 = scmp.lt.s32.totalorder %s16, 1
      %s1572 = scalar_select %p1571, %s16, 1
      %s1573 = smul.addr %s1572, 4
      %s1574 = smul.addr %s1573, 8
      %s1575 = scalar_lea.vmem %s5, %s1574
      // Predicated region
      $region41: #{_lambda_.6} parent=39 // pred_check
        %p1576 = pneg %p154
      $region42: #{_lambda_.6} parent=39 // pred_check_branch
        %1578 = sbr.rel (%p1576) target = $region44
      $region43: #{_lambda_.6} parent=39 // pred_region
        _
      $region44: #{_lambda_.6} parent=39 // pred_fallthru
        _
    $region40: #{_lambda_.6} parent=5 // pred_fallthru
      _
    %p1579 = scmp.le.s32.totalorder 2, %s11
    // Predicated region
    $region45: #{_lambda_.6} parent=5 // pred_check
      %p1580 = pneg %p1579
    $region46: #{_lambda_.6} parent=5 // pred_check_branch
      %1582 = sbr.rel (%p1580) target = $region48
    $region47: #{_lambda_.6} parent=5 // pred_region
      %s1583 = ssub.s32 %s11, 2
      // Predicated region
      $region49: #{_lambda_.6} parent=47 // pred_check
        %p1584 = pneg %p160
      $region50: #{_lambda_.6} parent=47 // pred_check_branch
        %1586 = sbr.rel (%p1584) target = $region52
      $region51: #{_lambda_.6} parent=47 // pred_region
        %p1587 = scmp.lt.s32.totalorder %s17, 1
        %s1588 = scalar_select %p1587, %s17, 1
        %s1589 = smul.addr %s1588, 4
        %s1590 = smul.addr %s1589, 8
        %s1591 = scalar_lea.vmem %s5, %s1590
      $region52: #{_lambda_.6} parent=47 // pred_fallthru
        _
    $region48: #{_lambda_.6} parent=5 // pred_fallthru
      _
  $region6: #{_lambda_.6} parent=0 // loop_footer
    %s15 = sadd.s32 1, %s11
  $region7: #{_lambda_.6} parent=0 // loop_footer_branch
    %10 = sbr.rel target = $region3
  $region8: #{_lambda_.6} parent=0 // loop_exit
    _

// kernel: _lambda_.7
$region0: #{_lambda_.7}
  #allocation0 [shape = 'u32[]', space=smem, size = 0x4, offset = 0x4, fixed_abs, tag = 'smem constant byte address 0x4 - core index']
  #allocation1 [shape = 'u32[72,128]{1,0:T(1,128)}', space=vmem, size = 0x9000, scoped, tag = 'internal scratch']
  %s0 = inlined_call_operand.vmem [shape: f32[2,9,16], index: 0, kind: input, shape index: {}]
  %s1 = inlined_call_operand.vmem [shape: f32[2,16,9], index: 1, kind: input, shape index: {}]
  %s2 = inlined_call_operand.vmem [shape: f32[9,16,16], index: 2, kind: input, shape index: {}]
  %s3 = inlined_call_operand.vmem [shape: f32[3,256], index: 3, kind: input, shape index: {}]
  %s4 = inlined_call_operand.vmem [shape: f32[2,16,290], index: 4, kind: input, shape index: {}]
  %s5 = inlined_call_operand.vmem [shape: f32[2,16,256], index: 5, kind: input, shape index: {}]
  %s6 = inlined_call_operand.vmem [shape: f32[2,16,256], index: 6, kind: input, shape index: {}]
  %s7 = inlined_call_operand.vmem [shape: f32[2,16,256], index: 7, kind: output, shape index: {}]
  %s8 = sld [smem:[#allocation0]]
  $region61: #{_lambda_.7} parent=0
    _
  %s10 = ssub.s32 1, %s8
  %s11 = scalar_select 0, %s10, %s8
  loop: start=0, step=1, limit=4
  $region2: #{_lambda_.7} parent=0 // loop_pre_header
    _
  $region3: #{_lambda_.7} parent=0 // loop_header
    %s13 = sphi 0, %s17
    %p14 = scmp.ge.s32.totalorder %s13, 4
    %s23 = sphi 0, %s25
    %s26 = sphi 0, %s23
    %s27 = sphi 0, %s26
    %s43 = sphi 0, %s27
    %s49 = sphi 0, %s51
    %s52 = sphi 0, %s49
    %s53 = sphi 0, %s52
    %s69 = sphi 0, %s53
    %s73 = sphi 0, %s73
    %s75 = sphi 0, %s73
    %s76 = sphi 0, %s75
    %s90 = sphi 0, %s76
    %s94 = sphi 0, %s94
    %s96 = sphi 0, %s94
    %s97 = sphi 0, %s96
    %s111 = sphi 0, %s97
    %s117 = sphi 0, %s119
    %s120 = sphi 0, %s117
    %s121 = sphi 0, %s120
    %s137 = sphi 0, %s121
    %s143 = sphi 0, %s145
    %s146 = sphi 0, %s143
    %s147 = sphi 0, %s146
    %s163 = sphi 0, %s147
    %s169 = sphi 0, %s171
    %s172 = sphi 0, %s169
    %s173 = sphi 0, %s172
    %s189 = sphi 0, %s173
    %s195 = sphi 0, %s197
    %s198 = sphi 0, %s195
    %s199 = sphi 0, %s198
    %s215 = sphi 0, %s199
  $region4: #{_lambda_.7} parent=0 // loop_header_branch
    %16 = sbr.rel (%p14) target = $region8
  $region5: #{_lambda_.7} parent=0 // loop_body
    %s18 = ssub.s32 %s13, 1
    %s19 = ssub.s32 %s13, 2
    %s20 = sadd.s32 %s13, 1
    %s21 = ssub.s32 %s13, %s20
    %p22 = scmp.eq.s32.totalorder %s21, 0
    %s24 = sadd.s32 %s23, 1
    %s25 = scalar_select %p22, %s23, %s24
    %p28 = pneg %p22
    %p29 = scmp.eq.s32.totalorder %s13, 1
    %p30 = por %p28, %p29
    %p31 = scmp.ne.s32.totalorder %s23, %s26
    %p32 = scmp.eq.s32.totalorder %s13, 0
    %p33 = por %p31, %p32
    %p34 = scmp.ne.s32.totalorder %s23, %s26
    %p35 = scmp.eq.s32.totalorder %s18, 1
    %p36 = por %p34, %p35
    %p37 = scmp.ne.s32.totalorder %s26, %s27
    %p38 = scmp.eq.s32.totalorder %s18, 0
    %p39 = por %p37, %p38
    %p40 = scmp.ne.s32.totalorder %s26, %s27
    %p41 = scmp.eq.s32.totalorder %s19, 1
    %p42 = por %p40, %p41
    %p44 = scmp.ne.s32.totalorder %s27, %s43
    %p45 = scmp.eq.s32.totalorder %s19, 0
    %p46 = por %p44, %p45
    %s47 = ssub.s32 %s13, %s20
    %p48 = scmp.eq.s32.totalorder %s47, 0
    %s50 = sadd.s32 %s49, 1
    %s51 = scalar_select %p48, %s49, %s50
    %p54 = pneg %p48
    %p55 = scmp.eq.s32.totalorder %s13, 1
    %p56 = por %p54, %p55
    %p57 = scmp.ne.s32.totalorder %s49, %s52
    %p58 = scmp.eq.s32.totalorder %s13, 0
    %p59 = por %p57, %p58
    %p60 = scmp.ne.s32.totalorder %s49, %s52
    %p61 = scmp.eq.s32.totalorder %s18, 1
    %p62 = por %p60, %p61
    %p63 = scmp.ne.s32.totalorder %s52, %s53
    %p64 = scmp.eq.s32.totalorder %s18, 0
    %p65 = por %p63, %p64
    %p66 = scmp.ne.s32.totalorder %s52, %s53
    %p67 = scmp.eq.s32.totalorder %s19, 1
    %p68 = por %p66, %p67
    %p70 = scmp.ne.s32.totalorder %s53, %s69
    %p71 = scmp.eq.s32.totalorder %s19, 0
    %p72 = por %p70, %p71
    %s74 = sadd.s32 %s73, 1
    %p77 = scmp.eq.s32.totalorder %s13, 1
    %p78 = scmp.ne.s32.totalorder %s73, %s75
    %p79 = scmp.eq.s32.totalorder %s13, 0
    %p80 = por %p78, %p79
    %p81 = scmp.ne.s32.totalorder %s73, %s75
    %p82 = scmp.eq.s32.totalorder %s18, 1
    %p83 = por %p81, %p82
    %p84 = scmp.ne.s32.totalorder %s75, %s76
    %p85 = scmp.eq.s32.totalorder %s18, 0
    %p86 = por %p84, %p85
    %p87 = scmp.ne.s32.totalorder %s75, %s76
    %p88 = scmp.eq.s32.totalorder %s19, 1
    %p89 = por %p87, %p88
    %p91 = scmp.ne.s32.totalorder %s76, %s90
    %p92 = scmp.eq.s32.totalorder %s19, 0
    %p93 = por %p91, %p92
    %s95 = sadd.s32 %s94, 1
    %p98 = scmp.eq.s32.totalorder %s13, 1
    %p99 = scmp.ne.s32.totalorder %s94, %s96
    %p100 = scmp.eq.s32.totalorder %s13, 0
    %p101 = por %p99, %p100
    %p102 = scmp.ne.s32.totalorder %s94, %s96
    %p103 = scmp.eq.s32.totalorder %s18, 1
    %p104 = por %p102, %p103
    %p105 = scmp.ne.s32.totalorder %s96, %s97
    %p106 = scmp.eq.s32.totalorder %s18, 0
    %p107 = por %p105, %p106
    %p108 = scmp.ne.s32.totalorder %s96, %s97
    %p109 = scmp.eq.s32.totalorder %s19, 1
    %p110 = por %p108, %p109
    %p112 = scmp.ne.s32.totalorder %s97, %s111
    %p113 = scmp.eq.s32.totalorder %s19, 0
    %p114 = por %p112, %p113
    %s115 = ssub.s32 %s13, %s20
    %p116 = scmp.eq.s32.totalorder %s115, 0
    %s118 = sadd.s32 %s117, 1
    %s119 = scalar_select %p116, %s117, %s118
    %p122 = pneg %p116
    %p123 = scmp.eq.s32.totalorder %s13, 1
    %p124 = por %p122, %p123
    %p125 = scmp.ne.s32.totalorder %s117, %s120
    %p126 = scmp.eq.s32.totalorder %s13, 0
    %p127 = por %p125, %p126
    %p128 = scmp.ne.s32.totalorder %s117, %s120
    %p129 = scmp.eq.s32.totalorder %s18, 1
    %p130 = por %p128, %p129
    %p131 = scmp.ne.s32.totalorder %s120, %s121
    %p132 = scmp.eq.s32.totalorder %s18, 0
    %p133 = por %p131, %p132
    %p134 = scmp.ne.s32.totalorder %s120, %s121
    %p135 = scmp.eq.s32.totalorder %s19, 1
    %p136 = por %p134, %p135
    %p138 = scmp.ne.s32.totalorder %s121, %s137
    %p139 = scmp.eq.s32.totalorder %s19, 0
    %p140 = por %p138, %p139
    %s141 = ssub.s32 %s13, %s20
    %p142 = scmp.eq.s32.totalorder %s141, 0
    %s144 = sadd.s32 %s143, 1
    %s145 = scalar_select %p142, %s143, %s144
    %p148 = pneg %p142
    %p149 = scmp.eq.s32.totalorder %s13, 1
    %p150 = por %p148, %p149
    %p151 = scmp.ne.s32.totalorder %s143, %s146
    %p152 = scmp.eq.s32.totalorder %s13, 0
    %p153 = por %p151, %p152
    %p154 = scmp.ne.s32.totalorder %s143, %s146
    %p155 = scmp.eq.s32.totalorder %s18, 1
    %p156 = por %p154, %p155
    %p157 = scmp.ne.s32.totalorder %s146, %s147
    %p158 = scmp.eq.s32.totalorder %s18, 0
    %p159 = por %p157, %p158
    %p160 = scmp.ne.s32.totalorder %s146, %s147
    %p161 = scmp.eq.s32.totalorder %s19, 1
    %p162 = por %p160, %p161
    %p164 = scmp.ne.s32.totalorder %s147, %s163
    %p165 = scmp.eq.s32.totalorder %s19, 0
    %p166 = por %p164, %p165
    %s167 = ssub.s32 %s13, %s20
    %p168 = scmp.eq.s32.totalorder %s167, 0
    %s170 = sadd.s32 %s169, 1
    %s171 = scalar_select %p168, %s169, %s170
    %p174 = pneg %p168
    %p175 = scmp.eq.s32.totalorder %s13, 1
    %p176 = por %p174, %p175
    %p177 = scmp.ne.s32.totalorder %s169, %s172
    %p178 = scmp.eq.s32.totalorder %s13, 0
    %p179 = por %p177, %p178
    %p180 = scmp.ne.s32.totalorder %s169, %s172
    %p181 = scmp.eq.s32.totalorder %s18, 1
    %p182 = por %p180, %p181
    %p183 = scmp.ne.s32.totalorder %s172, %s173
    %p184 = scmp.eq.s32.totalorder %s18, 0
    %p185 = por %p183, %p184
    %p186 = scmp.ne.s32.totalorder %s172, %s173
    %p187 = scmp.eq.s32.totalorder %s19, 1
    %p188 = por %p186, %p187
    %p190 = scmp.ne.s32.totalorder %s173, %s189
    %p191 = scmp.eq.s32.totalorder %s19, 0
    %p192 = por %p190, %p191
    %s193 = ssub.s32 %s13, %s20
    %p194 = scmp.eq.s32.totalorder %s193, 0
    %s196 = sadd.s32 %s195, 1
    %s197 = scalar_select %p194, %s195, %s196
    %p200 = pneg %p194
    %p201 = scmp.eq.s32.totalorder %s13, 1
    %p202 = por %p200, %p201
    %p203 = scmp.ne.s32.totalorder %s195, %s198
    %p204 = scmp.eq.s32.totalorder %s13, 0
    %p205 = por %p203, %p204
    %p206 = scmp.ne.s32.totalorder %s195, %s198
    %p207 = scmp.eq.s32.totalorder %s18, 1
    %p208 = por %p206, %p207
    %p209 = scmp.ne.s32.totalorder %s198, %s199
    %p210 = scmp.eq.s32.totalorder %s18, 0
    %p211 = por %p209, %p210
    %p212 = scmp.ne.s32.totalorder %s198, %s199
    %p213 = scmp.eq.s32.totalorder %s19, 1
    %p214 = por %p212, %p213
    %p216 = scmp.ne.s32.totalorder %s199, %s215
    %p217 = scmp.eq.s32.totalorder %s19, 0
    %p218 = por %p216, %p217
    %p219 = scmp.le.s32.totalorder 1, %s13
    %p220 = scmp.lt.s32.totalorder %s13, 3
    %p221 = pnand %p219, %p220
    %p222 = pneg %p221
    // Predicated region
    $region9: #{_lambda_.7} parent=5 // pred_check
      _
    $region10: #{_lambda_.7} parent=5 // pred_check_branch
      %224 = sbr.rel (%p221) target = $region12
    $region11: #{_lambda_.7} parent=5 // pred_region
      %s225 = ssub.s32 %s13, 1
      // Predicated region
      $region13: #{_lambda_.7} parent=11 // pred_check
        %p226 = pneg %p86
      $region14: #{_lambda_.7} parent=11 // pred_check_branch
        %228 = sbr.rel (%p226) target = $region16
      $region15: #{_lambda_.7} parent=11 // pred_region
        _
      $region16: #{_lambda_.7} parent=11 // pred_fallthru
        _
      // Predicated region
      $region17: #{_lambda_.7} parent=11 // pred_check
        %p229 = pneg %p107
      $region18: #{_lambda_.7} parent=11 // pred_check_branch
        %231 = sbr.rel (%p229) target = $region20
      $region19: #{_lambda_.7} parent=11 // pred_region
        _
      $region20: #{_lambda_.7} parent=11 // pred_fallthru
        _
    $region12: #{_lambda_.7} parent=5 // pred_fallthru
      _
    %p232 = scmp.lt.s32.totalorder %s13, 2
    // Predicated region
    $region21: #{_lambda_.7} parent=5 // pred_check
      %p233 = pneg %p232
    $region22: #{_lambda_.7} parent=5 // pred_check_branch
      %235 = sbr.rel (%p233) target = $region24
    $region23: #{_lambda_.7} parent=5 // pred_region
      // Predicated region
      $region25: #{_lambda_.7} parent=23 // pred_check
        %p236 = pneg %p33
      $region26: #{_lambda_.7} parent=23 // pred_check_branch
        %238 = sbr.rel (%p236) target = $region28
      $region27: #{_lambda_.7} parent=23 // pred_region
        %p239 = scmp.lt.s32.totalorder %s13, 1
        %s240 = scalar_select %p239, %s13, 1
        %s241 = smul.addr %s240, 2
        %s242 = smul.addr %s241, 8
        %s243 = scalar_lea.vmem %s0, %s242
      $region28: #{_lambda_.7} parent=23 // pred_fallthru
        _
      // Predicated region
      $region29: #{_lambda_.7} parent=23 // pred_check
        %p244 = pneg %p59
      $region30: #{_lambda_.7} parent=23 // pred_check_branch
        %246 = sbr.rel (%p244) target = $region32
      $region31: #{_lambda_.7} parent=23 // pred_region
        %p247 = scmp.lt.s32.totalorder %s13, 1
        %s248 = scalar_select %p247, %s13, 1
        %s249 = smul.addr %s248, 2
        %s250 = smul.addr %s249, 8
        %s251 = scalar_lea.vmem %s1, %s250
      $region32: #{_lambda_.7} parent=23 // pred_fallthru
        _
      // Predicated region
      $region33: #{_lambda_.7} parent=23 // pred_check
        %p252 = pneg %p127
      $region34: #{_lambda_.7} parent=23 // pred_check_branch
        %254 = sbr.rel (%p252) target = $region36
      $region35: #{_lambda_.7} parent=23 // pred_region
        %p255 = scmp.lt.s32.totalorder %s13, 1
        %s256 = scalar_select %p255, %s13, 1
        %s257 = smul.addr %s256, 6
        %s258 = smul.addr %s257, 8
        %s259 = scalar_lea.vmem %s4, %s258
      $region36: #{_lambda_.7} parent=23 // pred_fallthru
        _
      // Predicated region
      $region37: #{_lambda_.7} parent=23 // pred_check
        %p260 = pneg %p153
      $region38: #{_lambda_.7} parent=23 // pred_check_branch
        %262 = sbr.rel (%p260) target = $region40
      $region39: #{_lambda_.7} parent=23 // pred_region
        %p263 = scmp.lt.s32.totalorder %s13, 1
        %s264 = scalar_select %p263, %s13, 1
        %s265 = smul.addr %s264, 4
        %s266 = smul.addr %s265, 8
        %s267 = scalar_lea.vmem %s5, %s266
      $region40: #{_lambda_.7} parent=23 // pred_fallthru
        _
      // Predicated region
      $region41: #{_lambda_.7} parent=23 // pred_check
        %p268 = pneg %p179
      $region42: #{_lambda_.7} parent=23 // pred_check_branch
        %270 = sbr.rel (%p268) target = $region44
      $region43: #{_lambda_.7} parent=23 // pred_region
        %p271 = scmp.lt.s32.totalorder %s13, 1
        %s272 = scalar_select %p271, %s13, 1
        %s273 = smul.addr %s272, 4
        %s274 = smul.addr %s273, 8
        %s275 = scalar_lea.vmem %s6, %s274
      $region44: #{_lambda_.7} parent=23 // pred_fallthru
        _
    $region24: #{_lambda_.7} parent=5 // pred_fallthru
      _
    %p276 = scmp.le.s32.totalorder 1, %s13
    %p277 = scmp.lt.s32.totalorder %s13, 3
    %p278 = pnand %p276, %p277
    %p279 = pneg %p278
    // Predicated region
    $region45: #{_lambda_.7} parent=5 // pred_check
      _
    $region46: #{_lambda_.7} parent=5 // pred_check_branch
      %281 = sbr.rel (%p278) target = $region48
    $region47: #{_lambda_.7} parent=5 // pred_region
      %s282 = ssub.s32 %s13, 1
      %p283 = scmp.lt.s32.totalorder %s18, 1
      %s284 = scalar_select %p283, %s18, 1
      %s285 = smul.addr %s284, 2
      %s286 = smul.addr %s285, 8
      %s287 = scalar_lea.vmem %s0, %s286
      %p288 = pneg %p39
      %p289 = pneg %p36
      %p290 = scmp.lt.s32.totalorder %s18, 1
      %s291 = scalar_select %p290, %s18, 1
      %s292 = smul.addr %s291, 2
      %s293 = smul.addr %s292, 8
      %s294 = scalar_lea.vmem %s1, %s293
      %p295 = pneg %p65
      %p296 = pneg %p62
      %p297 = pneg %p86
      %p298 = pneg %p83
      %p299 = pneg %p107
      %p300 = pneg %p104
      %p301 = scmp.lt.s32.totalorder %s18, 1
      %s302 = scalar_select %p301, %s18, 1
      %s303 = smul.addr %s302, 6
      %s304 = smul.addr %s303, 8
      %s305 = scalar_lea.vmem %s4, %s304
      %p306 = pneg %p133
      %p307 = pneg %p130
      %p308 = scmp.lt.s32.totalorder %s18, 1
      %s309 = scalar_select %p308, %s18, 1
      %s310 = smul.addr %s309, 4
      %s311 = smul.addr %s310, 8
      %s312 = scalar_lea.vmem %s5, %s311
      %p313 = pneg %p159
      %p314 = pneg %p156
      %p315 = scmp.lt.s32.totalorder %s18, 1
      %s316 = scalar_select %p315, %s18, 1
      %s317 = smul.addr %s316, 4
      %s318 = smul.addr %s317, 8
      %s319 = scalar_lea.vmem %s6, %s318
      %p320 = pneg %p185
      %p321 = pneg %p182
      %p322 = pneg %p211
      %p323 = pneg %p208
      %p324 = scmp.lt.s32.totalorder %s18, 1
      %s325 = scalar_select %p324, %s18, 1
      %s326 = smul.addr %s325, 4
      %s327 = smul.addr %s326, 8
      %s328 = scalar_lea.vmem %s7, %s327
      %p329 = scmp.lt.s32.totalorder %s18, 1
      %s330 = scalar_select %p329, %s18, 1
      %s331 = smul.addr %s330, 2
      %s332 = smul.addr %s331, 8
      %s333 = scalar_lea.vmem %s0, %s332
      %p334 = scmp.lt.s32.totalorder %s18, 1
      %s335 = scalar_select %p334, %s18, 1
      %s336 = smul.addr %s335, 2
      %s337 = smul.addr %s336, 8
      %s338 = scalar_lea.vmem %s1, %s337
      %p339 = scmp.lt.s32.totalorder %s18, 1
      %s340 = scalar_select %p339, %s18, 1
      %s341 = smul.addr %s340, 6
      %s342 = smul.addr %s341, 8
      %s343 = scalar_lea.vmem %s4, %s342
      %p344 = scmp.lt.s32.totalorder %s18, 1
      %s345 = scalar_select %p344, %s18, 1
      %s346 = smul.addr %s345, 4
      %s347 = smul.addr %s346, 8
      %s348 = scalar_lea.vmem %s5, %s347
      %p349 = scmp.lt.s32.totalorder %s18, 1
      %s350 = scalar_select %p349, %s18, 1
      %s351 = smul.addr %s350, 4
      %s352 = smul.addr %s351, 8
      %s353 = scalar_lea.vmem %s6, %s352
      %p354 = scmp.lt.s32.totalorder %s18, 1
      %s355 = scalar_select %p354, %s18, 1
      %s356 = smul.addr %s355, 4
      %s357 = smul.addr %s356, 8
      %s358 = scalar_lea.vmem %s7, %s357
      %v359 = vld [vmem:[%s343] sm:$0xff]
      %v360 = vld [vmem:[%s343 + $0x8] sm:$0xff]
      %v361 = vld [vmem:[%s343 + $0x18] sm:$0xff]
      %v362 = vld [vmem:[%s343 + $0x20] sm:$0xff]
      %v363 = vld [vmem:[%s3] ss:$4 sm:$0x3]
      %v365 = vperm.slane %v363, 0
      %v366 = vperm.slane %v363, 1
      %v369 = vmul.f32 %v359, %v365
      %v370 = vmul.f32 %v360, %v366
      %v371 = vmul.f32 %v361, %v365
      %v372 = vmul.f32 %v362, %v366
      %v373 = vld [vmem:[%s338] sm:$0xff]
      %v374 = vld [vmem:[%s338 + $0x8] sm:$0xff]
      %v375 = vld [vmem:[%s333] sm:$0x1]
      %377 = vset.pattern.permute.xlu0 0
      %378 = vperm.xlu0 %377, %v373
      %v379 = vpop.permute.xlu0 %378
      %382 = vset.pattern.permute.xlu0 0
      %383 = vperm.xlu0 %382, %v374
      %v384 = vpop.permute.xlu0 %383
      %v386 = vperm.slane %v375, 0
      %v387 = vadd.f32 %v379, %v386
      %v388 = vadd.f32 %v384, %v386
      %v389 = vxor.u32 %v387, 2147483648
      %v390 = vxor.u32 %v388, 2147483648
      %v391 = vmul.f32 %v389, 1.442695
      %v392 = vpow.pop %v391
      %v393 = vmul.f32 %v390, 1.442695
      %v394 = vpow.pop %v393
      %v395 = vadd.f32 %v392, 1.0
      %v396 = vadd.f32 %v394, 1.0
      %v397 = vrcp.pop %v395
      %v398 = vmul.f32 %v395, %v397
      %v399 = vsub.f32 1.0, %v398
      %v400 = vmul.f32 %v397, %v399
      %v401 = vadd.f32 %v397, %v400
      %vm402 = vweird.f32 %v395
      %vm403 = vweird.f32 %v397
      %vm404 = vmor %vm402, %vm403
      %v405 = vsel %vm404, %v397, %v401
      %v406 = vand.u32 2147483647, %v395
      %vm407 = vcmp.eq.f32.partialorder %v406, 8.507059e+37
      %v408 = vand.u32 %v395, 2147483648
      %v409 = vor.u32 1.1754944e-38, %v408
      %v410 = vsel %vm407, %v409, %v405
      %v411 = vmul.f32 1.0, %v410
      %v412 = vrcp.pop %v396
      %v413 = vmul.f32 %v396, %v412
      %v414 = vsub.f32 1.0, %v413
      %v415 = vmul.f32 %v412, %v414
      %v416 = vadd.f32 %v412, %v415
      %vm417 = vweird.f32 %v396
      %vm418 = vweird.f32 %v412
      %vm419 = vmor %vm417, %vm418
      %v420 = vsel %vm419, %v412, %v416
      %v421 = vand.u32 2147483647, %v396
      %vm422 = vcmp.eq.f32.partialorder %v421, 8.507059e+37
      %v423 = vand.u32 %v396, 2147483648
      %v424 = vor.u32 1.1754944e-38, %v423
      %v425 = vsel %vm422, %v424, %v420
      %v426 = vmul.f32 1.0, %v425
      %v427 = vld [vmem:[%s2] sm:$0xff]
      %v428 = vld [vmem:[%s2 + $0x8] sm:$0xff]
      %v429 = vmul.f32 %v411, %v427
      %v430 = vmul.f32 %v426, %v428
      %v431 = vld [vmem:[%s343] sm:$0xff]
      %v432 = vld [vmem:[%s343 + $0x8] sm:$0xff]
      %v433 = vld [vmem:[%s343 + $0x10] sm:$0xff]
      %v434 = vld [vmem:[%s343 + $0x18] sm:$0xff]
      %v435 = vld [vmem:[%s343 + $0x20] sm:$0xff]
      %v436 = vld [vmem:[%s343 + $0x28] sm:$0xff]
      %v437 = vld [vmem:[%s333 + $0x1] sm:$0x1]
      %438 = vset.pattern.permute.xlu0 1
      %439 = vperm.xlu0 %438, %v373
      %v440 = vpop.permute.xlu0 %439
      %442 = vset.pattern.permute.xlu0 1
      %443 = vperm.xlu0 %442, %v374
      %v444 = vpop.permute.xlu0 %443
      %v446 = vperm.slane %v437, 0
      %v447 = vadd.f32 %v440, %v446
      %v448 = vadd.f32 %v444, %v446
      %v449 = vxor.u32 %v447, 2147483648
      %v450 = vxor.u32 %v448, 2147483648
      %v451 = vmul.f32 %v449, 1.442695
      %v452 = vpow.pop %v451
      %v453 = vmul.f32 %v450, 1.442695
      %v454 = vpow.pop %v453
      %v455 = vadd.f32 %v452, 1.0
      %v456 = vadd.f32 %v454, 1.0
      %v457 = vrcp.pop %v455
      %v458 = vmul.f32 %v455, %v457
      %v459 = vsub.f32 1.0, %v458
      %v460 = vmul.f32 %v457, %v459
      %v461 = vadd.f32 %v457, %v460
      %vm462 = vweird.f32 %v455
      %vm463 = vweird.f32 %v457
      %vm464 = vmor %vm462, %vm463
      %v465 = vsel %vm464, %v457, %v461
      %v466 = vand.u32 2147483647, %v455
      %vm467 = vcmp.eq.f32.partialorder %v466, 8.507059e+37
      %v468 = vand.u32 %v455, 2147483648
      %v469 = vor.u32 1.1754944e-38, %v468
      %v470 = vsel %vm467, %v469, %v465
      %v471 = vmul.f32 1.0, %v470
      %v472 = vrcp.pop %v456
      %v473 = vmul.f32 %v456, %v472
      %v474 = vsub.f32 1.0, %v473
      %v475 = vmul.f32 %v472, %v474
      %v476 = vadd.f32 %v472, %v475
      %vm477 = vweird.f32 %v456
      %vm478 = vweird.f32 %v472
      %vm479 = vmor %vm477, %vm478
      %v480 = vsel %vm479, %v472, %v476
      %v481 = vand.u32 2147483647, %v456
      %vm482 = vcmp.eq.f32.partialorder %v481, 8.507059e+37
      %v483 = vand.u32 %v456, 2147483648
      %v484 = vor.u32 1.1754944e-38, %v483
      %v485 = vsel %vm482, %v484, %v480
      %v486 = vmul.f32 1.0, %v485
      %s487 = scalar_lea.vmem %s2, 16
      %v488 = vld [vmem:[%s487] sm:$0xff]
      %v489 = vld [vmem:[%s487 + $0x8] sm:$0xff]
      %v490 = vmul.f32 %v471, %v488
      %v491 = vmul.f32 %v486, %v489
      %498 = vrot.lane.b32.xlu0 %v431, 127
      %v499 = vpop.permute.xlu0 %498
      %500 = vrot.lane.b32.xlu0 %v432, 127
      %v501 = vpop.permute.xlu0 %500
      %502 = vrot.lane.b32.xlu0 %v433, 127
      %v503 = vpop.permute.xlu0 %502
      %504 = vrot.lane.b32.xlu0 %v434, 127
      %v505 = vpop.permute.xlu0 %504
      %506 = vrot.lane.b32.xlu0 %v435, 127
      %v507 = vpop.permute.xlu0 %506
      %508 = vrot.lane.b32.xlu0 %v436, 127
      %v509 = vpop.permute.xlu0 %508
      %vm510 = vcmask 1039360
      %v511 = vsel %vm510, %v499, %v501
      %v512 = vsel %vm510, %v501, %v503
      %v513 = vsel %vm510, %v505, %v507
      %v514 = vsel %vm510, %v507, %v509
      %vm519 = vcmask 130048
      %v521 = vsel %vm519, %v490, 0
      %v524 = vsel %vm519, %v491, 0
      %526 = vmatpush.msra.mxu0 0.0
      %527 = vmatpush.msra.mxu0 0.0
      %528 = vmatpush.msra.mxu0 0.0
      %529 = vmatpush.msra.mxu0 0.0
      %530 = vmatpush.msra.mxu0 0.0
      %531 = vmatpush.msra.mxu0 0.0
      %532 = vmatpush.msra.mxu0 0.0
      %533 = vmatpush.msra.mxu0 0.0
      %534 = vmatpush.msra.mxu0 0.0
      %535 = vmatpush.msra.mxu0 0.0
      %536 = vmatpush.msra.mxu0 0.0
      %537 = vmatpush.msra.mxu0 0.0
      %538 = vmatpush.msra.mxu0 0.0
      %539 = vmatpush.msra.mxu0 0.0
      %540 = vmatpush.msra.mxu0 %v513
      %541 = vmatpush.msra.mxu0 %v511
      %542 = vmatmul.f32.gmra.mxu0 %v521
      %v543 = vpop.f32.mrf.mxu0
      %v544 = vadd.f32 0.0, %v543
      %545 = vmatmul.f32.gmra.mxu0 %v524
      %v546 = vpop.f32.mrf.mxu0
      %v547 = vadd.f32 0.0, %v546
      %548 = vdwg.mxu0
      %549 = vmatpush.msra.mxu0 0.0
      %550 = vmatpush.msra.mxu0 0.0
      %551 = vmatpush.msra.mxu0 0.0
      %552 = vmatpush.msra.mxu0 0.0
      %553 = vmatpush.msra.mxu0 0.0
      %554 = vmatpush.msra.mxu0 0.0
      %555 = vmatpush.msra.mxu0 0.0
      %556 = vmatpush.msra.mxu0 0.0
      %557 = vmatpush.msra.mxu0 0.0
      %558 = vmatpush.msra.mxu0 0.0
      %559 = vmatpush.msra.mxu0 0.0
      %560 = vmatpush.msra.mxu0 0.0
      %561 = vmatpush.msra.mxu0 0.0
      %562 = vmatpush.msra.mxu0 0.0
      %563 = vmatpush.msra.mxu0 %v514
      %564 = vmatpush.msra.mxu0 %v512
      %565 = vmatmul.f32.gmra.mxu0 %v521
      %v566 = vpop.f32.mrf.mxu0
      %v567 = vadd.f32 0.0, %v566
      %568 = vmatmul.f32.gmra.mxu0 %v524
      %v569 = vpop.f32.mrf.mxu0
      %v570 = vadd.f32 0.0, %v569
      %571 = vdwg.mxu0
      %v573 = vsel %vm519, %v429, 0
      %v576 = vsel %vm519, %v430, 0
      %578 = vmatpush.msra.mxu0 0.0
      %579 = vmatpush.msra.mxu0 0.0
      %580 = vmatpush.msra.mxu0 0.0
      %581 = vmatpush.msra.mxu0 0.0
      %582 = vmatpush.msra.mxu0 0.0
      %583 = vmatpush.msra.mxu0 0.0
      %584 = vmatpush.msra.mxu0 0.0
      %585 = vmatpush.msra.mxu0 0.0
      %586 = vmatpush.msra.mxu0 0.0
      %587 = vmatpush.msra.mxu0 0.0
      %588 = vmatpush.msra.mxu0 0.0
      %589 = vmatpush.msra.mxu0 0.0
      %590 = vmatpush.msra.mxu0 0.0
      %591 = vmatpush.msra.mxu0 0.0
      %592 = vmatpush.msra.mxu0 %v371
      %593 = vmatpush.msra.mxu0 %v369
      %594 = vmatmul.f32.gmra.mxu0 %v573
      %v595 = vpop.f32.mrf.mxu0
      %v596 = vadd.f32 %v544, %v595
      %597 = vmatmul.f32.gmra.mxu0 %v576
      %v598 = vpop.f32.mrf.mxu0
      %v599 = vadd.f32 %v547, %v598
      %600 = vdwg.mxu0
      %601 = vmatpush.msra.mxu0 0.0
      %602 = vmatpush.msra.mxu0 0.0
      %603 = vmatpush.msra.mxu0 0.0
      %604 = vmatpush.msra.mxu0 0.0
      %605 = vmatpush.msra.mxu0 0.0
      %606 = vmatpush.msra.mxu0 0.0
      %607 = vmatpush.msra.mxu0 0.0
      %608 = vmatpush.msra.mxu0 0.0
      %609 = vmatpush.msra.mxu0 0.0
      %610 = vmatpush.msra.mxu0 0.0
      %611 = vmatpush.msra.mxu0 0.0
      %612 = vmatpush.msra.mxu0 0.0
      %613 = vmatpush.msra.mxu0 0.0
      %614 = vmatpush.msra.mxu0 0.0
      %615 = vmatpush.msra.mxu0 %v372
      %616 = vmatpush.msra.mxu0 %v370
      %617 = vmatmul.f32.gmra.mxu0 %v573
      %v618 = vpop.f32.mrf.mxu0
      %v619 = vadd.f32 %v567, %v618
      %620 = vmatmul.f32.gmra.mxu0 %v576
      %v621 = vpop.f32.mrf.mxu0
      %v622 = vadd.f32 %v570, %v621
      %623 = vdwg.mxu0
      %s624 = scalar_lea.vmem %s3, 2
      %v625 = vld [vmem:[%s624] ss:$4 sm:$0x3]
      %v627 = vperm.slane %v625, 0
      %v628 = vperm.slane %v625, 1
      %629 = vrot.lane.b32.xlu0 %v627, 2
      %v630 = vpop.permute.xlu0 %629
      %631 = vrot.lane.b32.xlu0 %v628, 2
      %v632 = vpop.permute.xlu0 %631
      %vm633 = vcmask 15360
      %v634 = vsel %vm633, %v630, %v632
      %v638 = vmul.f32 %v431, %v630
      %v639 = vmul.f32 %v432, %v634
      %v640 = vmul.f32 %v433, %v632
      %v641 = vmul.f32 %v434, %v630
      %v642 = vmul.f32 %v435, %v634
      %v643 = vmul.f32 %v436, %v632
      %v644 = vld [vmem:[%s333 + $0x2] sm:$0x1]
      %645 = vset.pattern.permute.xlu0 2
      %646 = vperm.xlu0 %645, %v373
      %v647 = vpop.permute.xlu0 %646
      %649 = vset.pattern.permute.xlu0 2
      %650 = vperm.xlu0 %649, %v374
      %v651 = vpop.permute.xlu0 %650
      %v653 = vperm.slane %v644, 0
      %v654 = vadd.f32 %v647, %v653
      %v655 = vadd.f32 %v651, %v653
      %v656 = vxor.u32 %v654, 2147483648
      %v657 = vxor.u32 %v655, 2147483648
      %v658 = vmul.f32 %v656, 1.442695
      %v659 = vpow.pop %v658
      %v660 = vmul.f32 %v657, 1.442695
      %v661 = vpow.pop %v660
      %v662 = vadd.f32 %v659, 1.0
      %v663 = vadd.f32 %v661, 1.0
      %v664 = vrcp.pop %v662
      %v665 = vmul.f32 %v662, %v664
      %v666 = vsub.f32 1.0, %v665
      %v667 = vmul.f32 %v664, %v666
      %v668 = vadd.f32 %v664, %v667
      %vm669 = vweird.f32 %v662
      %vm670 = vweird.f32 %v664
      %vm671 = vmor %vm669, %vm670
      %v672 = vsel %vm671, %v664, %v668
      %v673 = vand.u32 2147483647, %v662
      %vm674 = vcmp.eq.f32.partialorder %v673, 8.507059e+37
      %v675 = vand.u32 %v662, 2147483648
      %v676 = vor.u32 1.1754944e-38, %v675
      %v677 = vsel %vm674, %v676, %v672
      %v678 = vmul.f32 1.0, %v677
      %v679 = vrcp.pop %v663
      %v680 = vmul.f32 %v663, %v679
      %v681 = vsub.f32 1.0, %v680
      %v682 = vmul.f32 %v679, %v681
      %v683 = vadd.f32 %v679, %v682
      %vm684 = vweird.f32 %v663
      %vm685 = vweird.f32 %v679
      %vm686 = vmor %vm684, %vm685
      %v687 = vsel %vm686, %v679, %v683
      %v688 = vand.u32 2147483647, %v663
      %vm689 = vcmp.eq.f32.partialorder %v688, 8.507059e+37
      %v690 = vand.u32 %v663, 2147483648
      %v691 = vor.u32 1.1754944e-38, %v690
      %v692 = vsel %vm689, %v691, %v687
      %v693 = vmul.f32 1.0, %v692
      %s694 = scalar_lea.vmem %s2, 32
      %v695 = vld [vmem:[%s694] sm:$0xff]
      %v696 = vld [vmem:[%s694 + $0x8] sm:$0xff]
      %v697 = vmul.f32 %v678, %v695
      %v698 = vmul.f32 %v693, %v696
      %705 = vrot.lane.b32.xlu0 %v638, 126
      %v706 = vpop.permute.xlu0 %705
      %707 = vrot.lane.b32.xlu0 %v639, 126
      %v708 = vpop.permute.xlu0 %707
      %709 = vrot.lane.b32.xlu0 %v640, 126
      %v710 = vpop.permute.xlu0 %709
      %711 = vrot.lane.b32.xlu0 %v641, 126
      %v712 = vpop.permute.xlu0 %711
      %713 = vrot.lane.b32.xlu0 %v642, 126
      %v714 = vpop.permute.xlu0 %713
      %715 = vrot.lane.b32.xlu0 %v643, 126
      %v716 = vpop.permute.xlu0 %715
      %vm717 = vcmask 1031168
      %v718 = vsel %vm717, %v706, %v708
      %v719 = vsel %vm717, %v708, %v710
      %v720 = vsel %vm717, %v712, %v714
      %v721 = vsel %vm717, %v714, %v716
      %v727 = vsel %vm519, %v697, 0
      %v730 = vsel %vm519, %v698, 0
      %732 = vmatpush.msra.mxu0 0.0
      %733 = vmatpush.msra.mxu0 0.0
      %734 = vmatpush.msra.mxu0 0.0
      %735 = vmatpush.msra.mxu0 0.0
      %736 = vmatpush.msra.mxu0 0.0
      %737 = vmatpush.msra.mxu0 0.0
      %738 = vmatpush.msra.mxu0 0.0
      %739 = vmatpush.msra.mxu0 0.0
      %740 = vmatpush.msra.mxu0 0.0
      %741 = vmatpush.msra.mxu0 0.0
      %742 = vmatpush.msra.mxu0 0.0
      %743 = vmatpush.msra.mxu0 0.0
      %744 = vmatpush.msra.mxu0 0.0
      %745 = vmatpush.msra.mxu0 0.0
      %746 = vmatpush.msra.mxu0 %v720
      %747 = vmatpush.msra.mxu0 %v718
      %748 = vmatmul.f32.gmra.mxu0 %v727
      %v749 = vpop.f32.mrf.mxu0
      %v750 = vadd.f32 0.0, %v749
      %751 = vmatmul.f32.gmra.mxu0 %v730
      %v752 = vpop.f32.mrf.mxu0
      %v753 = vadd.f32 0.0, %v752
      %754 = vdwg.mxu0
      %755 = vmatpush.msra.mxu0 0.0
      %756 = vmatpush.msra.mxu0 0.0
      %757 = vmatpush.msra.mxu0 0.0
      %758 = vmatpush.msra.mxu0 0.0
      %759 = vmatpush.msra.mxu0 0.0
      %760 = vmatpush.msra.mxu0 0.0
      %761 = vmatpush.msra.mxu0 0.0
      %762 = vmatpush.msra.mxu0 0.0
      %763 = vmatpush.msra.mxu0 0.0
      %764 = vmatpush.msra.mxu0 0.0
      %765 = vmatpush.msra.mxu0 0.0
      %766 = vmatpush.msra.mxu0 0.0
      %767 = vmatpush.msra.mxu0 0.0
      %768 = vmatpush.msra.mxu0 0.0
      %769 = vmatpush.msra.mxu0 %v721
      %770 = vmatpush.msra.mxu0 %v719
      %771 = vmatmul.f32.gmra.mxu0 %v727
      %v772 = vpop.f32.mrf.mxu0
      %v773 = vadd.f32 0.0, %v772
      %774 = vmatmul.f32.gmra.mxu0 %v730
      %v775 = vpop.f32.mrf.mxu0
      %v776 = vadd.f32 0.0, %v775
      %777 = vdwg.mxu0
      %v778 = vadd.f32 %v596, %v750
      %v779 = vadd.f32 %v619, %v773
      %v780 = vadd.f32 %v599, %v753
      %v781 = vadd.f32 %v622, %v776
      %782 = vrot.lane.b32.xlu0 %v365, 16
      %v783 = vpop.permute.xlu0 %782
      %784 = vrot.lane.b32.xlu0 %v366, 16
      %v785 = vpop.permute.xlu0 %784
      %v786 = vsel %vm519, %v783, %v785
      %v790 = vmul.f32 %v431, %v783
      %v791 = vmul.f32 %v432, %v786
      %v792 = vmul.f32 %v433, %v785
      %v793 = vmul.f32 %v434, %v783
      %v794 = vmul.f32 %v435, %v786
      %v795 = vmul.f32 %v436, %v785
      %v796 = vld [vmem:[%s333 + $0x3] sm:$0x1]
      %797 = vset.pattern.permute.xlu0 3
      %798 = vperm.xlu0 %797, %v373
      %v799 = vpop.permute.xlu0 %798
      %801 = vset.pattern.permute.xlu0 3
      %802 = vperm.xlu0 %801, %v374
      %v803 = vpop.permute.xlu0 %802
      %v805 = vperm.slane %v796, 0
      %v806 = vadd.f32 %v799, %v805
      %v807 = vadd.f32 %v803, %v805
      %v808 = vxor.u32 %v806, 2147483648
      %v809 = vxor.u32 %v807, 2147483648
      %v810 = vmul.f32 %v808, 1.442695
      %v811 = vpow.pop %v810
      %v812 = vmul.f32 %v809, 1.442695
      %v813 = vpow.pop %v812
      %v814 = vadd.f32 %v811, 1.0
      %v815 = vadd.f32 %v813, 1.0
      %v816 = vrcp.pop %v814
      %v817 = vmul.f32 %v814, %v816
      %v818 = vsub.f32 1.0, %v817
      %v819 = vmul.f32 %v816, %v818
      %v820 = vadd.f32 %v816, %v819
      %vm821 = vweird.f32 %v814
      %vm822 = vweird.f32 %v816
      %vm823 = vmor %vm821, %vm822
      %v824 = vsel %vm823, %v816, %v820
      %v825 = vand.u32 2147483647, %v814
      %vm826 = vcmp.eq.f32.partialorder %v825, 8.507059e+37
      %v827 = vand.u32 %v814, 2147483648
      %v828 = vor.u32 1.1754944e-38, %v827
      %v829 = vsel %vm826, %v828, %v824
      %v830 = vmul.f32 1.0, %v829
      %v831 = vrcp.pop %v815
      %v832 = vmul.f32 %v815, %v831
      %v833 = vsub.f32 1.0, %v832
      %v834 = vmul.f32 %v831, %v833
      %v835 = vadd.f32 %v831, %v834
      %vm836 = vweird.f32 %v815
      %vm837 = vweird.f32 %v831
      %vm838 = vmor %vm836, %vm837
      %v839 = vsel %vm838, %v831, %v835
      %v840 = vand.u32 2147483647, %v815
      %vm841 = vcmp.eq.f32.partialorder %v840, 8.507059e+37
      %v842 = vand.u32 %v815, 2147483648
      %v843 = vor.u32 1.1754944e-38, %v842
      %v844 = vsel %vm841, %v843, %v839
      %v845 = vmul.f32 1.0, %v844
      %s846 = scalar_lea.vmem %s2, 48
      %v847 = vld [vmem:[%s846] sm:$0xff]
      %v848 = vld [vmem:[%s846 + $0x8] sm:$0xff]
      %v849 = vmul.f32 %v830, %v847
      %v850 = vmul.f32 %v845, %v848
      %857 = vrot.lane.b32.xlu0 %v790, 112
      %v858 = vpop.permute.xlu0 %857
      %859 = vrot.lane.b32.xlu0 %v791, 112
      %v860 = vpop.permute.xlu0 %859
      %861 = vrot.lane.b32.xlu0 %v792, 112
      %v862 = vpop.permute.xlu0 %861
      %863 = vrot.lane.b32.xlu0 %v793, 112
      %v864 = vpop.permute.xlu0 %863
      %865 = vrot.lane.b32.xlu0 %v794, 112
      %v866 = vpop.permute.xlu0 %865
      %867 = vrot.lane.b32.xlu0 %v795, 112
      %v868 = vpop.permute.xlu0 %867
      %vm869 = vcmask 916480
      %v870 = vsel %vm869, %v858, %v860
      %v871 = vsel %vm869, %v860, %v862
      %v872 = vsel %vm869, %v864, %v866
      %v873 = vsel %vm869, %v866, %v868
      %v879 = vsel %vm519, %v849, 0
      %v882 = vsel %vm519, %v850, 0
      %884 = vmatpush.msra.mxu0 0.0
      %885 = vmatpush.msra.mxu0 0.0
      %886 = vmatpush.msra.mxu0 0.0
      %887 = vmatpush.msra.mxu0 0.0
      %888 = vmatpush.msra.mxu0 0.0
      %889 = vmatpush.msra.mxu0 0.0
      %890 = vmatpush.msra.mxu0 0.0
      %891 = vmatpush.msra.mxu0 0.0
      %892 = vmatpush.msra.mxu0 0.0
      %893 = vmatpush.msra.mxu0 0.0
      %894 = vmatpush.msra.mxu0 0.0
      %895 = vmatpush.msra.mxu0 0.0
      %896 = vmatpush.msra.mxu0 0.0
      %897 = vmatpush.msra.mxu0 0.0
      %898 = vmatpush.msra.mxu0 %v872
      %899 = vmatpush.msra.mxu0 %v870
      %900 = vmatmul.f32.gmra.mxu0 %v879
      %v901 = vpop.f32.mrf.mxu0
      %v902 = vadd.f32 0.0, %v901
      %903 = vmatmul.f32.gmra.mxu0 %v882
      %v904 = vpop.f32.mrf.mxu0
      %v905 = vadd.f32 0.0, %v904
      %906 = vdwg.mxu0
      %907 = vmatpush.msra.mxu0 0.0
      %908 = vmatpush.msra.mxu0 0.0
      %909 = vmatpush.msra.mxu0 0.0
      %910 = vmatpush.msra.mxu0 0.0
      %911 = vmatpush.msra.mxu0 0.0
      %912 = vmatpush.msra.mxu0 0.0
      %913 = vmatpush.msra.mxu0 0.0
      %914 = vmatpush.msra.mxu0 0.0
      %915 = vmatpush.msra.mxu0 0.0
      %916 = vmatpush.msra.mxu0 0.0
      %917 = vmatpush.msra.mxu0 0.0
      %918 = vmatpush.msra.mxu0 0.0
      %919 = vmatpush.msra.mxu0 0.0
      %920 = vmatpush.msra.mxu0 0.0
      %921 = vmatpush.msra.mxu0 %v873
      %922 = vmatpush.msra.mxu0 %v871
      %923 = vmatmul.f32.gmra.mxu0 %v879
      %v924 = vpop.f32.mrf.mxu0
      %v925 = vadd.f32 0.0, %v924
      %926 = vmatmul.f32.gmra.mxu0 %v882
      %v927 = vpop.f32.mrf.mxu0
      %v928 = vadd.f32 0.0, %v927
      %929 = vdwg.mxu0
      %v930 = vadd.f32 %v778, %v902
      %v931 = vadd.f32 %v779, %v925
      %v932 = vadd.f32 %v780, %v905
      %v933 = vadd.f32 %v781, %v928
      %v934 = vld [vmem:[%s333 + $0x4] sm:$0x1]
      %935 = vset.pattern.permute.xlu0 4
      %936 = vperm.xlu0 %935, %v373
      %v937 = vpop.permute.xlu0 %936
      %939 = vset.pattern.permute.xlu0 4
      %940 = vperm.xlu0 %939, %v374
      %v941 = vpop.permute.xlu0 %940
      %v943 = vperm.slane %v934, 0
      %v944 = vadd.f32 %v937, %v943
      %v945 = vadd.f32 %v941, %v943
      %v946 = vxor.u32 %v944, 2147483648
      %v947 = vxor.u32 %v945, 2147483648
      %v948 = vmul.f32 %v946, 1.442695
      %v949 = vpow.pop %v948
      %v950 = vmul.f32 %v947, 1.442695
      %v951 = vpow.pop %v950
      %v952 = vadd.f32 %v949, 1.0
      %v953 = vadd.f32 %v951, 1.0
      %v954 = vrcp.pop %v952
      %v955 = vmul.f32 %v952, %v954
      %v956 = vsub.f32 1.0, %v955
      %v957 = vmul.f32 %v954, %v956
      %v958 = vadd.f32 %v954, %v957
      %vm959 = vweird.f32 %v952
      %vm960 = vweird.f32 %v954
      %vm961 = vmor %vm959, %vm960
      %v962 = vsel %vm961, %v954, %v958
      %v963 = vand.u32 2147483647, %v952
      %vm964 = vcmp.eq.f32.partialorder %v963, 8.507059e+37
      %v965 = vand.u32 %v952, 2147483648
      %v966 = vor.u32 1.1754944e-38, %v965
      %v967 = vsel %vm964, %v966, %v962
      %v968 = vmul.f32 1.0, %v967
      %v969 = vrcp.pop %v953
      %v970 = vmul.f32 %v953, %v969
      %v971 = vsub.f32 1.0, %v970
      %v972 = vmul.f32 %v969, %v971
      %v973 = vadd.f32 %v969, %v972
      %vm974 = vweird.f32 %v953
      %vm975 = vweird.f32 %v969
      %vm976 = vmor %vm974, %vm975
      %v977 = vsel %vm976, %v969, %v973
      %v978 = vand.u32 2147483647, %v953
      %vm979 = vcmp.eq.f32.partialorder %v978, 8.507059e+37
      %v980 = vand.u32 %v953, 2147483648
      %v981 = vor.u32 1.1754944e-38, %v980
      %v982 = vsel %vm979, %v981, %v977
      %v983 = vmul.f32 1.0, %v982
      %s984 = scalar_lea.vmem %s2, 64
      %v985 = vld [vmem:[%s984] sm:$0xff]
      %v986 = vld [vmem:[%s984 + $0x8] sm:$0xff]
      %v987 = vmul.f32 %v968, %v985
      %v988 = vmul.f32 %v983, %v986
      %989 = vrot.lane.b32.xlu0 %v431, 111
      %v990 = vpop.permute.xlu0 %989
      %991 = vrot.lane.b32.xlu0 %v432, 111
      %v992 = vpop.permute.xlu0 %991
      %993 = vrot.lane.b32.xlu0 %v433, 111
      %v994 = vpop.permute.xlu0 %993
      %995 = vrot.lane.b32.xlu0 %v434, 111
      %v996 = vpop.permute.xlu0 %995
      %997 = vrot.lane.b32.xlu0 %v435, 111
      %v998 = vpop.permute.xlu0 %997
      %999 = vrot.lane.b32.xlu0 %v436, 111
      %v1000 = vpop.permute.xlu0 %999
      %vm1001 = vcmask 908288
      %v1002 = vsel %vm1001, %v990, %v992
      %v1003 = vsel %vm1001, %v992, %v994
      %v1004 = vsel %vm1001, %v996, %v998
      %v1005 = vsel %vm1001, %v998, %v1000
      %v1011 = vsel %vm519, %v987, 0
      %v1014 = vsel %vm519, %v988, 0
      %1016 = vmatpush.msra.mxu0 0.0
      %1017 = vmatpush.msra.mxu0 0.0
      %1018 = vmatpush.msra.mxu0 0.0
      %1019 = vmatpush.msra.mxu0 0.0
      %1020 = vmatpush.msra.mxu0 0.0
      %1021 = vmatpush.msra.mxu0 0.0
      %1022 = vmatpush.msra.mxu0 0.0
      %1023 = vmatpush.msra.mxu0 0.0
      %1024 = vmatpush.msra.mxu0 0.0
      %1025 = vmatpush.msra.mxu0 0.0
      %1026 = vmatpush.msra.mxu0 0.0
      %1027 = vmatpush.msra.mxu0 0.0
      %1028 = vmatpush.msra.mxu0 0.0
      %1029 = vmatpush.msra.mxu0 0.0
      %1030 = vmatpush.msra.mxu0 %v1004
      %1031 = vmatpush.msra.mxu0 %v1002
      %1032 = vmatmul.f32.gmra.mxu0 %v1011
      %v1033 = vpop.f32.mrf.mxu0
      %v1034 = vadd.f32 0.0, %v1033
      %1035 = vmatmul.f32.gmra.mxu0 %v1014
      %v1036 = vpop.f32.mrf.mxu0
      %v1037 = vadd.f32 0.0, %v1036
      %1038 = vdwg.mxu0
      %1039 = vmatpush.msra.mxu0 0.0
      %1040 = vmatpush.msra.mxu0 0.0
      %1041 = vmatpush.msra.mxu0 0.0
      %1042 = vmatpush.msra.mxu0 0.0
      %1043 = vmatpush.msra.mxu0 0.0
      %1044 = vmatpush.msra.mxu0 0.0
      %1045 = vmatpush.msra.mxu0 0.0
      %1046 = vmatpush.msra.mxu0 0.0
      %1047 = vmatpush.msra.mxu0 0.0
      %1048 = vmatpush.msra.mxu0 0.0
      %1049 = vmatpush.msra.mxu0 0.0
      %1050 = vmatpush.msra.mxu0 0.0
      %1051 = vmatpush.msra.mxu0 0.0
      %1052 = vmatpush.msra.mxu0 0.0
      %1053 = vmatpush.msra.mxu0 %v1005
      %1054 = vmatpush.msra.mxu0 %v1003
      %1055 = vmatmul.f32.gmra.mxu0 %v1011
      %v1056 = vpop.f32.mrf.mxu0
      %v1057 = vadd.f32 0.0, %v1056
      %1058 = vmatmul.f32.gmra.mxu0 %v1014
      %v1059 = vpop.f32.mrf.mxu0
      %v1060 = vadd.f32 0.0, %v1059
      %1061 = vdwg.mxu0
      %v1062 = vadd.f32 %v930, %v1034
      %v1063 = vadd.f32 %v931, %v1057
      %v1064 = vadd.f32 %v932, %v1037
      %v1065 = vadd.f32 %v933, %v1060
      %1066 = vrot.lane.b32.xlu0 %v627, 18
      %v1067 = vpop.permute.xlu0 %1066
      %1068 = vrot.lane.b32.xlu0 %v628, 18
      %v1069 = vpop.permute.xlu0 %1068
      %vm1070 = vcmask 146432
      %v1071 = vsel %vm1070, %v1067, %v1069
      %v1075 = vmul.f32 %v431, %v1067
      %v1076 = vmul.f32 %v432, %v1071
      %v1077 = vmul.f32 %v433, %v1069
      %v1078 = vmul.f32 %v434, %v1067
      %v1079 = vmul.f32 %v435, %v1071
      %v1080 = vmul.f32 %v436, %v1069
      %v1081 = vld [vmem:[%s333 + $0x5] sm:$0x1]
      %1082 = vset.pattern.permute.xlu0 5
      %1083 = vperm.xlu0 %1082, %v373
      %v1084 = vpop.permute.xlu0 %1083
      %1086 = vset.pattern.permute.xlu0 5
      %1087 = vperm.xlu0 %1086, %v374
      %v1088 = vpop.permute.xlu0 %1087
      %v1090 = vperm.slane %v1081, 0
      %v1091 = vadd.f32 %v1084, %v1090
      %v1092 = vadd.f32 %v1088, %v1090
      %v1093 = vxor.u32 %v1091, 2147483648
      %v1094 = vxor.u32 %v1092, 2147483648
      %v1095 = vmul.f32 %v1093, 1.442695
      %v1096 = vpow.pop %v1095
      %v1097 = vmul.f32 %v1094, 1.442695
      %v1098 = vpow.pop %v1097
      %v1099 = vadd.f32 %v1096, 1.0
      %v1100 = vadd.f32 %v1098, 1.0
      %v1101 = vrcp.pop %v1099
      %v1102 = vmul.f32 %v1099, %v1101
      %v1103 = vsub.f32 1.0, %v1102
      %v1104 = vmul.f32 %v1101, %v1103
      %v1105 = vadd.f32 %v1101, %v1104
      %vm1106 = vweird.f32 %v1099
      %vm1107 = vweird.f32 %v1101
      %vm1108 = vmor %vm1106, %vm1107
      %v1109 = vsel %vm1108, %v1101, %v1105
      %v1110 = vand.u32 2147483647, %v1099
      %vm1111 = vcmp.eq.f32.partialorder %v1110, 8.507059e+37
      %v1112 = vand.u32 %v1099, 2147483648
      %v1113 = vor.u32 1.1754944e-38, %v1112
      %v1114 = vsel %vm1111, %v1113, %v1109
      %v1115 = vmul.f32 1.0, %v1114
      %v1116 = vrcp.pop %v1100
      %v1117 = vmul.f32 %v1100, %v1116
      %v1118 = vsub.f32 1.0, %v1117
      %v1119 = vmul.f32 %v1116, %v1118
      %v1120 = vadd.f32 %v1116, %v1119
      %vm1121 = vweird.f32 %v1100
      %vm1122 = vweird.f32 %v1116
      %vm1123 = vmor %vm1121, %vm1122
      %v1124 = vsel %vm1123, %v1116, %v1120
      %v1125 = vand.u32 2147483647, %v1100
      %vm1126 = vcmp.eq.f32.partialorder %v1125, 8.507059e+37
      %v1127 = vand.u32 %v1100, 2147483648
      %v1128 = vor.u32 1.1754944e-38, %v1127
      %v1129 = vsel %vm1126, %v1128, %v1124
      %v1130 = vmul.f32 1.0, %v1129
      %s1131 = scalar_lea.vmem %s2, 80
      %v1132 = vld [vmem:[%s1131] sm:$0xff]
      %v1133 = vld [vmem:[%s1131 + $0x8] sm:$0xff]
      %v1134 = vmul.f32 %v1115, %v1132
      %v1135 = vmul.f32 %v1130, %v1133
      %1142 = vrot.lane.b32.xlu0 %v1075, 110
      %v1143 = vpop.permute.xlu0 %1142
      %1144 = vrot.lane.b32.xlu0 %v1076, 110
      %v1145 = vpop.permute.xlu0 %1144
      %1146 = vrot.lane.b32.xlu0 %v1077, 110
      %v1147 = vpop.permute.xlu0 %1146
      %1148 = vrot.lane.b32.xlu0 %v1078, 110
      %v1149 = vpop.permute.xlu0 %1148
      %1150 = vrot.lane.b32.xlu0 %v1079, 110
      %v1151 = vpop.permute.xlu0 %1150
      %1152 = vrot.lane.b32.xlu0 %v1080, 110
      %v1153 = vpop.permute.xlu0 %1152
      %vm1154 = vcmask 900096
      %v1155 = vsel %vm1154, %v1143, %v1145
      %v1156 = vsel %vm1154, %v1145, %v1147
      %v1157 = vsel %vm1154, %v1149, %v1151
      %v1158 = vsel %vm1154, %v1151, %v1153
      %v1164 = vsel %vm519, %v1134, 0
      %v1167 = vsel %vm519, %v1135, 0
      %1169 = vmatpush.msra.mxu0 0.0
      %1170 = vmatpush.msra.mxu0 0.0
      %1171 = vmatpush.msra.mxu0 0.0
      %1172 = vmatpush.msra.mxu0 0.0
      %1173 = vmatpush.msra.mxu0 0.0
      %1174 = vmatpush.msra.mxu0 0.0
      %1175 = vmatpush.msra.mxu0 0.0
      %1176 = vmatpush.msra.mxu0 0.0
      %1177 = vmatpush.msra.mxu0 0.0
      %1178 = vmatpush.msra.mxu0 0.0
      %1179 = vmatpush.msra.mxu0 0.0
      %1180 = vmatpush.msra.mxu0 0.0
      %1181 = vmatpush.msra.mxu0 0.0
      %1182 = vmatpush.msra.mxu0 0.0
      %1183 = vmatpush.msra.mxu0 %v1157
      %1184 = vmatpush.msra.mxu0 %v1155
      %1185 = vmatmul.f32.gmra.mxu0 %v1164
      %v1186 = vpop.f32.mrf.mxu0
      %v1187 = vadd.f32 0.0, %v1186
      %1188 = vmatmul.f32.gmra.mxu0 %v1167
      %v1189 = vpop.f32.mrf.mxu0
      %v1190 = vadd.f32 0.0, %v1189
      %1191 = vdwg.mxu0
      %1192 = vmatpush.msra.mxu0 0.0
      %1193 = vmatpush.msra.mxu0 0.0
      %1194 = vmatpush.msra.mxu0 0.0
      %1195 = vmatpush.msra.mxu0 0.0
      %1196 = vmatpush.msra.mxu0 0.0
      %1197 = vmatpush.msra.mxu0 0.0
      %1198 = vmatpush.msra.mxu0 0.0
      %1199 = vmatpush.msra.mxu0 0.0
      %1200 = vmatpush.msra.mxu0 0.0
      %1201 = vmatpush.msra.mxu0 0.0
      %1202 = vmatpush.msra.mxu0 0.0
      %1203 = vmatpush.msra.mxu0 0.0
      %1204 = vmatpush.msra.mxu0 0.0
      %1205 = vmatpush.msra.mxu0 0.0
      %1206 = vmatpush.msra.mxu0 %v1158
      %1207 = vmatpush.msra.mxu0 %v1156
      %1208 = vmatmul.f32.gmra.mxu0 %v1164
      %v1209 = vpop.f32.mrf.mxu0
      %v1210 = vadd.f32 0.0, %v1209
      %1211 = vmatmul.f32.gmra.mxu0 %v1167
      %v1212 = vpop.f32.mrf.mxu0
      %v1213 = vadd.f32 0.0, %v1212
      %1214 = vdwg.mxu0
      %v1215 = vadd.f32 %v1062, %v1187
      %v1216 = vadd.f32 %v1063, %v1210
      %v1217 = vadd.f32 %v1064, %v1190
      %v1218 = vadd.f32 %v1065, %v1213
      %1219 = vrot.lane.b32.xlu0 %v365, 32
      %v1220 = vpop.permute.xlu0 %1219
      %1221 = vrot.lane.b32.xlu0 %v366, 32
      %v1222 = vpop.permute.xlu0 %1221
      %vm1223 = vcmask 261120
      %v1224 = vsel %vm1223, %v1220, %v1222
      %v1228 = vmul.f32 %v431, %v1220
      %v1229 = vmul.f32 %v432, %v1224
      %v1230 = vmul.f32 %v433, %v1222
      %v1231 = vmul.f32 %v434, %v1220
      %v1232 = vmul.f32 %v435, %v1224
      %v1233 = vmul.f32 %v436, %v1222
      %v1234 = vld [vmem:[%s333 + $0x6] sm:$0x1]
      %1235 = vset.pattern.permute.xlu0 6
      %1236 = vperm.xlu0 %1235, %v373
      %v1237 = vpop.permute.xlu0 %1236
      %1239 = vset.pattern.permute.xlu0 6
      %1240 = vperm.xlu0 %1239, %v374
      %v1241 = vpop.permute.xlu0 %1240
      %v1243 = vperm.slane %v1234, 0
      %v1244 = vadd.f32 %v1237, %v1243
      %v1245 = vadd.f32 %v1241, %v1243
      %v1246 = vxor.u32 %v1244, 2147483648
      %v1247 = vxor.u32 %v1245, 2147483648
      %v1248 = vmul.f32 %v1246, 1.442695
      %v1249 = vpow.pop %v1248
      %v1250 = vmul.f32 %v1247, 1.442695
      %v1251 = vpow.pop %v1250
      %v1252 = vadd.f32 %v1249, 1.0
      %v1253 = vadd.f32 %v1251, 1.0
      %v1254 = vrcp.pop %v1252
      %v1255 = vmul.f32 %v1252, %v1254
      %v1256 = vsub.f32 1.0, %v1255
      %v1257 = vmul.f32 %v1254, %v1256
      %v1258 = vadd.f32 %v1254, %v1257
      %vm1259 = vweird.f32 %v1252
      %vm1260 = vweird.f32 %v1254
      %vm1261 = vmor %vm1259, %vm1260
      %v1262 = vsel %vm1261, %v1254, %v1258
      %v1263 = vand.u32 2147483647, %v1252
      %vm1264 = vcmp.eq.f32.partialorder %v1263, 8.507059e+37
      %v1265 = vand.u32 %v1252, 2147483648
      %v1266 = vor.u32 1.1754944e-38, %v1265
      %v1267 = vsel %vm1264, %v1266, %v1262
      %v1268 = vmul.f32 1.0, %v1267
      %v1269 = vrcp.pop %v1253
      %v1270 = vmul.f32 %v1253, %v1269
      %v1271 = vsub.f32 1.0, %v1270
      %v1272 = vmul.f32 %v1269, %v1271
      %v1273 = vadd.f32 %v1269, %v1272
      %vm1274 = vweird.f32 %v1253
      %vm1275 = vweird.f32 %v1269
      %vm1276 = vmor %vm1274, %vm1275
      %v1277 = vsel %vm1276, %v1269, %v1273
      %v1278 = vand.u32 2147483647, %v1253
      %vm1279 = vcmp.eq.f32.partialorder %v1278, 8.507059e+37
      %v1280 = vand.u32 %v1253, 2147483648
      %v1281 = vor.u32 1.1754944e-38, %v1280
      %v1282 = vsel %vm1279, %v1281, %v1277
      %v1283 = vmul.f32 1.0, %v1282
      %s1284 = scalar_lea.vmem %s2, 96
      %v1285 = vld [vmem:[%s1284] sm:$0xff]
      %v1286 = vld [vmem:[%s1284 + $0x8] sm:$0xff]
      %v1287 = vmul.f32 %v1268, %v1285
      %v1288 = vmul.f32 %v1283, %v1286
      %1295 = vrot.lane.b32.xlu0 %v1228, 96
      %v1296 = vpop.permute.xlu0 %1295
      %1297 = vrot.lane.b32.xlu0 %v1229, 96
      %v1298 = vpop.permute.xlu0 %1297
      %1299 = vrot.lane.b32.xlu0 %v1230, 96
      %v1300 = vpop.permute.xlu0 %1299
      %1301 = vrot.lane.b32.xlu0 %v1231, 96
      %v1302 = vpop.permute.xlu0 %1301
      %1303 = vrot.lane.b32.xlu0 %v1232, 96
      %v1304 = vpop.permute.xlu0 %1303
      %1305 = vrot.lane.b32.xlu0 %v1233, 96
      %v1306 = vpop.permute.xlu0 %1305
      %vm1307 = vcmask 785408
      %v1308 = vsel %vm1307, %v1296, %v1298
      %v1309 = vsel %vm1307, %v1298, %v1300
      %v1310 = vsel %vm1307, %v1302, %v1304
      %v1311 = vsel %vm1307, %v1304, %v1306
      %v1317 = vsel %vm519, %v1287, 0
      %v1320 = vsel %vm519, %v1288, 0
      %1322 = vmatpush.msra.mxu0 0.0
      %1323 = vmatpush.msra.mxu0 0.0
      %1324 = vmatpush.msra.mxu0 0.0
      %1325 = vmatpush.msra.mxu0 0.0
      %1326 = vmatpush.msra.mxu0 0.0
      %1327 = vmatpush.msra.mxu0 0.0
      %1328 = vmatpush.msra.mxu0 0.0
      %1329 = vmatpush.msra.mxu0 0.0
      %1330 = vmatpush.msra.mxu0 0.0
      %1331 = vmatpush.msra.mxu0 0.0
      %1332 = vmatpush.msra.mxu0 0.0
      %1333 = vmatpush.msra.mxu0 0.0
      %1334 = vmatpush.msra.mxu0 0.0
      %1335 = vmatpush.msra.mxu0 0.0
      %1336 = vmatpush.msra.mxu0 %v1310
      %1337 = vmatpush.msra.mxu0 %v1308
      %1338 = vmatmul.f32.gmra.mxu0 %v1317
      %v1339 = vpop.f32.mrf.mxu0
      %v1340 = vadd.f32 0.0, %v1339
      %1341 = vmatmul.f32.gmra.mxu0 %v1320
      %v1342 = vpop.f32.mrf.mxu0
      %v1343 = vadd.f32 0.0, %v1342
      %1344 = vdwg.mxu0
      %1345 = vmatpush.msra.mxu0 0.0
      %1346 = vmatpush.msra.mxu0 0.0
      %1347 = vmatpush.msra.mxu0 0.0
      %1348 = vmatpush.msra.mxu0 0.0
      %1349 = vmatpush.msra.mxu0 0.0
      %1350 = vmatpush.msra.mxu0 0.0
      %1351 = vmatpush.msra.mxu0 0.0
      %1352 = vmatpush.msra.mxu0 0.0
      %1353 = vmatpush.msra.mxu0 0.0
      %1354 = vmatpush.msra.mxu0 0.0
      %1355 = vmatpush.msra.mxu0 0.0
      %1356 = vmatpush.msra.mxu0 0.0
      %1357 = vmatpush.msra.mxu0 0.0
      %1358 = vmatpush.msra.mxu0 0.0
      %1359 = vmatpush.msra.mxu0 %v1311
      %1360 = vmatpush.msra.mxu0 %v1309
      %1361 = vmatmul.f32.gmra.mxu0 %v1317
      %v1362 = vpop.f32.mrf.mxu0
      %v1363 = vadd.f32 0.0, %v1362
      %1364 = vmatmul.f32.gmra.mxu0 %v1320
      %v1365 = vpop.f32.mrf.mxu0
      %v1366 = vadd.f32 0.0, %v1365
      %1367 = vdwg.mxu0
      %v1368 = vadd.f32 %v1215, %v1340
      %v1369 = vadd.f32 %v1216, %v1363
      %v1370 = vadd.f32 %v1217, %v1343
      %v1371 = vadd.f32 %v1218, %v1366
      %v1372 = vld [vmem:[%s333 + $0x7] sm:$0x1]
      %1373 = vset.pattern.permute.xlu0 7
      %1374 = vperm.xlu0 %1373, %v373
      %v1375 = vpop.permute.xlu0 %1374
      %1377 = vset.pattern.permute.xlu0 7
      %1378 = vperm.xlu0 %1377, %v374
      %v1379 = vpop.permute.xlu0 %1378
      %v1381 = vperm.slane %v1372, 0
      %v1382 = vadd.f32 %v1375, %v1381
      %v1383 = vadd.f32 %v1379, %v1381
      %v1384 = vxor.u32 %v1382, 2147483648
      %v1385 = vxor.u32 %v1383, 2147483648
      %v1386 = vmul.f32 %v1384, 1.442695
      %v1387 = vpow.pop %v1386
      %v1388 = vmul.f32 %v1385, 1.442695
      %v1389 = vpow.pop %v1388
      %v1390 = vadd.f32 %v1387, 1.0
      %v1391 = vadd.f32 %v1389, 1.0
      %v1392 = vrcp.pop %v1390
      %v1393 = vmul.f32 %v1390, %v1392
      %v1394 = vsub.f32 1.0, %v1393
      %v1395 = vmul.f32 %v1392, %v1394
      %v1396 = vadd.f32 %v1392, %v1395
      %vm1397 = vweird.f32 %v1390
      %vm1398 = vweird.f32 %v1392
      %vm1399 = vmor %vm1397, %vm1398
      %v1400 = vsel %vm1399, %v1392, %v1396
      %v1401 = vand.u32 2147483647, %v1390
      %vm1402 = vcmp.eq.f32.partialorder %v1401, 8.507059e+37
      %v1403 = vand.u32 %v1390, 2147483648
      %v1404 = vor.u32 1.1754944e-38, %v1403
      %v1405 = vsel %vm1402, %v1404, %v1400
      %v1406 = vmul.f32 1.0, %v1405
      %v1407 = vrcp.pop %v1391
      %v1408 = vmul.f32 %v1391, %v1407
      %v1409 = vsub.f32 1.0, %v1408
      %v1410 = vmul.f32 %v1407, %v1409
      %v1411 = vadd.f32 %v1407, %v1410
      %vm1412 = vweird.f32 %v1391
      %vm1413 = vweird.f32 %v1407
      %vm1414 = vmor %vm1412, %vm1413
      %v1415 = vsel %vm1414, %v1407, %v1411
      %v1416 = vand.u32 2147483647, %v1391
      %vm1417 = vcmp.eq.f32.partialorder %v1416, 8.507059e+37
      %v1418 = vand.u32 %v1391, 2147483648
      %v1419 = vor.u32 1.1754944e-38, %v1418
      %v1420 = vsel %vm1417, %v1419, %v1415
      %v1421 = vmul.f32 1.0, %v1420
      %s1422 = scalar_lea.vmem %s2, 112
      %v1423 = vld [vmem:[%s1422] sm:$0xff]
      %v1424 = vld [vmem:[%s1422 + $0x8] sm:$0xff]
      %v1425 = vmul.f32 %v1406, %v1423
      %v1426 = vmul.f32 %v1421, %v1424
      %1427 = vrot.lane.b32.xlu0 %v431, 95
      %v1428 = vpop.permute.xlu0 %1427
      %1429 = vrot.lane.b32.xlu0 %v432, 95
      %v1430 = vpop.permute.xlu0 %1429
      %1431 = vrot.lane.b32.xlu0 %v433, 95
      %v1432 = vpop.permute.xlu0 %1431
      %1433 = vrot.lane.b32.xlu0 %v434, 95
      %v1434 = vpop.permute.xlu0 %1433
      %1435 = vrot.lane.b32.xlu0 %v435, 95
      %v1436 = vpop.permute.xlu0 %1435
      %1437 = vrot.lane.b32.xlu0 %v436, 95
      %v1438 = vpop.permute.xlu0 %1437
      %vm1439 = vcmask 777216
      %v1440 = vsel %vm1439, %v1428, %v1430
      %v1441 = vsel %vm1439, %v1430, %v1432
      %v1442 = vsel %vm1439, %v1434, %v1436
      %v1443 = vsel %vm1439, %v1436, %v1438
      %v1449 = vsel %vm519, %v1425, 0
      %v1452 = vsel %vm519, %v1426, 0
      %1454 = vmatpush.msra.mxu0 0.0
      %1455 = vmatpush.msra.mxu0 0.0
      %1456 = vmatpush.msra.mxu0 0.0
      %1457 = vmatpush.msra.mxu0 0.0
      %1458 = vmatpush.msra.mxu0 0.0
      %1459 = vmatpush.msra.mxu0 0.0
      %1460 = vmatpush.msra.mxu0 0.0
      %1461 = vmatpush.msra.mxu0 0.0
      %1462 = vmatpush.msra.mxu0 0.0
      %1463 = vmatpush.msra.mxu0 0.0
      %1464 = vmatpush.msra.mxu0 0.0
      %1465 = vmatpush.msra.mxu0 0.0
      %1466 = vmatpush.msra.mxu0 0.0
      %1467 = vmatpush.msra.mxu0 0.0
      %1468 = vmatpush.msra.mxu0 %v1442
      %1469 = vmatpush.msra.mxu0 %v1440
      %1470 = vmatmul.f32.gmra.mxu0 %v1449
      %v1471 = vpop.f32.mrf.mxu0
      %v1472 = vadd.f32 0.0, %v1471
      %1473 = vmatmul.f32.gmra.mxu0 %v1452
      %v1474 = vpop.f32.mrf.mxu0
      %v1475 = vadd.f32 0.0, %v1474
      %1476 = vdwg.mxu0
      %1477 = vmatpush.msra.mxu0 0.0
      %1478 = vmatpush.msra.mxu0 0.0
      %1479 = vmatpush.msra.mxu0 0.0
      %1480 = vmatpush.msra.mxu0 0.0
      %1481 = vmatpush.msra.mxu0 0.0
      %1482 = vmatpush.msra.mxu0 0.0
      %1483 = vmatpush.msra.mxu0 0.0
      %1484 = vmatpush.msra.mxu0 0.0
      %1485 = vmatpush.msra.mxu0 0.0
      %1486 = vmatpush.msra.mxu0 0.0
      %1487 = vmatpush.msra.mxu0 0.0
      %1488 = vmatpush.msra.mxu0 0.0
      %1489 = vmatpush.msra.mxu0 0.0
      %1490 = vmatpush.msra.mxu0 0.0
      %1491 = vmatpush.msra.mxu0 %v1443
      %1492 = vmatpush.msra.mxu0 %v1441
      %1493 = vmatmul.f32.gmra.mxu0 %v1449
      %v1494 = vpop.f32.mrf.mxu0
      %v1495 = vadd.f32 0.0, %v1494
      %1496 = vmatmul.f32.gmra.mxu0 %v1452
      %v1497 = vpop.f32.mrf.mxu0
      %v1498 = vadd.f32 0.0, %v1497
      %1499 = vdwg.mxu0
      %v1500 = vadd.f32 %v1368, %v1472
      %v1501 = vadd.f32 %v1369, %v1495
      %v1502 = vadd.f32 %v1370, %v1475
      %v1503 = vadd.f32 %v1371, %v1498
      %1504 = vrot.lane.b32.xlu0 %v627, 34
      %v1505 = vpop.permute.xlu0 %1504
      %1506 = vrot.lane.b32.xlu0 %v628, 34
      %v1507 = vpop.permute.xlu0 %1506
      %vm1508 = vcmask 277504
      %v1509 = vsel %vm1508, %v1505, %v1507
      %v1513 = vmul.f32 %v431, %v1505
      %v1514 = vmul.f32 %v432, %v1509
      %v1515 = vmul.f32 %v433, %v1507
      %v1516 = vmul.f32 %v434, %v1505
      %v1517 = vmul.f32 %v435, %v1509
      %v1518 = vmul.f32 %v436, %v1507
      %v1519 = vld [vmem:[%s333 + $0x8] sm:$0x1]
      %1520 = vset.pattern.permute.xlu0 8
      %1521 = vperm.xlu0 %1520, %v373
      %v1522 = vpop.permute.xlu0 %1521
      %1524 = vset.pattern.permute.xlu0 8
      %1525 = vperm.xlu0 %1524, %v374
      %v1526 = vpop.permute.xlu0 %1525
      %v1528 = vperm.slane %v1519, 0
      %v1529 = vadd.f32 %v1522, %v1528
      %v1530 = vadd.f32 %v1526, %v1528
      %v1531 = vxor.u32 %v1529, 2147483648
      %v1532 = vxor.u32 %v1530, 2147483648
      %v1533 = vmul.f32 %v1531, 1.442695
      %v1534 = vpow.pop %v1533
      %v1535 = vmul.f32 %v1532, 1.442695
      %v1536 = vpow.pop %v1535
      %v1537 = vadd.f32 %v1534, 1.0
      %v1538 = vadd.f32 %v1536, 1.0
      %v1539 = vrcp.pop %v1537
      %v1540 = vmul.f32 %v1537, %v1539
      %v1541 = vsub.f32 1.0, %v1540
      %v1542 = vmul.f32 %v1539, %v1541
      %v1543 = vadd.f32 %v1539, %v1542
      %vm1544 = vweird.f32 %v1537
      %vm1545 = vweird.f32 %v1539
      %vm1546 = vmor %vm1544, %vm1545
      %v1547 = vsel %vm1546, %v1539, %v1543
      %v1548 = vand.u32 2147483647, %v1537
      %vm1549 = vcmp.eq.f32.partialorder %v1548, 8.507059e+37
      %v1550 = vand.u32 %v1537, 2147483648
      %v1551 = vor.u32 1.1754944e-38, %v1550
      %v1552 = vsel %vm1549, %v1551, %v1547
      %v1553 = vmul.f32 1.0, %v1552
      %v1554 = vrcp.pop %v1538
      %v1555 = vmul.f32 %v1538, %v1554
      %v1556 = vsub.f32 1.0, %v1555
      %v1557 = vmul.f32 %v1554, %v1556
      %v1558 = vadd.f32 %v1554, %v1557
      %vm1559 = vweird.f32 %v1538
      %vm1560 = vweird.f32 %v1554
      %vm1561 = vmor %vm1559, %vm1560
      %v1562 = vsel %vm1561, %v1554, %v1558
      %v1563 = vand.u32 2147483647, %v1538
      %vm1564 = vcmp.eq.f32.partialorder %v1563, 8.507059e+37
      %v1565 = vand.u32 %v1538, 2147483648
      %v1566 = vor.u32 1.1754944e-38, %v1565
      %v1567 = vsel %vm1564, %v1566, %v1562
      %v1568 = vmul.f32 1.0, %v1567
      %s1569 = scalar_lea.vmem %s2, 128
      %v1570 = vld [vmem:[%s1569] sm:$0xff]
      %v1571 = vld [vmem:[%s1569 + $0x8] sm:$0xff]
      %v1572 = vmul.f32 %v1553, %v1570
      %v1573 = vmul.f32 %v1568, %v1571
      %1580 = vrot.lane.b32.xlu0 %v1513, 94
      %v1581 = vpop.permute.xlu0 %1580
      %1582 = vrot.lane.b32.xlu0 %v1514, 94
      %v1583 = vpop.permute.xlu0 %1582
      %1584 = vrot.lane.b32.xlu0 %v1515, 94
      %v1585 = vpop.permute.xlu0 %1584
      %1586 = vrot.lane.b32.xlu0 %v1516, 94
      %v1587 = vpop.permute.xlu0 %1586
      %1588 = vrot.lane.b32.xlu0 %v1517, 94
      %v1589 = vpop.permute.xlu0 %1588
      %1590 = vrot.lane.b32.xlu0 %v1518, 94
      %v1591 = vpop.permute.xlu0 %1590
      %vm1592 = vcmask 769024
      %v1593 = vsel %vm1592, %v1581, %v1583
      %v1594 = vsel %vm1592, %v1583, %v1585
      %v1595 = vsel %vm1592, %v1587, %v1589
      %v1596 = vsel %vm1592, %v1589, %v1591
      %v1602 = vsel %vm519, %v1572, 0
      %v1605 = vsel %vm519, %v1573, 0
      %1607 = vmatpush.msra.mxu0 0.0
      %1608 = vmatpush.msra.mxu0 0.0
      %1609 = vmatpush.msra.mxu0 0.0
      %1610 = vmatpush.msra.mxu0 0.0
      %1611 = vmatpush.msra.mxu0 0.0
      %1612 = vmatpush.msra.mxu0 0.0
      %1613 = vmatpush.msra.mxu0 0.0
      %1614 = vmatpush.msra.mxu0 0.0
      %1615 = vmatpush.msra.mxu0 0.0
      %1616 = vmatpush.msra.mxu0 0.0
      %1617 = vmatpush.msra.mxu0 0.0
      %1618 = vmatpush.msra.mxu0 0.0
      %1619 = vmatpush.msra.mxu0 0.0
      %1620 = vmatpush.msra.mxu0 0.0
      %1621 = vmatpush.msra.mxu0 %v1595
      %1622 = vmatpush.msra.mxu0 %v1593
      %1623 = vmatmul.f32.gmra.mxu0 %v1602
      %v1624 = vpop.f32.mrf.mxu0
      %v1625 = vadd.f32 0.0, %v1624
      %1626 = vmatmul.f32.gmra.mxu0 %v1605
      %v1627 = vpop.f32.mrf.mxu0
      %v1628 = vadd.f32 0.0, %v1627
      %1629 = vdwg.mxu0
      %1630 = vmatpush.msra.mxu0 0.0
      %1631 = vmatpush.msra.mxu0 0.0
      %1632 = vmatpush.msra.mxu0 0.0
      %1633 = vmatpush.msra.mxu0 0.0
      %1634 = vmatpush.msra.mxu0 0.0
      %1635 = vmatpush.msra.mxu0 0.0
      %1636 = vmatpush.msra.mxu0 0.0
      %1637 = vmatpush.msra.mxu0 0.0
      %1638 = vmatpush.msra.mxu0 0.0
      %1639 = vmatpush.msra.mxu0 0.0
      %1640 = vmatpush.msra.mxu0 0.0
      %1641 = vmatpush.msra.mxu0 0.0
      %1642 = vmatpush.msra.mxu0 0.0
      %1643 = vmatpush.msra.mxu0 0.0
      %1644 = vmatpush.msra.mxu0 %v1596
      %1645 = vmatpush.msra.mxu0 %v1594
      %1646 = vmatmul.f32.gmra.mxu0 %v1602
      %v1647 = vpop.f32.mrf.mxu0
      %v1648 = vadd.f32 0.0, %v1647
      %1649 = vmatmul.f32.gmra.mxu0 %v1605
      %v1650 = vpop.f32.mrf.mxu0
      %v1651 = vadd.f32 0.0, %v1650
      %1652 = vdwg.mxu0
      %v1653 = vadd.f32 %v1500, %v1625
      %v1654 = vadd.f32 %v1501, %v1648
      %v1655 = vadd.f32 %v1502, %v1628
      %v1656 = vadd.f32 %v1503, %v1651
      %v1657 = vld [vmem:[%s348] sm:$0xff]
      %v1658 = vld [vmem:[%s348 + $0x8] sm:$0xff]
      %v1659 = vld [vmem:[%s348 + $0x10] sm:$0xff]
      %v1660 = vld [vmem:[%s348 + $0x18] sm:$0xff]
      %v1661 = vadd.f32 %v1653, %v1657
      %v1662 = vadd.f32 %v1654, %v1658
      %v1663 = vadd.f32 %v1655, %v1659
      %v1664 = vadd.f32 %v1656, %v1660
      %v1665 = vld [vmem:[%s353] sm:$0xff]
      %v1666 = vld [vmem:[%s353 + $0x8] sm:$0xff]
      %v1667 = vld [vmem:[%s353 + $0x10] sm:$0xff]
      %v1668 = vld [vmem:[%s353 + $0x18] sm:$0xff]
      %v1669 = vadd.f32 %v1661, %v1665
      %v1670 = vadd.f32 %v1662, %v1666
      %v1671 = vadd.f32 %v1663, %v1667
      %v1672 = vadd.f32 %v1664, %v1668
      %1673 = vst [vmem:[%s358] sm:$0xff] %v1669
      %1674 = vst [vmem:[%s358 + $0x8] sm:$0xff] %v1670
      %1675 = vst [vmem:[%s358 + $0x10] sm:$0xff] %v1671
      %1676 = vst [vmem:[%s358 + $0x18] sm:$0xff] %v1672
      %p1677 = scmp.lt.s32.totalorder %s18, 1
      %s1678 = scalar_select %p1677, %s18, 1
      %s1679 = smul.addr %s1678, 4
      %s1680 = smul.addr %s1679, 8
      %s1681 = scalar_lea.vmem %s7, %s1680
      // Predicated region
      $region49: #{_lambda_.7} parent=47 // pred_check
        %p1682 = pneg %p208
      $region50: #{_lambda_.7} parent=47 // pred_check_branch
        %1684 = sbr.rel (%p1682) target = $region52
      $region51: #{_lambda_.7} parent=47 // pred_region
        _
      $region52: #{_lambda_.7} parent=47 // pred_fallthru
        _
    $region48: #{_lambda_.7} parent=5 // pred_fallthru
      _
    %p1685 = scmp.le.s32.totalorder 2, %s13
    // Predicated region
    $region53: #{_lambda_.7} parent=5 // pred_check
      %p1686 = pneg %p1685
    $region54: #{_lambda_.7} parent=5 // pred_check_branch
      %1688 = sbr.rel (%p1686) target = $region56
    $region55: #{_lambda_.7} parent=5 // pred_region
      %s1689 = ssub.s32 %s13, 2
      // Predicated region
      $region57: #{_lambda_.7} parent=55 // pred_check
        %p1690 = pneg %p214
      $region58: #{_lambda_.7} parent=55 // pred_check_branch
        %1692 = sbr.rel (%p1690) target = $region60
      $region59: #{_lambda_.7} parent=55 // pred_region
        %p1693 = scmp.lt.s32.totalorder %s19, 1
        %s1694 = scalar_select %p1693, %s19, 1
        %s1695 = smul.addr %s1694, 4
        %s1696 = smul.addr %s1695, 8
        %s1697 = scalar_lea.vmem %s7, %s1696
      $region60: #{_lambda_.7} parent=55 // pred_fallthru
        _
    $region56: #{_lambda_.7} parent=5 // pred_fallthru
      _
  $region6: #{_lambda_.7} parent=0 // loop_footer
    %s17 = sadd.s32 1, %s13
  $region7: #{_lambda_.7} parent=0 // loop_footer_branch
    %12 = sbr.rel target = $region3
  $region8: #{_lambda_.7} parent=0 // loop_exit
    _

</llo_original>
